<compile_context>
chip_gen: v7x
topology: tpu7x:2x2x1
jax: 0.10.0
libtpu: 0.0.40
codegen_flags: <defaults>
</compile_context>

<pallas_src>
import math
from functools import partial

import jax
import jax.numpy as jnp
from jax.experimental import pallas as pl
from jax.experimental.pallas import tpu as pltpu


# ----------------------------------------------------------------------------
# Fused Pallas kernel: whole network, all batch elements, one grid step.
# ----------------------------------------------------------------------------
def _edgcn_fused_kernel(x_ref, ex_ref, wconv_ref, shift_ref, head_ref, o_ref,
                        *, meta, pool_k, pool_s, w_final, g_chan, extra_len,
                        gp, off_w1e, off_b1, off_wfc, off_bfc, batch):
    """EDGCN forward; every intermediate stays in VMEM.

    Max-pool downsampling is never materialized: layer n runs at full temporal
    resolution with dilation D = pool_s**(n-1); the true (pooled) signal lives
    at columns {0, D, 2D, ...} and only those are read by the classifier.
    """
    head = head_ref[...]            # (R, 32) f32: classifier/fc weights + biases
    shifts = shift_ref[...]         # (Cpad, 8) f32: per-layer BN shift / conv bias
    ex_all = ex_ref[...]            # (B, E)  f32

    for b in range(batch):          # B=2: static unroll; independent chains interleave
        h = x_ref[b].astype(jnp.float32)          # (Cin, L), time on lanes
        dil = 1
        for (m0, K, cout, cin, j, do_pool, leaky) in meta:
            n_out = h.shape[1] - (K - 1) * dil
            hb = h.astype(jnp.bfloat16)           # bf16 MXU inputs, f32 accumulate
            acc = jnp.dot(wconv_ref[m0][:cout, :cin], hb[:, :n_out],
                          preferred_element_type=jnp.float32)
            for k in range(1, K):                 # K-tap conv = K small MXU matmuls
                acc += jnp.dot(wconv_ref[m0 + k][:cout, :cin],
                               hb[:, k * dil:k * dil + n_out],
                               preferred_element_type=jnp.float32)
            y = acc + shifts[:cout, j:j + 1]      # BN shift / bias (scale folded into w)
            if leaky:
                y = jnp.where(y > 0, y, 0.2 * y)            # nn.LeakyReLU(0.2)
            else:
                y = jnp.where(y > 0, y, jnp.exp(y) - 1.0)   # ELU(alpha=1)
            if do_pool:                           # MaxPool1d(pool_k, pool_s), dilated
                n_pool = n_out - (pool_k - 1) * dil
                wm = y[:, :n_pool]
                for i in range(1, pool_k):
                    wm = jnp.maximum(wm, y[:, i * dil:i * dil + n_pool])
                h = wm
                dil *= pool_s
            else:
                h = y

        # ---- classifier_conv (a dense layer) + fc + log_softmax -------------
        # TODO(synk): nn.Dropout(p=0.5) between classifier_conv and fc is
        # identity in eval mode.
        exb = ex_all[b:b + 1, :]                                     # (1, E)
        hid = head[off_b1:off_b1 + 1, :] + jnp.dot(
            exb, head[off_w1e:off_w1e + extra_len, :],
            preferred_element_type=jnp.float32)                      # (1, 32)
        for t in range(w_final):    # vectorised over channels: mul + sublane reduce
            hid = hid + jnp.sum(h[:, t * dil:t * dil + 1]
                                * head[t * gp:t * gp + g_chan, :],
                                axis=0, keepdims=True)
        logits = (jnp.dot(hid, head[off_wfc:off_wfc + 32, :],
                          preferred_element_type=jnp.float32)
                  + head[off_bfc:off_bfc + 1, :])[:, :2]             # (1, 2)
        m = jnp.max(logits, axis=1, keepdims=True)
        sh = logits - m
        lse = jnp.log(jnp.sum(jnp.exp(sh), axis=1, keepdims=True))
        o_ref[b] = (sh - lse).astype(o_ref.dtype)


# ----------------------------------------------------------------------------
# pallas_call glue
# ----------------------------------------------------------------------------
def edgcn_forward(packed, x, extra, cfg):
    B, _, _ = x.shape
    E = extra.shape[1]
    pk, ps = cfg["pool_time_length"], cfg["pool_time_stride"]

    def full_spec(arr):
        shape = arr.shape
        nd = len(shape)
        return pl.BlockSpec(shape, lambda i, _nd=nd: (0,) * _nd)

    kernel = partial(
        _edgcn_fused_kernel,
        meta=packed["meta"], pool_k=pk, pool_s=ps,
        w_final=packed["w_final"], g_chan=cfg["in_chans"], extra_len=E,
        gp=packed["gp"], off_w1e=packed["off_w1e"], off_b1=packed["off_b1"],
        off_wfc=packed["off_wfc"], off_bfc=packed["off_bfc"], batch=B)

    out = pl.pallas_call(
        kernel,
        out_shape=jax.ShapeDtypeStruct((B, 1, 2), jnp.float32),
        grid=(1,),                                 # single step: whole net + batch fused
        in_specs=[full_spec(x), full_spec(extra), full_spec(packed["w_conv"]),
                  full_spec(packed["shifts"]), full_spec(packed["head"])],
        out_specs=pl.BlockSpec((B, 1, 2), lambda i: (0, 0, 0)),
        compiler_params=pltpu.CompilerParams(
            dimension_semantics=("arbitrary",)),
    )(x, extra, packed["w_conv"], packed["shifts"], packed["head"])
    return out.reshape(B, 2)


# ----------------------------------------------------------------------------
# Parameter packing: 15 tiny arrays -> 3 consolidated operands.
# ----------------------------------------------------------------------------
def _ru8(n):
    return ((n + 7) // 8) * 8


def pack_params(params, cfg, w_final):
    G = cfg["in_chans"]
    conv_keys = [("w_time", "s_time", True, True),
                 ("w_b2", "s_b2", True, True),
                 ("w_b3", "s_b3", True, True),
                 ("w_b4", "s_b4", True, True),
                 ("w_res", "s_res", False, False)]   # (w, shift, do_pool, leaky)

    cmax = 0
    for wk, *_ in conv_keys:
        _, cout, cin = params[wk].shape
        cmax = max(cmax, cout, cin)
    cpad = _ru8(cmax)

    mats, meta = [], []
    shifts = jnp.zeros((cpad, 8), jnp.float32)
    for j, (wk, sk, do_pool, leaky) in enumerate(conv_keys):
        w = params[wk]                              # (K, cout, cin), BN scale folded
        K, cout, cin = w.shape
        m0 = len(mats)
        for k in range(K):
            mats.append(jnp.zeros((cpad, cpad), jnp.float32)
                        .at[:cout, :cin].set(w[k]))
        shifts = shifts.at[:cout, j:j + 1].set(params[sk])
        meta.append((m0, K, cout, cin, j, do_pool, leaky))
    w_conv = jnp.stack(mats, axis=0).astype(jnp.bfloat16)   # (Nmat, cpad, cpad) bf16

    # classifier + fc "head" block: 8-row aligned sections, 32 lanes wide.
    E = params["w1e"].shape[0]
    gp = _ru8(G)
    off_w1e = w_final * gp
    off_b1 = off_w1e + _ru8(E)
    off_wfc = off_b1 + 8
    off_bfc = off_wfc + 32
    rows = off_bfc + 8
    head = jnp.zeros((rows, 32), jnp.float32)
    w1x_3d = params["w1x"].reshape(G, w_final, 32)          # flatten order g*Wf + t
    for t in range(w_final):
        head = head.at[t * gp:t * gp + G, :].set(w1x_3d[:, t, :])
    head = head.at[off_w1e:off_w1e + E, :].set(params["w1e"])
    head = head.at[off_b1:off_b1 + 1, :].set(params["b1"])
    head = head.at[off_wfc:off_wfc + 32, :2].set(params["w2"])
    head = head.at[off_bfc:off_bfc + 1, :2].set(params["b2"])

    return dict(w_conv=w_conv, shifts=shifts, head=head, meta=tuple(meta),
                w_final=w_final, gp=gp, off_w1e=off_w1e, off_b1=off_b1,
                off_wfc=off_wfc, off_bfc=off_bfc)


# ----------------------------------------------------------------------------
# Parameter construction (deterministic, synthetic, eval-mode BN folded)
# ----------------------------------------------------------------------------
def _xavier(key, shape, fan_in, fan_out):
    limit = math.sqrt(6.0 / (fan_in + fan_out))
    return jax.random.uniform(key, shape, jnp.float32, -limit, limit)


def _expand_grouped(w, groups, cin_total):
    """(Cout, Cin_per_group, K) grouped conv weight -> dense (K, Cout, Cin_total)."""
    cout, cpg, k = w.shape
    opg = cout // groups
    dense = jnp.zeros((cout, cin_total, k), jnp.float32)
    for g in range(groups):
        dense = dense.at[g * opg:(g + 1) * opg, g * cpg:(g + 1) * cpg, :].set(
            w[g * opg:(g + 1) * opg])
    return jnp.transpose(dense, (2, 0, 1))


def _out_time_len(cfg):
    """Mirror of EDGCN.test() shape arithmetic (final_conv_length='auto')."""
    L = cfg["input_time_length"]
    pk, ps = cfg["pool_time_length"], cfg["pool_time_stride"]

    def conv_pool(L, k):
        L = L - k + 1
        return (L - pk) // ps + 1

    L = conv_pool(L, cfg["filter_time_length"])
    L = conv_pool(L, cfg["filter_length_2"])
    L = conv_pool(L, cfg["filter_length_3"])
    L = conv_pool(L, cfg["filter_length_4"])
    return L - cfg["channel_res_conv_length"] + 1


def init_edgcn_params(key, cfg):
    G = cfg["in_chans"]
    eps = 1e-5
    # Eval-mode BN (running mean=0, var=1, gamma=1, beta=0) folds into the
    # conv weights as a pure per-channel scale (uniform here) and a zero shift.
    bn_scale = 1.0 / math.sqrt(1.0 + eps)
    ks = jax.random.split(key, 8)

    params = {}

    # conv_time: Conv1d(G, n_ft*G, kt, groups=G), bias=0, then BN.
    n_ft, kt = cfg["n_filters_time"], cfg["filter_time_length"]
    w = _xavier(ks[0], (n_ft * G, 1, kt), 1 * kt, (n_ft * G) * kt)
    params["w_time"] = _expand_grouped(w, G, G) * bn_scale
    params["s_time"] = jnp.zeros((n_ft * G, 1), jnp.float32)

    # block2/3/4: grouped conv (no bias) + BN.
    specs = [("b2", n_ft, cfg["n_filters_2"], cfg["filter_length_2"]),
             ("b3", cfg["n_filters_2"], cfg["n_filters_3"], cfg["filter_length_3"]),
             ("b4", cfg["n_filters_3"], cfg["n_filters_4"], cfg["filter_length_4"])]
    for i, (sfx, nf_in, nf_out, fl) in enumerate(specs):
        w = _xavier(ks[1 + i], (nf_out * G, nf_in, fl),
                    nf_in * fl, (nf_out * G) * fl)
        params[f"w_{sfx}"] = _expand_grouped(w, G, nf_in * G) * bn_scale
        params[f"s_{sfx}"] = jnp.zeros((nf_out * G, 1), jnp.float32)

    # conv_channel_res: dense Conv1d(n_f4*G -> G, k_res, bias=0) + ELU.
    cin_res = cfg["n_filters_4"] * G
    k_res = cfg["channel_res_conv_length"]
    w = _xavier(ks[4], (G, cin_res, k_res), cin_res * k_res, G * k_res)
    params["w_res"] = jnp.transpose(w, (2, 0, 1))        # (K, Cout, Cin)
    params["s_res"] = jnp.zeros((G, 1), jnp.float32)     # conv bias = 0

    # classifier_conv: Conv1d(1, 32, kernel = G*W_final + extra) == dense layer.
    w_final = _out_time_len(cfg)
    cf = G * w_final
    kc = cf + cfg["extra_length"]
    w_cls = _xavier(ks[5], (32, kc), 1 * kc, 32 * kc)
    w_cls_t = jnp.transpose(w_cls)                       # (Kc, 32)
    params["w1x"] = w_cls_t[:cf, :]
    params["w1e"] = w_cls_t[cf:, :]
    params["b1"] = jnp.zeros((1, 32), jnp.float32)

    # fc: Linear(32, 2), bias=0.
    w_fc = _xavier(ks[6], (2, 32), 32, 2)
    params["w2"] = jnp.transpose(w_fc)                   # (32, 2)
    params["b2"] = jnp.zeros((1, 2), jnp.float32)

    # Round conv weights to bf16 once so the bf16-input MXU matmuls in the
    # kernel and the f32 reference see numerically identical parameters.
    for k in ["w_time", "w_b2", "w_b3", "w_b4", "w_res"]:
        params[k] = params[k].astype(jnp.bfloat16).astype(jnp.float32)

    return params, w_final


# ----------------------------------------------------------------------------
# Pure-JAX reference (same folded parameters) for a numerical sanity check.
# ----------------------------------------------------------------------------
def edgcn_reference(params, x, extra, cfg):
    pk, ps = cfg["pool_time_length"], cfg["pool_time_stride"]

    def conv(h, w, shift):                      # h (B,C,L), w (K,Cout,Cin)
        K = w.shape[0]
        L_out = h.shape[2] - K + 1
        acc = jnp.zeros((h.shape[0], w.shape[1], L_out), jnp.float32)
        for k in range(K):
            acc = acc + jnp.einsum("oc,bcl->bol", w[k], h[:, :, k:k + L_out])
        return acc + shift[None, :, :]

    def pool(h):
        Lp = (h.shape[2] - pk) // ps + 1
        return jnp.stack([jnp.max(h[:, :, i * ps:i * ps + pk], axis=2)
                          for i in range(Lp)], axis=2)

    leaky = lambda y: jnp.where(y > 0, y, 0.2 * y)
    elu = lambda y: jnp.where(y > 0, y, jnp.exp(y) - 1.0)

    h = x
    for wk, sk in [("w_time", "s_time"), ("w_b2", "s_b2"),
                   ("w_b3", "s_b3"), ("w_b4", "s_b4")]:
        h = pool(leaky(conv(h, params[wk], params[sk])))
    h = elu(conv(h, params["w_res"], params["s_res"]))

    B = h.shape[0]
    xf = h.reshape(B, -1)
    hid = xf @ params["w1x"] + extra @ params["w1e"] + params["b1"]
    logits = hid @ params["w2"] + params["b2"]
    return jax.nn.log_softmax(logits, axis=1)


if __name__ == "__main__":
    cfg = dict(
        in_chans=4, input_time_length=96, extra_length=8,
        n_filters_time=4, filter_time_length=4,
        pool_time_length=2, pool_time_stride=2,
        n_filters_2=4, filter_length_2=4,
        n_filters_3=8, filter_length_3=4,
        n_filters_4=8, filter_length_4=4,
        channel_res_conv_length=3,
    )
    B = 2
    key = jax.random.PRNGKey(0)
    k_p, k_x, k_e = jax.random.split(key, 3)

    params, w_final = init_edgcn_params(k_p, cfg)
    assert w_final >= 1
    packed = pack_params(params, cfg, w_final)

    x = jax.random.normal(k_x, (B, cfg["in_chans"], cfg["input_time_length"]),
                          jnp.float32)
    extra = jax.random.normal(k_e, (B, cfg["extra_length"]), jnp.float32)

    out = edgcn_forward(packed, x, extra, cfg)
    out = jax.block_until_ready(out)
    assert out.shape == (B, 2)
    assert bool(jnp.all(jnp.isfinite(out)))

    # Sanity check vs. a plain-JAX reference (tolerance absorbs the in-kernel
    # bf16 activation casts and MXU accumulation order differences).
    with jax.default_matmul_precision("highest"):
        ref = edgcn_reference(params, x, extra, cfg)
    assert bool(jnp.allclose(out, ref, atol=5e-2, rtol=5e-2))

    print("KERNEL_OK")
</pallas_src>

<mosaic_0001>
module attributes {stable_mosaic.version = 11 : i64} {
  func.func @_edgcn_fused_kernel(%arg0: i32, %arg1: memref<2x4x96xf32, #tpu.memory_space<vmem>>, %arg2: memref<2x8xf32, #tpu.memory_space<vmem>>, %arg3: memref<19x32x32xbf16, #tpu.memory_space<vmem>>, %arg4: memref<32x8xf32, #tpu.memory_space<vmem>>, %arg5: memref<64x32xf32, #tpu.memory_space<vmem>>, %arg6: memref<2x1x2xf32, #tpu.memory_space<vmem>>) attributes {dimension_semantics = [#tpu.dimension_semantics<arbitrary>], iteration_bounds = array<i64: 1>, scalar_prefetch = 0 : i64, scratch_operands = 0 : i64, tpu.core_type = #tpu.core_type<tc>, window_params = [{pipeline_mode = #tpu.pipeline_mode<synchronous>, transform_indices = @transform_0, window_bounds = array<i64: 2, 4, 96>}, {pipeline_mode = #tpu.pipeline_mode<synchronous>, transform_indices = @transform_1, window_bounds = array<i64: 2, 8>}, {pipeline_mode = #tpu.pipeline_mode<synchronous>, transform_indices = @transform_2, window_bounds = array<i64: 19, 32, 32>}, {pipeline_mode = #tpu.pipeline_mode<synchronous>, transform_indices = @transform_3, window_bounds = array<i64: 32, 8>}, {pipeline_mode = #tpu.pipeline_mode<synchronous>, transform_indices = @transform_4, window_bounds = array<i64: 64, 32>}, {pipeline_mode = #tpu.pipeline_mode<synchronous>, transform_indices = @transform_5, window_bounds = array<i64: 2, 1, 2>}]} {
    %c0 = arith.constant 0 : index
    %c0_0 = arith.constant 0 : index
    %0 = vector.load %arg5[%c0, %c0_0] : memref<64x32xf32, #tpu.memory_space<vmem>>, vector<64x32xf32>
    %c0_1 = arith.constant 0 : index
    %c0_2 = arith.constant 0 : index
    %1 = vector.load %arg4[%c0_1, %c0_2] : memref<32x8xf32, #tpu.memory_space<vmem>>, vector<32x8xf32>
    %c0_3 = arith.constant 0 : index
    %c0_4 = arith.constant 0 : index
    %2 = vector.load %arg2[%c0_3, %c0_4] : memref<2x8xf32, #tpu.memory_space<vmem>>, vector<2x8xf32>
    %c0_5 = arith.constant 0 : index
    %c0_6 = arith.constant 0 : index
    %c0_7 = arith.constant 0 : index
    %3 = vector.load %arg1[%c0_5, %c0_6, %c0_7] : memref<2x4x96xf32, #tpu.memory_space<vmem>>, vector<1x4x96xf32>
    %4 = vector.shape_cast %3 : vector<1x4x96xf32> to vector<4x96xf32>
    %5 = arith.truncf %4 : vector<4x96xf32> to vector<4x96xbf16>
    %c0_8 = arith.constant 0 : index
    %c0_9 = arith.constant 0 : index
    %c0_10 = arith.constant 0 : index
    %6 = vector.load %arg3[%c0_8, %c0_9, %c0_10] : memref<19x32x32xbf16, #tpu.memory_space<vmem>>, vector<1x32x32xbf16>
    %7 = vector.shape_cast %6 : vector<1x32x32xbf16> to vector<32x32xbf16>
    %8 = vector.extract_strided_slice %7 {offsets = [0, 0], sizes = [16, 4], strides = [1, 1]} : vector<32x32xbf16> to vector<16x4xbf16>
    %9 = vector.extract_strided_slice %5 {offsets = [0, 0], sizes = [4, 93], strides = [1, 1]} : vector<4x96xbf16> to vector<4x93xbf16>
    %cst = arith.constant dense<0.000000e+00> : vector<16x93xf32>
    %10 = tpu.matmul %8, %9, %cst {dimension_numbers = #tpu.dot_dimension_numbers<[1], [0], [0], [1], [0, 0, 1, 1], [], []>} : vector<16x4xbf16>, vector<4x93xbf16>, vector<16x93xf32> -> vector<16x93xf32>
    %c1 = arith.constant 1 : index
    %c0_11 = arith.constant 0 : index
    %c0_12 = arith.constant 0 : index
    %11 = vector.load %arg3[%c1, %c0_11, %c0_12] : memref<19x32x32xbf16, #tpu.memory_space<vmem>>, vector<1x32x32xbf16>
    %12 = vector.shape_cast %11 : vector<1x32x32xbf16> to vector<32x32xbf16>
    %13 = vector.extract_strided_slice %12 {offsets = [0, 0], sizes = [16, 4], strides = [1, 1]} : vector<32x32xbf16> to vector<16x4xbf16>
    %14 = vector.extract_strided_slice %5 {offsets = [0, 1], sizes = [4, 93], strides = [1, 1]} : vector<4x96xbf16> to vector<4x93xbf16>
    %cst_13 = arith.constant dense<0.000000e+00> : vector<16x93xf32>
    %15 = tpu.matmul %13, %14, %cst_13 {dimension_numbers = #tpu.dot_dimension_numbers<[1], [0], [0], [1], [0, 0, 1, 1], [], []>} : vector<16x4xbf16>, vector<4x93xbf16>, vector<16x93xf32> -> vector<16x93xf32>
    %16 = arith.addf %10, %15 : vector<16x93xf32>
    %c2 = arith.constant 2 : index
    %c0_14 = arith.constant 0 : index
    %c0_15 = arith.constant 0 : index
    %17 = vector.load %arg3[%c2, %c0_14, %c0_15] : memref<19x32x32xbf16, #tpu.memory_space<vmem>>, vector<1x32x32xbf16>
    %18 = vector.shape_cast %17 : vector<1x32x32xbf16> to vector<32x32xbf16>
    %19 = vector.extract_strided_slice %18 {offsets = [0, 0], sizes = [16, 4], strides = [1, 1]} : vector<32x32xbf16> to vector<16x4xbf16>
    %20 = vector.extract_strided_slice %5 {offsets = [0, 2], sizes = [4, 93], strides = [1, 1]} : vector<4x96xbf16> to vector<4x93xbf16>
    %cst_16 = arith.constant dense<0.000000e+00> : vector<16x93xf32>
    %21 = tpu.matmul %19, %20, %cst_16 {dimension_numbers = #tpu.dot_dimension_numbers<[1], [0], [0], [1], [0, 0, 1, 1], [], []>} : vector<16x4xbf16>, vector<4x93xbf16>, vector<16x93xf32> -> vector<16x93xf32>
    %22 = arith.addf %16, %21 : vector<16x93xf32>
    %c3 = arith.constant 3 : index
    %c0_17 = arith.constant 0 : index
    %c0_18 = arith.constant 0 : index
    %23 = vector.load %arg3[%c3, %c0_17, %c0_18] : memref<19x32x32xbf16, #tpu.memory_space<vmem>>, vector<1x32x32xbf16>
    %24 = vector.shape_cast %23 : vector<1x32x32xbf16> to vector<32x32xbf16>
    %25 = vector.extract_strided_slice %24 {offsets = [0, 0], sizes = [16, 4], strides = [1, 1]} : vector<32x32xbf16> to vector<16x4xbf16>
    %26 = vector.extract_strided_slice %5 {offsets = [0, 3], sizes = [4, 93], strides = [1, 1]} : vector<4x96xbf16> to vector<4x93xbf16>
    %cst_19 = arith.constant dense<0.000000e+00> : vector<16x93xf32>
    %27 = tpu.matmul %25, %26, %cst_19 {dimension_numbers = #tpu.dot_dimension_numbers<[1], [0], [0], [1], [0, 0, 1, 1], [], []>} : vector<16x4xbf16>, vector<4x93xbf16>, vector<16x93xf32> -> vector<16x93xf32>
    %28 = arith.addf %22, %27 : vector<16x93xf32>
    %29 = vector.extract_strided_slice %1 {offsets = [0, 0], sizes = [16, 1], strides = [1, 1]} : vector<32x8xf32> to vector<16x1xf32>
    %30 = vector.broadcast %29 : vector<16x1xf32> to vector<16x93xf32>
    %31 = arith.addf %28, %30 : vector<16x93xf32>
    %cst_20 = arith.constant 0.000000e+00 : f32
    %32 = vector.broadcast %cst_20 : f32 to vector<16x93xf32>
    %33 = arith.cmpf ogt, %31, %32 : vector<16x93xf32>
    %cst_21 = arith.constant 2.000000e-01 : f32
    %34 = vector.broadcast %cst_21 : f32 to vector<16x93xf32>
    %35 = arith.mulf %34, %31 : vector<16x93xf32>
    %36 = arith.select %33, %31, %35 : vector<16x93xi1>, vector<16x93xf32>
    %37 = vector.extract_strided_slice %36 {offsets = [0, 0], sizes = [16, 92], strides = [1, 1]} : vector<16x93xf32> to vector<16x92xf32>
    %38 = vector.extract_strided_slice %36 {offsets = [0, 1], sizes = [16, 92], strides = [1, 1]} : vector<16x93xf32> to vector<16x92xf32>
    %39 = arith.maximumf %37, %38 : vector<16x92xf32>
    %40 = arith.truncf %39 : vector<16x92xf32> to vector<16x92xbf16>
    %c4 = arith.constant 4 : index
    %c0_22 = arith.constant 0 : index
    %c0_23 = arith.constant 0 : index
    %41 = vector.load %arg3[%c4, %c0_22, %c0_23] : memref<19x32x32xbf16, #tpu.memory_space<vmem>>, vector<1x32x32xbf16>
    %42 = vector.shape_cast %41 : vector<1x32x32xbf16> to vector<32x32xbf16>
    %43 = vector.extract_strided_slice %42 {offsets = [0, 0], sizes = [16, 16], strides = [1, 1]} : vector<32x32xbf16> to vector<16x16xbf16>
    %44 = vector.extract_strided_slice %40 {offsets = [0, 0], sizes = [16, 86], strides = [1, 1]} : vector<16x92xbf16> to vector<16x86xbf16>
    %cst_24 = arith.constant dense<0.000000e+00> : vector<16x86xf32>
    %45 = tpu.matmul %43, %44, %cst_24 {dimension_numbers = #tpu.dot_dimension_numbers<[1], [0], [0], [1], [0, 0, 1, 1], [], []>} : vector<16x16xbf16>, vector<16x86xbf16>, vector<16x86xf32> -> vector<16x86xf32>
    %c5 = arith.constant 5 : index
    %c0_25 = arith.constant 0 : index
    %c0_26 = arith.constant 0 : index
    %46 = vector.load %arg3[%c5, %c0_25, %c0_26] : memref<19x32x32xbf16, #tpu.memory_space<vmem>>, vector<1x32x32xbf16>
    %47 = vector.shape_cast %46 : vector<1x32x32xbf16> to vector<32x32xbf16>
    %48 = vector.extract_strided_slice %47 {offsets = [0, 0], sizes = [16, 16], strides = [1, 1]} : vector<32x32xbf16> to vector<16x16xbf16>
    %49 = vector.extract_strided_slice %40 {offsets = [0, 2], sizes = [16, 86], strides = [1, 1]} : vector<16x92xbf16> to vector<16x86xbf16>
    %cst_27 = arith.constant dense<0.000000e+00> : vector<16x86xf32>
    %50 = tpu.matmul %48, %49, %cst_27 {dimension_numbers = #tpu.dot_dimension_numbers<[1], [0], [0], [1], [0, 0, 1, 1], [], []>} : vector<16x16xbf16>, vector<16x86xbf16>, vector<16x86xf32> -> vector<16x86xf32>
    %51 = arith.addf %45, %50 : vector<16x86xf32>
    %c6 = arith.constant 6 : index
    %c0_28 = arith.constant 0 : index
    %c0_29 = arith.constant 0 : index
    %52 = vector.load %arg3[%c6, %c0_28, %c0_29] : memref<19x32x32xbf16, #tpu.memory_space<vmem>>, vector<1x32x32xbf16>
    %53 = vector.shape_cast %52 : vector<1x32x32xbf16> to vector<32x32xbf16>
    %54 = vector.extract_strided_slice %53 {offsets = [0, 0], sizes = [16, 16], strides = [1, 1]} : vector<32x32xbf16> to vector<16x16xbf16>
    %55 = vector.extract_strided_slice %40 {offsets = [0, 4], sizes = [16, 86], strides = [1, 1]} : vector<16x92xbf16> to vector<16x86xbf16>
    %cst_30 = arith.constant dense<0.000000e+00> : vector<16x86xf32>
    %56 = tpu.matmul %54, %55, %cst_30 {dimension_numbers = #tpu.dot_dimension_numbers<[1], [0], [0], [1], [0, 0, 1, 1], [], []>} : vector<16x16xbf16>, vector<16x86xbf16>, vector<16x86xf32> -> vector<16x86xf32>
    %57 = arith.addf %51, %56 : vector<16x86xf32>
    %c7 = arith.constant 7 : index
    %c0_31 = arith.constant 0 : index
    %c0_32 = arith.constant 0 : index
    %58 = vector.load %arg3[%c7, %c0_31, %c0_32] : memref<19x32x32xbf16, #tpu.memory_space<vmem>>, vector<1x32x32xbf16>
    %59 = vector.shape_cast %58 : vector<1x32x32xbf16> to vector<32x32xbf16>
    %60 = vector.extract_strided_slice %59 {offsets = [0, 0], sizes = [16, 16], strides = [1, 1]} : vector<32x32xbf16> to vector<16x16xbf16>
    %61 = vector.extract_strided_slice %40 {offsets = [0, 6], sizes = [16, 86], strides = [1, 1]} : vector<16x92xbf16> to vector<16x86xbf16>
    %cst_33 = arith.constant dense<0.000000e+00> : vector<16x86xf32>
    %62 = tpu.matmul %60, %61, %cst_33 {dimension_numbers = #tpu.dot_dimension_numbers<[1], [0], [0], [1], [0, 0, 1, 1], [], []>} : vector<16x16xbf16>, vector<16x86xbf16>, vector<16x86xf32> -> vector<16x86xf32>
    %63 = arith.addf %57, %62 : vector<16x86xf32>
    %64 = vector.extract_strided_slice %1 {offsets = [0, 1], sizes = [16, 1], strides = [1, 1]} : vector<32x8xf32> to vector<16x1xf32>
    %65 = vector.broadcast %64 : vector<16x1xf32> to vector<16x86xf32>
    %66 = arith.addf %63, %65 : vector<16x86xf32>
    %cst_34 = arith.constant 0.000000e+00 : f32
    %67 = vector.broadcast %cst_34 : f32 to vector<16x86xf32>
    %68 = arith.cmpf ogt, %66, %67 : vector<16x86xf32>
    %cst_35 = arith.constant 2.000000e-01 : f32
    %69 = vector.broadcast %cst_35 : f32 to vector<16x86xf32>
    %70 = arith.mulf %69, %66 : vector<16x86xf32>
    %71 = arith.select %68, %66, %70 : vector<16x86xi1>, vector<16x86xf32>
    %72 = vector.extract_strided_slice %71 {offsets = [0, 0], sizes = [16, 84], strides = [1, 1]} : vector<16x86xf32> to vector<16x84xf32>
    %73 = vector.extract_strided_slice %71 {offsets = [0, 2], sizes = [16, 84], strides = [1, 1]} : vector<16x86xf32> to vector<16x84xf32>
    %74 = arith.maximumf %72, %73 : vector<16x84xf32>
    %75 = arith.truncf %74 : vector<16x84xf32> to vector<16x84xbf16>
    %c8 = arith.constant 8 : index
    %c0_36 = arith.constant 0 : index
    %c0_37 = arith.constant 0 : index
    %76 = vector.load %arg3[%c8, %c0_36, %c0_37] : memref<19x32x32xbf16, #tpu.memory_space<vmem>>, vector<1x32x32xbf16>
    %77 = vector.shape_cast %76 : vector<1x32x32xbf16> to vector<32x32xbf16>
    %78 = vector.extract_strided_slice %77 {offsets = [0, 0], sizes = [32, 16], strides = [1, 1]} : vector<32x32xbf16> to vector<32x16xbf16>
    %79 = vector.extract_strided_slice %75 {offsets = [0, 0], sizes = [16, 72], strides = [1, 1]} : vector<16x84xbf16> to vector<16x72xbf16>
    %cst_38 = arith.constant dense<0.000000e+00> : vector<32x72xf32>
    %80 = tpu.matmul %78, %79, %cst_38 {dimension_numbers = #tpu.dot_dimension_numbers<[1], [0], [0], [1], [0, 0, 1, 1], [], []>} : vector<32x16xbf16>, vector<16x72xbf16>, vector<32x72xf32> -> vector<32x72xf32>
    %c9 = arith.constant 9 : index
    %c0_39 = arith.constant 0 : index
    %c0_40 = arith.constant 0 : index
    %81 = vector.load %arg3[%c9, %c0_39, %c0_40] : memref<19x32x32xbf16, #tpu.memory_space<vmem>>, vector<1x32x32xbf16>
    %82 = vector.shape_cast %81 : vector<1x32x32xbf16> to vector<32x32xbf16>
    %83 = vector.extract_strided_slice %82 {offsets = [0, 0], sizes = [32, 16], strides = [1, 1]} : vector<32x32xbf16> to vector<32x16xbf16>
    %84 = vector.extract_strided_slice %75 {offsets = [0, 4], sizes = [16, 72], strides = [1, 1]} : vector<16x84xbf16> to vector<16x72xbf16>
    %cst_41 = arith.constant dense<0.000000e+00> : vector<32x72xf32>
    %85 = tpu.matmul %83, %84, %cst_41 {dimension_numbers = #tpu.dot_dimension_numbers<[1], [0], [0], [1], [0, 0, 1, 1], [], []>} : vector<32x16xbf16>, vector<16x72xbf16>, vector<32x72xf32> -> vector<32x72xf32>
    %86 = arith.addf %80, %85 : vector<32x72xf32>
    %c10 = arith.constant 10 : index
    %c0_42 = arith.constant 0 : index
    %c0_43 = arith.constant 0 : index
    %87 = vector.load %arg3[%c10, %c0_42, %c0_43] : memref<19x32x32xbf16, #tpu.memory_space<vmem>>, vector<1x32x32xbf16>
    %88 = vector.shape_cast %87 : vector<1x32x32xbf16> to vector<32x32xbf16>
    %89 = vector.extract_strided_slice %88 {offsets = [0, 0], sizes = [32, 16], strides = [1, 1]} : vector<32x32xbf16> to vector<32x16xbf16>
    %90 = vector.extract_strided_slice %75 {offsets = [0, 8], sizes = [16, 72], strides = [1, 1]} : vector<16x84xbf16> to vector<16x72xbf16>
    %cst_44 = arith.constant dense<0.000000e+00> : vector<32x72xf32>
    %91 = tpu.matmul %89, %90, %cst_44 {dimension_numbers = #tpu.dot_dimension_numbers<[1], [0], [0], [1], [0, 0, 1, 1], [], []>} : vector<32x16xbf16>, vector<16x72xbf16>, vector<32x72xf32> -> vector<32x72xf32>
    %92 = arith.addf %86, %91 : vector<32x72xf32>
    %c11 = arith.constant 11 : index
    %c0_45 = arith.constant 0 : index
    %c0_46 = arith.constant 0 : index
    %93 = vector.load %arg3[%c11, %c0_45, %c0_46] : memref<19x32x32xbf16, #tpu.memory_space<vmem>>, vector<1x32x32xbf16>
    %94 = vector.shape_cast %93 : vector<1x32x32xbf16> to vector<32x32xbf16>
    %95 = vector.extract_strided_slice %94 {offsets = [0, 0], sizes = [32, 16], strides = [1, 1]} : vector<32x32xbf16> to vector<32x16xbf16>
    %96 = vector.extract_strided_slice %75 {offsets = [0, 12], sizes = [16, 72], strides = [1, 1]} : vector<16x84xbf16> to vector<16x72xbf16>
    %cst_47 = arith.constant dense<0.000000e+00> : vector<32x72xf32>
    %97 = tpu.matmul %95, %96, %cst_47 {dimension_numbers = #tpu.dot_dimension_numbers<[1], [0], [0], [1], [0, 0, 1, 1], [], []>} : vector<32x16xbf16>, vector<16x72xbf16>, vector<32x72xf32> -> vector<32x72xf32>
    %98 = arith.addf %92, %97 : vector<32x72xf32>
    %99 = vector.extract_strided_slice %1 {offsets = [0, 2], sizes = [32, 1], strides = [1, 1]} : vector<32x8xf32> to vector<32x1xf32>
    %100 = vector.broadcast %99 : vector<32x1xf32> to vector<32x72xf32>
    %101 = arith.addf %98, %100 : vector<32x72xf32>
    %cst_48 = arith.constant 0.000000e+00 : f32
    %102 = vector.broadcast %cst_48 : f32 to vector<32x72xf32>
    %103 = arith.cmpf ogt, %101, %102 : vector<32x72xf32>
    %cst_49 = arith.constant 2.000000e-01 : f32
    %104 = vector.broadcast %cst_49 : f32 to vector<32x72xf32>
    %105 = arith.mulf %104, %101 : vector<32x72xf32>
    %106 = arith.select %103, %101, %105 : vector<32x72xi1>, vector<32x72xf32>
    %107 = vector.extract_strided_slice %106 {offsets = [0, 0], sizes = [32, 68], strides = [1, 1]} : vector<32x72xf32> to vector<32x68xf32>
    %108 = vector.extract_strided_slice %106 {offsets = [0, 4], sizes = [32, 68], strides = [1, 1]} : vector<32x72xf32> to vector<32x68xf32>
    %109 = arith.maximumf %107, %108 : vector<32x68xf32>
    %110 = arith.truncf %109 : vector<32x68xf32> to vector<32x68xbf16>
    %c12 = arith.constant 12 : index
    %c0_50 = arith.constant 0 : index
    %c0_51 = arith.constant 0 : index
    %111 = vector.load %arg3[%c12, %c0_50, %c0_51] : memref<19x32x32xbf16, #tpu.memory_space<vmem>>, vector<1x32x32xbf16>
    %112 = vector.shape_cast %111 : vector<1x32x32xbf16> to vector<32x32xbf16>
    %113 = vector.extract_strided_slice %110 {offsets = [0, 0], sizes = [32, 44], strides = [1, 1]} : vector<32x68xbf16> to vector<32x44xbf16>
    %cst_52 = arith.constant dense<0.000000e+00> : vector<32x44xf32>
    %114 = tpu.matmul %112, %113, %cst_52 {dimension_numbers = #tpu.dot_dimension_numbers<[1], [0], [0], [1], [0, 0, 1, 1], [], []>} : vector<32x32xbf16>, vector<32x44xbf16>, vector<32x44xf32> -> vector<32x44xf32>
    %c13 = arith.constant 13 : index
    %c0_53 = arith.constant 0 : index
    %c0_54 = arith.constant 0 : index
    %115 = vector.load %arg3[%c13, %c0_53, %c0_54] : memref<19x32x32xbf16, #tpu.memory_space<vmem>>, vector<1x32x32xbf16>
    %116 = vector.shape_cast %115 : vector<1x32x32xbf16> to vector<32x32xbf16>
    %117 = vector.extract_strided_slice %110 {offsets = [0, 8], sizes = [32, 44], strides = [1, 1]} : vector<32x68xbf16> to vector<32x44xbf16>
    %cst_55 = arith.constant dense<0.000000e+00> : vector<32x44xf32>
    %118 = tpu.matmul %116, %117, %cst_55 {dimension_numbers = #tpu.dot_dimension_numbers<[1], [0], [0], [1], [0, 0, 1, 1], [], []>} : vector<32x32xbf16>, vector<32x44xbf16>, vector<32x44xf32> -> vector<32x44xf32>
    %119 = arith.addf %114, %118 : vector<32x44xf32>
    %c14 = arith.constant 14 : index
    %c0_56 = arith.constant 0 : index
    %c0_57 = arith.constant 0 : index
    %120 = vector.load %arg3[%c14, %c0_56, %c0_57] : memref<19x32x32xbf16, #tpu.memory_space<vmem>>, vector<1x32x32xbf16>
    %121 = vector.shape_cast %120 : vector<1x32x32xbf16> to vector<32x32xbf16>
    %122 = vector.extract_strided_slice %110 {offsets = [0, 16], sizes = [32, 44], strides = [1, 1]} : vector<32x68xbf16> to vector<32x44xbf16>
    %cst_58 = arith.constant dense<0.000000e+00> : vector<32x44xf32>
    %123 = tpu.matmul %121, %122, %cst_58 {dimension_numbers = #tpu.dot_dimension_numbers<[1], [0], [0], [1], [0, 0, 1, 1], [], []>} : vector<32x32xbf16>, vector<32x44xbf16>, vector<32x44xf32> -> vector<32x44xf32>
    %124 = arith.addf %119, %123 : vector<32x44xf32>
    %c15 = arith.constant 15 : index
    %c0_59 = arith.constant 0 : index
    %c0_60 = arith.constant 0 : index
    %125 = vector.load %arg3[%c15, %c0_59, %c0_60] : memref<19x32x32xbf16, #tpu.memory_space<vmem>>, vector<1x32x32xbf16>
    %126 = vector.shape_cast %125 : vector<1x32x32xbf16> to vector<32x32xbf16>
    %127 = vector.extract_strided_slice %110 {offsets = [0, 24], sizes = [32, 44], strides = [1, 1]} : vector<32x68xbf16> to vector<32x44xbf16>
    %cst_61 = arith.constant dense<0.000000e+00> : vector<32x44xf32>
    %128 = tpu.matmul %126, %127, %cst_61 {dimension_numbers = #tpu.dot_dimension_numbers<[1], [0], [0], [1], [0, 0, 1, 1], [], []>} : vector<32x32xbf16>, vector<32x44xbf16>, vector<32x44xf32> -> vector<32x44xf32>
    %129 = arith.addf %124, %128 : vector<32x44xf32>
    %130 = vector.extract_strided_slice %1 {offsets = [0, 3], sizes = [32, 1], strides = [1, 1]} : vector<32x8xf32> to vector<32x1xf32>
    %131 = vector.broadcast %130 : vector<32x1xf32> to vector<32x44xf32>
    %132 = arith.addf %129, %131 : vector<32x44xf32>
    %cst_62 = arith.constant 0.000000e+00 : f32
    %133 = vector.broadcast %cst_62 : f32 to vector<32x44xf32>
    %134 = arith.cmpf ogt, %132, %133 : vector<32x44xf32>
    %cst_63 = arith.constant 2.000000e-01 : f32
    %135 = vector.broadcast %cst_63 : f32 to vector<32x44xf32>
    %136 = arith.mulf %135, %132 : vector<32x44xf32>
    %137 = arith.select %134, %132, %136 : vector<32x44xi1>, vector<32x44xf32>
    %138 = vector.extract_strided_slice %137 {offsets = [0, 0], sizes = [32, 36], strides = [1, 1]} : vector<32x44xf32> to vector<32x36xf32>
    %139 = vector.extract_strided_slice %137 {offsets = [0, 8], sizes = [32, 36], strides = [1, 1]} : vector<32x44xf32> to vector<32x36xf32>
    %140 = arith.maximumf %138, %139 : vector<32x36xf32>
    %141 = arith.truncf %140 : vector<32x36xf32> to vector<32x36xbf16>
    %c16 = arith.constant 16 : index
    %c0_64 = arith.constant 0 : index
    %c0_65 = arith.constant 0 : index
    %142 = vector.load %arg3[%c16, %c0_64, %c0_65] : memref<19x32x32xbf16, #tpu.memory_space<vmem>>, vector<1x32x32xbf16>
    %143 = vector.shape_cast %142 : vector<1x32x32xbf16> to vector<32x32xbf16>
    %144 = vector.extract_strided_slice %143 {offsets = [0, 0], sizes = [4, 32], strides = [1, 1]} : vector<32x32xbf16> to vector<4x32xbf16>
    %145 = vector.extract_strided_slice %141 {offsets = [0, 0], sizes = [32, 4], strides = [1, 1]} : vector<32x36xbf16> to vector<32x4xbf16>
    %cst_66 = arith.constant dense<0.000000e+00> : vector<4x4xf32>
    %146 = tpu.matmul %144, %145, %cst_66 {dimension_numbers = #tpu.dot_dimension_numbers<[1], [0], [0], [1], [0, 0, 1, 1], [], []>} : vector<4x32xbf16>, vector<32x4xbf16>, vector<4x4xf32> -> vector<4x4xf32>
    %c17 = arith.constant 17 : index
    %c0_67 = arith.constant 0 : index
    %c0_68 = arith.constant 0 : index
    %147 = vector.load %arg3[%c17, %c0_67, %c0_68] : memref<19x32x32xbf16, #tpu.memory_space<vmem>>, vector<1x32x32xbf16>
    %148 = vector.shape_cast %147 : vector<1x32x32xbf16> to vector<32x32xbf16>
    %149 = vector.extract_strided_slice %148 {offsets = [0, 0], sizes = [4, 32], strides = [1, 1]} : vector<32x32xbf16> to vector<4x32xbf16>
    %150 = vector.extract_strided_slice %141 {offsets = [0, 16], sizes = [32, 4], strides = [1, 1]} : vector<32x36xbf16> to vector<32x4xbf16>
    %cst_69 = arith.constant dense<0.000000e+00> : vector<4x4xf32>
    %151 = tpu.matmul %149, %150, %cst_69 {dimension_numbers = #tpu.dot_dimension_numbers<[1], [0], [0], [1], [0, 0, 1, 1], [], []>} : vector<4x32xbf16>, vector<32x4xbf16>, vector<4x4xf32> -> vector<4x4xf32>
    %152 = arith.addf %146, %151 : vector<4x4xf32>
    %c18 = arith.constant 18 : index
    %c0_70 = arith.constant 0 : index
    %c0_71 = arith.constant 0 : index
    %153 = vector.load %arg3[%c18, %c0_70, %c0_71] : memref<19x32x32xbf16, #tpu.memory_space<vmem>>, vector<1x32x32xbf16>
    %154 = vector.shape_cast %153 : vector<1x32x32xbf16> to vector<32x32xbf16>
    %155 = vector.extract_strided_slice %154 {offsets = [0, 0], sizes = [4, 32], strides = [1, 1]} : vector<32x32xbf16> to vector<4x32xbf16>
    %156 = vector.extract_strided_slice %141 {offsets = [0, 32], sizes = [32, 4], strides = [1, 1]} : vector<32x36xbf16> to vector<32x4xbf16>
    %cst_72 = arith.constant dense<0.000000e+00> : vector<4x4xf32>
    %157 = tpu.matmul %155, %156, %cst_72 {dimension_numbers = #tpu.dot_dimension_numbers<[1], [0], [0], [1], [0, 0, 1, 1], [], []>} : vector<4x32xbf16>, vector<32x4xbf16>, vector<4x4xf32> -> vector<4x4xf32>
    %158 = arith.addf %152, %157 : vector<4x4xf32>
    %159 = vector.extract_strided_slice %1 {offsets = [0, 4], sizes = [4, 1], strides = [1, 1]} : vector<32x8xf32> to vector<4x1xf32>
    %160 = vector.broadcast %159 : vector<4x1xf32> to vector<4x4xf32>
    %161 = arith.addf %158, %160 : vector<4x4xf32>
    %cst_73 = arith.constant 0.000000e+00 : f32
    %162 = vector.broadcast %cst_73 : f32 to vector<4x4xf32>
    %163 = arith.cmpf ogt, %161, %162 : vector<4x4xf32>
    %164 = math.exp %161 : vector<4x4xf32>
    %cst_74 = arith.constant 1.000000e+00 : f32
    %165 = vector.broadcast %cst_74 : f32 to vector<4x4xf32>
    %166 = arith.subf %164, %165 : vector<4x4xf32>
    %167 = arith.select %163, %161, %166 : vector<4x4xi1>, vector<4x4xf32>
    %168 = vector.extract_strided_slice %2 {offsets = [0, 0], sizes = [1, 8], strides = [1, 1]} : vector<2x8xf32> to vector<1x8xf32>
    %169 = vector.extract_strided_slice %0 {offsets = [16, 0], sizes = [1, 32], strides = [1, 1]} : vector<64x32xf32> to vector<1x32xf32>
    %170 = vector.extract_strided_slice %0 {offsets = [8, 0], sizes = [8, 32], strides = [1, 1]} : vector<64x32xf32> to vector<8x32xf32>
    %cst_75 = arith.constant dense<0.000000e+00> : vector<1x32xf32>
    %171 = tpu.matmul %168, %170, %cst_75 {dimension_numbers = #tpu.dot_dimension_numbers<[1], [0], [0], [1], [0, 0, 1, 1], [], []>} : vector<1x8xf32>, vector<8x32xf32>, vector<1x32xf32> -> vector<1x32xf32>
    %172 = arith.addf %169, %171 : vector<1x32xf32>
    %173 = vector.extract_strided_slice %167 {offsets = [0, 0], sizes = [4, 1], strides = [1, 1]} : vector<4x4xf32> to vector<4x1xf32>
    %174 = vector.extract_strided_slice %0 {offsets = [0, 0], sizes = [4, 32], strides = [1, 1]} : vector<64x32xf32> to vector<4x32xf32>
    %175 = vector.broadcast %173 : vector<4x1xf32> to vector<4x32xf32>
    %176 = arith.mulf %175, %174 : vector<4x32xf32>
    %cst_76 = arith.constant dense<0.000000e+00> : vector<32xf32>
    %177 = vector.multi_reduction <add>, %176, %cst_76 [0] : vector<4x32xf32> to vector<32xf32>
    %178 = vector.shape_cast %177 : vector<32xf32> to vector<1x32xf32>
    %179 = arith.addf %172, %178 : vector<1x32xf32>
    %180 = vector.extract_strided_slice %0 {offsets = [24, 0], sizes = [32, 32], strides = [1, 1]} : vector<64x32xf32> to vector<32x32xf32>
    %cst_77 = arith.constant dense<0.000000e+00> : vector<1x32xf32>
    %181 = tpu.matmul %179, %180, %cst_77 {dimension_numbers = #tpu.dot_dimension_numbers<[1], [0], [0], [1], [0, 0, 1, 1], [], []>} : vector<1x32xf32>, vector<32x32xf32>, vector<1x32xf32> -> vector<1x32xf32>
    %182 = vector.extract_strided_slice %0 {offsets = [56, 0], sizes = [1, 32], strides = [1, 1]} : vector<64x32xf32> to vector<1x32xf32>
    %183 = arith.addf %181, %182 : vector<1x32xf32>
    %184 = vector.extract_strided_slice %183 {offsets = [0, 0], sizes = [1, 2], strides = [1, 1]} : vector<1x32xf32> to vector<1x2xf32>
    %cst_78 = arith.constant dense<0xFF800000> : vector<1xf32>
    %185 = vector.multi_reduction <maximumf>, %184, %cst_78 [1] : vector<1x2xf32> to vector<1xf32>
    %186 = vector.shape_cast %185 : vector<1xf32> to vector<1x1xf32>
    %187 = vector.broadcast %186 : vector<1x1xf32> to vector<1x2xf32>
    %188 = arith.subf %184, %187 : vector<1x2xf32>
    %189 = math.exp %188 : vector<1x2xf32>
    %cst_79 = arith.constant dense<0.000000e+00> : vector<1xf32>
    %190 = vector.multi_reduction <add>, %189, %cst_79 [1] : vector<1x2xf32> to vector<1xf32>
    %191 = vector.shape_cast %190 : vector<1xf32> to vector<1x1xf32>
    %192 = math.log %191 : vector<1x1xf32>
    %193 = vector.broadcast %192 : vector<1x1xf32> to vector<1x2xf32>
    %194 = arith.subf %188, %193 : vector<1x2xf32>
    %c0_80 = arith.constant 0 : index
    %c0_81 = arith.constant 0 : index
    %c0_82 = arith.constant 0 : index
    %195 = vector.load %arg6[%c0_80, %c0_81, %c0_82] : memref<2x1x2xf32, #tpu.memory_space<vmem>>, vector<1x1x2xf32>
    %196 = vector.shape_cast %195 : vector<1x1x2xf32> to vector<1x2xf32>
    %197 = vector.shape_cast %194 : vector<1x2xf32> to vector<1x1x2xf32>
    tpu.vector_store %arg6[%c0_80, %c0_81, %c0_82], %197 {strides = array<i32>} : memref<2x1x2xf32, #tpu.memory_space<vmem>>, vector<1x1x2xf32>,
    %c1_83 = arith.constant 1 : index
    %c0_84 = arith.constant 0 : index
    %c0_85 = arith.constant 0 : index
    %198 = vector.load %arg1[%c1_83, %c0_84, %c0_85] : memref<2x4x96xf32, #tpu.memory_space<vmem>>, vector<1x4x96xf32>
    %199 = vector.shape_cast %198 : vector<1x4x96xf32> to vector<4x96xf32>
    %200 = arith.truncf %199 : vector<4x96xf32> to vector<4x96xbf16>
    %c0_86 = arith.constant 0 : index
    %c0_87 = arith.constant 0 : index
    %c0_88 = arith.constant 0 : index
    %201 = vector.load %arg3[%c0_86, %c0_87, %c0_88] : memref<19x32x32xbf16, #tpu.memory_space<vmem>>, vector<1x32x32xbf16>
    %202 = vector.shape_cast %201 : vector<1x32x32xbf16> to vector<32x32xbf16>
    %203 = vector.extract_strided_slice %202 {offsets = [0, 0], sizes = [16, 4], strides = [1, 1]} : vector<32x32xbf16> to vector<16x4xbf16>
    %204 = vector.extract_strided_slice %200 {offsets = [0, 0], sizes = [4, 93], strides = [1, 1]} : vector<4x96xbf16> to vector<4x93xbf16>
    %cst_89 = arith.constant dense<0.000000e+00> : vector<16x93xf32>
    %205 = tpu.matmul %203, %204, %cst_89 {dimension_numbers = #tpu.dot_dimension_numbers<[1], [0], [0], [1], [0, 0, 1, 1], [], []>} : vector<16x4xbf16>, vector<4x93xbf16>, vector<16x93xf32> -> vector<16x93xf32>
    %c1_90 = arith.constant 1 : index
    %c0_91 = arith.constant 0 : index
    %c0_92 = arith.constant 0 : index
    %206 = vector.load %arg3[%c1_90, %c0_91, %c0_92] : memref<19x32x32xbf16, #tpu.memory_space<vmem>>, vector<1x32x32xbf16>
    %207 = vector.shape_cast %206 : vector<1x32x32xbf16> to vector<32x32xbf16>
    %208 = vector.extract_strided_slice %207 {offsets = [0, 0], sizes = [16, 4], strides = [1, 1]} : vector<32x32xbf16> to vector<16x4xbf16>
    %209 = vector.extract_strided_slice %200 {offsets = [0, 1], sizes = [4, 93], strides = [1, 1]} : vector<4x96xbf16> to vector<4x93xbf16>
    %cst_93 = arith.constant dense<0.000000e+00> : vector<16x93xf32>
    %210 = tpu.matmul %208, %209, %cst_93 {dimension_numbers = #tpu.dot_dimension_numbers<[1], [0], [0], [1], [0, 0, 1, 1], [], []>} : vector<16x4xbf16>, vector<4x93xbf16>, vector<16x93xf32> -> vector<16x93xf32>
    %211 = arith.addf %205, %210 : vector<16x93xf32>
    %c2_94 = arith.constant 2 : index
    %c0_95 = arith.constant 0 : index
    %c0_96 = arith.constant 0 : index
    %212 = vector.load %arg3[%c2_94, %c0_95, %c0_96] : memref<19x32x32xbf16, #tpu.memory_space<vmem>>, vector<1x32x32xbf16>
    %213 = vector.shape_cast %212 : vector<1x32x32xbf16> to vector<32x32xbf16>
    %214 = vector.extract_strided_slice %213 {offsets = [0, 0], sizes = [16, 4], strides = [1, 1]} : vector<32x32xbf16> to vector<16x4xbf16>
    %215 = vector.extract_strided_slice %200 {offsets = [0, 2], sizes = [4, 93], strides = [1, 1]} : vector<4x96xbf16> to vector<4x93xbf16>
    %cst_97 = arith.constant dense<0.000000e+00> : vector<16x93xf32>
    %216 = tpu.matmul %214, %215, %cst_97 {dimension_numbers = #tpu.dot_dimension_numbers<[1], [0], [0], [1], [0, 0, 1, 1], [], []>} : vector<16x4xbf16>, vector<4x93xbf16>, vector<16x93xf32> -> vector<16x93xf32>
    %217 = arith.addf %211, %216 : vector<16x93xf32>
    %c3_98 = arith.constant 3 : index
    %c0_99 = arith.constant 0 : index
    %c0_100 = arith.constant 0 : index
    %218 = vector.load %arg3[%c3_98, %c0_99, %c0_100] : memref<19x32x32xbf16, #tpu.memory_space<vmem>>, vector<1x32x32xbf16>
    %219 = vector.shape_cast %218 : vector<1x32x32xbf16> to vector<32x32xbf16>
    %220 = vector.extract_strided_slice %219 {offsets = [0, 0], sizes = [16, 4], strides = [1, 1]} : vector<32x32xbf16> to vector<16x4xbf16>
    %221 = vector.extract_strided_slice %200 {offsets = [0, 3], sizes = [4, 93], strides = [1, 1]} : vector<4x96xbf16> to vector<4x93xbf16>
    %cst_101 = arith.constant dense<0.000000e+00> : vector<16x93xf32>
    %222 = tpu.matmul %220, %221, %cst_101 {dimension_numbers = #tpu.dot_dimension_numbers<[1], [0], [0], [1], [0, 0, 1, 1], [], []>} : vector<16x4xbf16>, vector<4x93xbf16>, vector<16x93xf32> -> vector<16x93xf32>
    %223 = arith.addf %217, %222 : vector<16x93xf32>
    %224 = vector.extract_strided_slice %1 {offsets = [0, 0], sizes = [16, 1], strides = [1, 1]} : vector<32x8xf32> to vector<16x1xf32>
    %225 = vector.broadcast %224 : vector<16x1xf32> to vector<16x93xf32>
    %226 = arith.addf %223, %225 : vector<16x93xf32>
    %cst_102 = arith.constant 0.000000e+00 : f32
    %227 = vector.broadcast %cst_102 : f32 to vector<16x93xf32>
    %228 = arith.cmpf ogt, %226, %227 : vector<16x93xf32>
    %cst_103 = arith.constant 2.000000e-01 : f32
    %229 = vector.broadcast %cst_103 : f32 to vector<16x93xf32>
    %230 = arith.mulf %229, %226 : vector<16x93xf32>
    %231 = arith.select %228, %226, %230 : vector<16x93xi1>, vector<16x93xf32>
    %232 = vector.extract_strided_slice %231 {offsets = [0, 0], sizes = [16, 92], strides = [1, 1]} : vector<16x93xf32> to vector<16x92xf32>
    %233 = vector.extract_strided_slice %231 {offsets = [0, 1], sizes = [16, 92], strides = [1, 1]} : vector<16x93xf32> to vector<16x92xf32>
    %234 = arith.maximumf %232, %233 : vector<16x92xf32>
    %235 = arith.truncf %234 : vector<16x92xf32> to vector<16x92xbf16>
    %c4_104 = arith.constant 4 : index
    %c0_105 = arith.constant 0 : index
    %c0_106 = arith.constant 0 : index
    %236 = vector.load %arg3[%c4_104, %c0_105, %c0_106] : memref<19x32x32xbf16, #tpu.memory_space<vmem>>, vector<1x32x32xbf16>
    %237 = vector.shape_cast %236 : vector<1x32x32xbf16> to vector<32x32xbf16>
    %238 = vector.extract_strided_slice %237 {offsets = [0, 0], sizes = [16, 16], strides = [1, 1]} : vector<32x32xbf16> to vector<16x16xbf16>
    %239 = vector.extract_strided_slice %235 {offsets = [0, 0], sizes = [16, 86], strides = [1, 1]} : vector<16x92xbf16> to vector<16x86xbf16>
    %cst_107 = arith.constant dense<0.000000e+00> : vector<16x86xf32>
    %240 = tpu.matmul %238, %239, %cst_107 {dimension_numbers = #tpu.dot_dimension_numbers<[1], [0], [0], [1], [0, 0, 1, 1], [], []>} : vector<16x16xbf16>, vector<16x86xbf16>, vector<16x86xf32> -> vector<16x86xf32>
    %c5_108 = arith.constant 5 : index
    %c0_109 = arith.constant 0 : index
    %c0_110 = arith.constant 0 : index
    %241 = vector.load %arg3[%c5_108, %c0_109, %c0_110] : memref<19x32x32xbf16, #tpu.memory_space<vmem>>, vector<1x32x32xbf16>
    %242 = vector.shape_cast %241 : vector<1x32x32xbf16> to vector<32x32xbf16>
    %243 = vector.extract_strided_slice %242 {offsets = [0, 0], sizes = [16, 16], strides = [1, 1]} : vector<32x32xbf16> to vector<16x16xbf16>
    %244 = vector.extract_strided_slice %235 {offsets = [0, 2], sizes = [16, 86], strides = [1, 1]} : vector<16x92xbf16> to vector<16x86xbf16>
    %cst_111 = arith.constant dense<0.000000e+00> : vector<16x86xf32>
    %245 = tpu.matmul %243, %244, %cst_111 {dimension_numbers = #tpu.dot_dimension_numbers<[1], [0], [0], [1], [0, 0, 1, 1], [], []>} : vector<16x16xbf16>, vector<16x86xbf16>, vector<16x86xf32> -> vector<16x86xf32>
    %246 = arith.addf %240, %245 : vector<16x86xf32>
    %c6_112 = arith.constant 6 : index
    %c0_113 = arith.constant 0 : index
    %c0_114 = arith.constant 0 : index
    %247 = vector.load %arg3[%c6_112, %c0_113, %c0_114] : memref<19x32x32xbf16, #tpu.memory_space<vmem>>, vector<1x32x32xbf16>
    %248 = vector.shape_cast %247 : vector<1x32x32xbf16> to vector<32x32xbf16>
    %249 = vector.extract_strided_slice %248 {offsets = [0, 0], sizes = [16, 16], strides = [1, 1]} : vector<32x32xbf16> to vector<16x16xbf16>
    %250 = vector.extract_strided_slice %235 {offsets = [0, 4], sizes = [16, 86], strides = [1, 1]} : vector<16x92xbf16> to vector<16x86xbf16>
    %cst_115 = arith.constant dense<0.000000e+00> : vector<16x86xf32>
    %251 = tpu.matmul %249, %250, %cst_115 {dimension_numbers = #tpu.dot_dimension_numbers<[1], [0], [0], [1], [0, 0, 1, 1], [], []>} : vector<16x16xbf16>, vector<16x86xbf16>, vector<16x86xf32> -> vector<16x86xf32>
    %252 = arith.addf %246, %251 : vector<16x86xf32>
    %c7_116 = arith.constant 7 : index
    %c0_117 = arith.constant 0 : index
    %c0_118 = arith.constant 0 : index
    %253 = vector.load %arg3[%c7_116, %c0_117, %c0_118] : memref<19x32x32xbf16, #tpu.memory_space<vmem>>, vector<1x32x32xbf16>
    %254 = vector.shape_cast %253 : vector<1x32x32xbf16> to vector<32x32xbf16>
    %255 = vector.extract_strided_slice %254 {offsets = [0, 0], sizes = [16, 16], strides = [1, 1]} : vector<32x32xbf16> to vector<16x16xbf16>
    %256 = vector.extract_strided_slice %235 {offsets = [0, 6], sizes = [16, 86], strides = [1, 1]} : vector<16x92xbf16> to vector<16x86xbf16>
    %cst_119 = arith.constant dense<0.000000e+00> : vector<16x86xf32>
    %257 = tpu.matmul %255, %256, %cst_119 {dimension_numbers = #tpu.dot_dimension_numbers<[1], [0], [0], [1], [0, 0, 1, 1], [], []>} : vector<16x16xbf16>, vector<16x86xbf16>, vector<16x86xf32> -> vector<16x86xf32>
    %258 = arith.addf %252, %257 : vector<16x86xf32>
    %259 = vector.extract_strided_slice %1 {offsets = [0, 1], sizes = [16, 1], strides = [1, 1]} : vector<32x8xf32> to vector<16x1xf32>
    %260 = vector.broadcast %259 : vector<16x1xf32> to vector<16x86xf32>
    %261 = arith.addf %258, %260 : vector<16x86xf32>
    %cst_120 = arith.constant 0.000000e+00 : f32
    %262 = vector.broadcast %cst_120 : f32 to vector<16x86xf32>
    %263 = arith.cmpf ogt, %261, %262 : vector<16x86xf32>
    %cst_121 = arith.constant 2.000000e-01 : f32
    %264 = vector.broadcast %cst_121 : f32 to vector<16x86xf32>
    %265 = arith.mulf %264, %261 : vector<16x86xf32>
    %266 = arith.select %263, %261, %265 : vector<16x86xi1>, vector<16x86xf32>
    %267 = vector.extract_strided_slice %266 {offsets = [0, 0], sizes = [16, 84], strides = [1, 1]} : vector<16x86xf32> to vector<16x84xf32>
    %268 = vector.extract_strided_slice %266 {offsets = [0, 2], sizes = [16, 84], strides = [1, 1]} : vector<16x86xf32> to vector<16x84xf32>
    %269 = arith.maximumf %267, %268 : vector<16x84xf32>
    %270 = arith.truncf %269 : vector<16x84xf32> to vector<16x84xbf16>
    %c8_122 = arith.constant 8 : index
    %c0_123 = arith.constant 0 : index
    %c0_124 = arith.constant 0 : index
    %271 = vector.load %arg3[%c8_122, %c0_123, %c0_124] : memref<19x32x32xbf16, #tpu.memory_space<vmem>>, vector<1x32x32xbf16>
    %272 = vector.shape_cast %271 : vector<1x32x32xbf16> to vector<32x32xbf16>
    %273 = vector.extract_strided_slice %272 {offsets = [0, 0], sizes = [32, 16], strides = [1, 1]} : vector<32x32xbf16> to vector<32x16xbf16>
    %274 = vector.extract_strided_slice %270 {offsets = [0, 0], sizes = [16, 72], strides = [1, 1]} : vector<16x84xbf16> to vector<16x72xbf16>
    %cst_125 = arith.constant dense<0.000000e+00> : vector<32x72xf32>
    %275 = tpu.matmul %273, %274, %cst_125 {dimension_numbers = #tpu.dot_dimension_numbers<[1], [0], [0], [1], [0, 0, 1, 1], [], []>} : vector<32x16xbf16>, vector<16x72xbf16>, vector<32x72xf32> -> vector<32x72xf32>
    %c9_126 = arith.constant 9 : index
    %c0_127 = arith.constant 0 : index
    %c0_128 = arith.constant 0 : index
    %276 = vector.load %arg3[%c9_126, %c0_127, %c0_128] : memref<19x32x32xbf16, #tpu.memory_space<vmem>>, vector<1x32x32xbf16>
    %277 = vector.shape_cast %276 : vector<1x32x32xbf16> to vector<32x32xbf16>
    %278 = vector.extract_strided_slice %277 {offsets = [0, 0], sizes = [32, 16], strides = [1, 1]} : vector<32x32xbf16> to vector<32x16xbf16>
    %279 = vector.extract_strided_slice %270 {offsets = [0, 4], sizes = [16, 72], strides = [1, 1]} : vector<16x84xbf16> to vector<16x72xbf16>
    %cst_129 = arith.constant dense<0.000000e+00> : vector<32x72xf32>
    %280 = tpu.matmul %278, %279, %cst_129 {dimension_numbers = #tpu.dot_dimension_numbers<[1], [0], [0], [1], [0, 0, 1, 1], [], []>} : vector<32x16xbf16>, vector<16x72xbf16>, vector<32x72xf32> -> vector<32x72xf32>
    %281 = arith.addf %275, %280 : vector<32x72xf32>
    %c10_130 = arith.constant 10 : index
    %c0_131 = arith.constant 0 : index
    %c0_132 = arith.constant 0 : index
    %282 = vector.load %arg3[%c10_130, %c0_131, %c0_132] : memref<19x32x32xbf16, #tpu.memory_space<vmem>>, vector<1x32x32xbf16>
    %283 = vector.shape_cast %282 : vector<1x32x32xbf16> to vector<32x32xbf16>
    %284 = vector.extract_strided_slice %283 {offsets = [0, 0], sizes = [32, 16], strides = [1, 1]} : vector<32x32xbf16> to vector<32x16xbf16>
    %285 = vector.extract_strided_slice %270 {offsets = [0, 8], sizes = [16, 72], strides = [1, 1]} : vector<16x84xbf16> to vector<16x72xbf16>
    %cst_133 = arith.constant dense<0.000000e+00> : vector<32x72xf32>
    %286 = tpu.matmul %284, %285, %cst_133 {dimension_numbers = #tpu.dot_dimension_numbers<[1], [0], [0], [1], [0, 0, 1, 1], [], []>} : vector<32x16xbf16>, vector<16x72xbf16>, vector<32x72xf32> -> vector<32x72xf32>
    %287 = arith.addf %281, %286 : vector<32x72xf32>
    %c11_134 = arith.constant 11 : index
    %c0_135 = arith.constant 0 : index
    %c0_136 = arith.constant 0 : index
    %288 = vector.load %arg3[%c11_134, %c0_135, %c0_136] : memref<19x32x32xbf16, #tpu.memory_space<vmem>>, vector<1x32x32xbf16>
    %289 = vector.shape_cast %288 : vector<1x32x32xbf16> to vector<32x32xbf16>
    %290 = vector.extract_strided_slice %289 {offsets = [0, 0], sizes = [32, 16], strides = [1, 1]} : vector<32x32xbf16> to vector<32x16xbf16>
    %291 = vector.extract_strided_slice %270 {offsets = [0, 12], sizes = [16, 72], strides = [1, 1]} : vector<16x84xbf16> to vector<16x72xbf16>
    %cst_137 = arith.constant dense<0.000000e+00> : vector<32x72xf32>
    %292 = tpu.matmul %290, %291, %cst_137 {dimension_numbers = #tpu.dot_dimension_numbers<[1], [0], [0], [1], [0, 0, 1, 1], [], []>} : vector<32x16xbf16>, vector<16x72xbf16>, vector<32x72xf32> -> vector<32x72xf32>
    %293 = arith.addf %287, %292 : vector<32x72xf32>
    %294 = vector.extract_strided_slice %1 {offsets = [0, 2], sizes = [32, 1], strides = [1, 1]} : vector<32x8xf32> to vector<32x1xf32>
    %295 = vector.broadcast %294 : vector<32x1xf32> to vector<32x72xf32>
    %296 = arith.addf %293, %295 : vector<32x72xf32>
    %cst_138 = arith.constant 0.000000e+00 : f32
    %297 = vector.broadcast %cst_138 : f32 to vector<32x72xf32>
    %298 = arith.cmpf ogt, %296, %297 : vector<32x72xf32>
    %cst_139 = arith.constant 2.000000e-01 : f32
    %299 = vector.broadcast %cst_139 : f32 to vector<32x72xf32>
    %300 = arith.mulf %299, %296 : vector<32x72xf32>
    %301 = arith.select %298, %296, %300 : vector<32x72xi1>, vector<32x72xf32>
    %302 = vector.extract_strided_slice %301 {offsets = [0, 0], sizes = [32, 68], strides = [1, 1]} : vector<32x72xf32> to vector<32x68xf32>
    %303 = vector.extract_strided_slice %301 {offsets = [0, 4], sizes = [32, 68], strides = [1, 1]} : vector<32x72xf32> to vector<32x68xf32>
    %304 = arith.maximumf %302, %303 : vector<32x68xf32>
    %305 = arith.truncf %304 : vector<32x68xf32> to vector<32x68xbf16>
    %c12_140 = arith.constant 12 : index
    %c0_141 = arith.constant 0 : index
    %c0_142 = arith.constant 0 : index
    %306 = vector.load %arg3[%c12_140, %c0_141, %c0_142] : memref<19x32x32xbf16, #tpu.memory_space<vmem>>, vector<1x32x32xbf16>
    %307 = vector.shape_cast %306 : vector<1x32x32xbf16> to vector<32x32xbf16>
    %308 = vector.extract_strided_slice %305 {offsets = [0, 0], sizes = [32, 44], strides = [1, 1]} : vector<32x68xbf16> to vector<32x44xbf16>
    %cst_143 = arith.constant dense<0.000000e+00> : vector<32x44xf32>
    %309 = tpu.matmul %307, %308, %cst_143 {dimension_numbers = #tpu.dot_dimension_numbers<[1], [0], [0], [1], [0, 0, 1, 1], [], []>} : vector<32x32xbf16>, vector<32x44xbf16>, vector<32x44xf32> -> vector<32x44xf32>
    %c13_144 = arith.constant 13 : index
    %c0_145 = arith.constant 0 : index
    %c0_146 = arith.constant 0 : index
    %310 = vector.load %arg3[%c13_144, %c0_145, %c0_146] : memref<19x32x32xbf16, #tpu.memory_space<vmem>>, vector<1x32x32xbf16>
    %311 = vector.shape_cast %310 : vector<1x32x32xbf16> to vector<32x32xbf16>
    %312 = vector.extract_strided_slice %305 {offsets = [0, 8], sizes = [32, 44], strides = [1, 1]} : vector<32x68xbf16> to vector<32x44xbf16>
    %cst_147 = arith.constant dense<0.000000e+00> : vector<32x44xf32>
    %313 = tpu.matmul %311, %312, %cst_147 {dimension_numbers = #tpu.dot_dimension_numbers<[1], [0], [0], [1], [0, 0, 1, 1], [], []>} : vector<32x32xbf16>, vector<32x44xbf16>, vector<32x44xf32> -> vector<32x44xf32>
    %314 = arith.addf %309, %313 : vector<32x44xf32>
    %c14_148 = arith.constant 14 : index
    %c0_149 = arith.constant 0 : index
    %c0_150 = arith.constant 0 : index
    %315 = vector.load %arg3[%c14_148, %c0_149, %c0_150] : memref<19x32x32xbf16, #tpu.memory_space<vmem>>, vector<1x32x32xbf16>
    %316 = vector.shape_cast %315 : vector<1x32x32xbf16> to vector<32x32xbf16>
    %317 = vector.extract_strided_slice %305 {offsets = [0, 16], sizes = [32, 44], strides = [1, 1]} : vector<32x68xbf16> to vector<32x44xbf16>
    %cst_151 = arith.constant dense<0.000000e+00> : vector<32x44xf32>
    %318 = tpu.matmul %316, %317, %cst_151 {dimension_numbers = #tpu.dot_dimension_numbers<[1], [0], [0], [1], [0, 0, 1, 1], [], []>} : vector<32x32xbf16>, vector<32x44xbf16>, vector<32x44xf32> -> vector<32x44xf32>
    %319 = arith.addf %314, %318 : vector<32x44xf32>
    %c15_152 = arith.constant 15 : index
    %c0_153 = arith.constant 0 : index
    %c0_154 = arith.constant 0 : index
    %320 = vector.load %arg3[%c15_152, %c0_153, %c0_154] : memref<19x32x32xbf16, #tpu.memory_space<vmem>>, vector<1x32x32xbf16>
    %321 = vector.shape_cast %320 : vector<1x32x32xbf16> to vector<32x32xbf16>
    %322 = vector.extract_strided_slice %305 {offsets = [0, 24], sizes = [32, 44], strides = [1, 1]} : vector<32x68xbf16> to vector<32x44xbf16>
    %cst_155 = arith.constant dense<0.000000e+00> : vector<32x44xf32>
    %323 = tpu.matmul %321, %322, %cst_155 {dimension_numbers = #tpu.dot_dimension_numbers<[1], [0], [0], [1], [0, 0, 1, 1], [], []>} : vector<32x32xbf16>, vector<32x44xbf16>, vector<32x44xf32> -> vector<32x44xf32>
    %324 = arith.addf %319, %323 : vector<32x44xf32>
    %325 = vector.extract_strided_slice %1 {offsets = [0, 3], sizes = [32, 1], strides = [1, 1]} : vector<32x8xf32> to vector<32x1xf32>
    %326 = vector.broadcast %325 : vector<32x1xf32> to vector<32x44xf32>
    %327 = arith.addf %324, %326 : vector<32x44xf32>
    %cst_156 = arith.constant 0.000000e+00 : f32
    %328 = vector.broadcast %cst_156 : f32 to vector<32x44xf32>
    %329 = arith.cmpf ogt, %327, %328 : vector<32x44xf32>
    %cst_157 = arith.constant 2.000000e-01 : f32
    %330 = vector.broadcast %cst_157 : f32 to vector<32x44xf32>
    %331 = arith.mulf %330, %327 : vector<32x44xf32>
    %332 = arith.select %329, %327, %331 : vector<32x44xi1>, vector<32x44xf32>
    %333 = vector.extract_strided_slice %332 {offsets = [0, 0], sizes = [32, 36], strides = [1, 1]} : vector<32x44xf32> to vector<32x36xf32>
    %334 = vector.extract_strided_slice %332 {offsets = [0, 8], sizes = [32, 36], strides = [1, 1]} : vector<32x44xf32> to vector<32x36xf32>
    %335 = arith.maximumf %333, %334 : vector<32x36xf32>
    %336 = arith.truncf %335 : vector<32x36xf32> to vector<32x36xbf16>
    %c16_158 = arith.constant 16 : index
    %c0_159 = arith.constant 0 : index
    %c0_160 = arith.constant 0 : index
    %337 = vector.load %arg3[%c16_158, %c0_159, %c0_160] : memref<19x32x32xbf16, #tpu.memory_space<vmem>>, vector<1x32x32xbf16>
    %338 = vector.shape_cast %337 : vector<1x32x32xbf16> to vector<32x32xbf16>
    %339 = vector.extract_strided_slice %338 {offsets = [0, 0], sizes = [4, 32], strides = [1, 1]} : vector<32x32xbf16> to vector<4x32xbf16>
    %340 = vector.extract_strided_slice %336 {offsets = [0, 0], sizes = [32, 4], strides = [1, 1]} : vector<32x36xbf16> to vector<32x4xbf16>
    %cst_161 = arith.constant dense<0.000000e+00> : vector<4x4xf32>
    %341 = tpu.matmul %339, %340, %cst_161 {dimension_numbers = #tpu.dot_dimension_numbers<[1], [0], [0], [1], [0, 0, 1, 1], [], []>} : vector<4x32xbf16>, vector<32x4xbf16>, vector<4x4xf32> -> vector<4x4xf32>
    %c17_162 = arith.constant 17 : index
    %c0_163 = arith.constant 0 : index
    %c0_164 = arith.constant 0 : index
    %342 = vector.load %arg3[%c17_162, %c0_163, %c0_164] : memref<19x32x32xbf16, #tpu.memory_space<vmem>>, vector<1x32x32xbf16>
    %343 = vector.shape_cast %342 : vector<1x32x32xbf16> to vector<32x32xbf16>
    %344 = vector.extract_strided_slice %343 {offsets = [0, 0], sizes = [4, 32], strides = [1, 1]} : vector<32x32xbf16> to vector<4x32xbf16>
    %345 = vector.extract_strided_slice %336 {offsets = [0, 16], sizes = [32, 4], strides = [1, 1]} : vector<32x36xbf16> to vector<32x4xbf16>
    %cst_165 = arith.constant dense<0.000000e+00> : vector<4x4xf32>
    %346 = tpu.matmul %344, %345, %cst_165 {dimension_numbers = #tpu.dot_dimension_numbers<[1], [0], [0], [1], [0, 0, 1, 1], [], []>} : vector<4x32xbf16>, vector<32x4xbf16>, vector<4x4xf32> -> vector<4x4xf32>
    %347 = arith.addf %341, %346 : vector<4x4xf32>
    %c18_166 = arith.constant 18 : index
    %c0_167 = arith.constant 0 : index
    %c0_168 = arith.constant 0 : index
    %348 = vector.load %arg3[%c18_166, %c0_167, %c0_168] : memref<19x32x32xbf16, #tpu.memory_space<vmem>>, vector<1x32x32xbf16>
    %349 = vector.shape_cast %348 : vector<1x32x32xbf16> to vector<32x32xbf16>
    %350 = vector.extract_strided_slice %349 {offsets = [0, 0], sizes = [4, 32], strides = [1, 1]} : vector<32x32xbf16> to vector<4x32xbf16>
    %351 = vector.extract_strided_slice %336 {offsets = [0, 32], sizes = [32, 4], strides = [1, 1]} : vector<32x36xbf16> to vector<32x4xbf16>
    %cst_169 = arith.constant dense<0.000000e+00> : vector<4x4xf32>
    %352 = tpu.matmul %350, %351, %cst_169 {dimension_numbers = #tpu.dot_dimension_numbers<[1], [0], [0], [1], [0, 0, 1, 1], [], []>} : vector<4x32xbf16>, vector<32x4xbf16>, vector<4x4xf32> -> vector<4x4xf32>
    %353 = arith.addf %347, %352 : vector<4x4xf32>
    %354 = vector.extract_strided_slice %1 {offsets = [0, 4], sizes = [4, 1], strides = [1, 1]} : vector<32x8xf32> to vector<4x1xf32>
    %355 = vector.broadcast %354 : vector<4x1xf32> to vector<4x4xf32>
    %356 = arith.addf %353, %355 : vector<4x4xf32>
    %cst_170 = arith.constant 0.000000e+00 : f32
    %357 = vector.broadcast %cst_170 : f32 to vector<4x4xf32>
    %358 = arith.cmpf ogt, %356, %357 : vector<4x4xf32>
    %359 = math.exp %356 : vector<4x4xf32>
    %cst_171 = arith.constant 1.000000e+00 : f32
    %360 = vector.broadcast %cst_171 : f32 to vector<4x4xf32>
    %361 = arith.subf %359, %360 : vector<4x4xf32>
    %362 = arith.select %358, %356, %361 : vector<4x4xi1>, vector<4x4xf32>
    %363 = vector.extract_strided_slice %2 {offsets = [1, 0], sizes = [1, 8], strides = [1, 1]} : vector<2x8xf32> to vector<1x8xf32>
    %364 = vector.extract_strided_slice %0 {offsets = [16, 0], sizes = [1, 32], strides = [1, 1]} : vector<64x32xf32> to vector<1x32xf32>
    %365 = vector.extract_strided_slice %0 {offsets = [8, 0], sizes = [8, 32], strides = [1, 1]} : vector<64x32xf32> to vector<8x32xf32>
    %cst_172 = arith.constant dense<0.000000e+00> : vector<1x32xf32>
    %366 = tpu.matmul %363, %365, %cst_172 {dimension_numbers = #tpu.dot_dimension_numbers<[1], [0], [0], [1], [0, 0, 1, 1], [], []>} : vector<1x8xf32>, vector<8x32xf32>, vector<1x32xf32> -> vector<1x32xf32>
    %367 = arith.addf %364, %366 : vector<1x32xf32>
    %368 = vector.extract_strided_slice %362 {offsets = [0, 0], sizes = [4, 1], strides = [1, 1]} : vector<4x4xf32> to vector<4x1xf32>
    %369 = vector.extract_strided_slice %0 {offsets = [0, 0], sizes = [4, 32], strides = [1, 1]} : vector<64x32xf32> to vector<4x32xf32>
    %370 = vector.broadcast %368 : vector<4x1xf32> to vector<4x32xf32>
    %371 = arith.mulf %370, %369 : vector<4x32xf32>
    %cst_173 = arith.constant dense<0.000000e+00> : vector<32xf32>
    %372 = vector.multi_reduction <add>, %371, %cst_173 [0] : vector<4x32xf32> to vector<32xf32>
    %373 = vector.shape_cast %372 : vector<32xf32> to vector<1x32xf32>
    %374 = arith.addf %367, %373 : vector<1x32xf32>
    %375 = vector.extract_strided_slice %0 {offsets = [24, 0], sizes = [32, 32], strides = [1, 1]} : vector<64x32xf32> to vector<32x32xf32>
    %cst_174 = arith.constant dense<0.000000e+00> : vector<1x32xf32>
    %376 = tpu.matmul %374, %375, %cst_174 {dimension_numbers = #tpu.dot_dimension_numbers<[1], [0], [0], [1], [0, 0, 1, 1], [], []>} : vector<1x32xf32>, vector<32x32xf32>, vector<1x32xf32> -> vector<1x32xf32>
    %377 = vector.extract_strided_slice %0 {offsets = [56, 0], sizes = [1, 32], strides = [1, 1]} : vector<64x32xf32> to vector<1x32xf32>
    %378 = arith.addf %376, %377 : vector<1x32xf32>
    %379 = vector.extract_strided_slice %378 {offsets = [0, 0], sizes = [1, 2], strides = [1, 1]} : vector<1x32xf32> to vector<1x2xf32>
    %cst_175 = arith.constant dense<0xFF800000> : vector<1xf32>
    %380 = vector.multi_reduction <maximumf>, %379, %cst_175 [1] : vector<1x2xf32> to vector<1xf32>
    %381 = vector.shape_cast %380 : vector<1xf32> to vector<1x1xf32>
    %382 = vector.broadcast %381 : vector<1x1xf32> to vector<1x2xf32>
    %383 = arith.subf %379, %382 : vector<1x2xf32>
    %384 = math.exp %383 : vector<1x2xf32>
    %cst_176 = arith.constant dense<0.000000e+00> : vector<1xf32>
    %385 = vector.multi_reduction <add>, %384, %cst_176 [1] : vector<1x2xf32> to vector<1xf32>
    %386 = vector.shape_cast %385 : vector<1xf32> to vector<1x1xf32>
    %387 = math.log %386 : vector<1x1xf32>
    %388 = vector.broadcast %387 : vector<1x1xf32> to vector<1x2xf32>
    %389 = arith.subf %383, %388 : vector<1x2xf32>
    %c1_177 = arith.constant 1 : index
    %c0_178 = arith.constant 0 : index
    %c0_179 = arith.constant 0 : index
    %390 = vector.load %arg6[%c1_177, %c0_178, %c0_179] : memref<2x1x2xf32, #tpu.memory_space<vmem>>, vector<1x1x2xf32>
    %391 = vector.shape_cast %390 : vector<1x1x2xf32> to vector<1x2xf32>
    %392 = vector.shape_cast %389 : vector<1x2xf32> to vector<1x1x2xf32>
    tpu.vector_store %arg6[%c1_177, %c0_178, %c0_179], %392 {strides = array<i32>} : memref<2x1x2xf32, #tpu.memory_space<vmem>>, vector<1x1x2xf32>,
    return
  }
  func.func @transform_0(%arg0: i32) -> (i32, i32, i32) {
    %c0_i32 = arith.constant 0 : i32
    %c0_i32_0 = arith.constant 0 : i32
    %c0_i32_1 = arith.constant 0 : i32
    %c0_i32_2 = arith.constant 0 : i32
    return %c0_i32, %c0_i32_0, %c0_i32_1 : i32, i32, i32
  }
  func.func @transform_1(%arg0: i32) -> (i32, i32) {
    %c0_i32 = arith.constant 0 : i32
    %c0_i32_0 = arith.constant 0 : i32
    %c0_i32_1 = arith.constant 0 : i32
    return %c0_i32, %c0_i32_0 : i32, i32
  }
  func.func @transform_2(%arg0: i32) -> (i32, i32, i32) {
    %c0_i32 = arith.constant 0 : i32
    %c0_i32_0 = arith.constant 0 : i32
    %c0_i32_1 = arith.constant 0 : i32
    %c0_i32_2 = arith.constant 0 : i32
    return %c0_i32, %c0_i32_0, %c0_i32_1 : i32, i32, i32
  }
  func.func @transform_3(%arg0: i32) -> (i32, i32) {
    %c0_i32 = arith.constant 0 : i32
    %c0_i32_0 = arith.constant 0 : i32
    %c0_i32_1 = arith.constant 0 : i32
    return %c0_i32, %c0_i32_0 : i32, i32
  }
  func.func @transform_4(%arg0: i32) -> (i32, i32) {
    %c0_i32 = arith.constant 0 : i32
    %c0_i32_0 = arith.constant 0 : i32
    %c0_i32_1 = arith.constant 0 : i32
    return %c0_i32, %c0_i32_0 : i32, i32
  }
  func.func @transform_5(%arg0: i32) -> (i32, i32, i32) {
    %c0_i32 = arith.constant 0 : i32
    %c0_i32_0 = arith.constant 0 : i32
    %c0_i32_1 = arith.constant 0 : i32
    %c0_i32_2 = arith.constant 0 : i32
    return %c0_i32, %c0_i32_0, %c0_i32_1 : i32, i32, i32
  }
}

</mosaic_0001>

<llo_original>
// kernel: tpu_custom_call.1
$region0: #{tpu_custom_call.1}
  #allocation0 [shape = 'u32[]', space=smem, size = 0x4, offset = 0x4, fixed_abs, tag = 'smem constant byte address 0x4 - core index']
  #allocation1 [shape = 'u32[144,128]{1,0:T(1,128)}', space=vmem, size = 0x12000, scoped, tag = 'internal scratch']
  %s0 = inlined_call_operand.vmem [shape: f32[2,4,96], index: 0, kind: input, shape index: {}]
  %s1 = inlined_call_operand.vmem [shape: f32[2,8], index: 1, kind: input, shape index: {}]
  %s2 = inlined_call_operand.hbm [shape: bf16[19,32,32], index: 2, kind: input, shape index: {}]
  %s3 = inlined_call_operand.vmem [shape: f32[32,8], index: 3, kind: input, shape index: {}]
  %s4 = inlined_call_operand.vmem [shape: f32[64,32], index: 4, kind: input, shape index: {}]
  %s5 = inlined_call_operand.hbm [shape: f32[2,1,2], index: 5, kind: output, shape index: {}]
  %s6 = sld [smem:[#allocation0]]
  $region34: #{tpu_custom_call.1} parent=0
    _
  %s8 = ssub.s32 1, %s6
  %s9 = scalar_select 0, %s8, %s6
  $region1: #{tpu_custom_call.1} parent=0
    #allocation2 [shape = 'u8[155648]{0}', space=vmem, size = 0x26000, scoped, tag = 'input window, operand 2, single buffered']
    #allocation3 [shape = 's32[1]{0}', space=sflag, size = 0x4, scoped, tag = 'scoped memory for tpu_custom_call.1']
    #allocation4 [shape = 's32[1]{0}', space=sflag, size = 0x4, scoped, tag = 'scoped memory for tpu_custom_call.1']
    #allocation5 [shape = 'u8[1024]{0}', space=vmem, size = 0x400, scoped, tag = 'output window, operand 0, single buffered']
    %10 = vsyncpa [#allocation3], 0
    %11 = vsyncpa [#allocation4], 0
    // Predicated region
    $region2: #{tpu_custom_call.1} parent=1 // pred_check
      _
    $region3: #{tpu_custom_call.1} parent=1 // pred_check_branch
      %13 = sbr.rel (0) target = $region5
    $region4: #{tpu_custom_call.1} parent=1 // pred_region
      _
    $region5: #{tpu_custom_call.1} parent=1 // pred_fallthru
      _
    // Predicated region
    $region6: #{tpu_custom_call.1} parent=1 // pred_check
      _
    $region7: #{tpu_custom_call.1} parent=1 // pred_check_branch
      %15 = sbr.rel (0) target = $region9
    $region8: #{tpu_custom_call.1} parent=1 // pred_region
      _
    $region9: #{tpu_custom_call.1} parent=1 // pred_fallthru
      _
    // Predicated region
    $region10: #{tpu_custom_call.1} parent=1 // pred_check
      _
    $region11: #{tpu_custom_call.1} parent=1 // pred_check_branch
      %17 = sbr.rel (0) target = $region13
    $region12: #{tpu_custom_call.1} parent=1 // pred_region
      %s19 = ssub.s32 4864, 4864
      %20 = vsyncadd [#allocation3], %s19
      %s21 = sshll.u32 [#allocation2], 4
      %s22 = int_to_ptr.vmem [resolvable:$true] %s21
      %27 = dma.hbm_to_vmem [thread:$0]  %s2, 4864, %s22, [#allocation3], 64, 64, 4
    $region13: #{tpu_custom_call.1} parent=1 // pred_fallthru
      _
    // Predicated region
    $region14: #{tpu_custom_call.1} parent=1 // pred_check
      _
    $region15: #{tpu_custom_call.1} parent=1 // pred_check_branch
      %29 = sbr.rel (0) target = $region17
    $region16: #{tpu_custom_call.1} parent=1 // pred_region
      _
    $region17: #{tpu_custom_call.1} parent=1 // pred_fallthru
      _
    // Predicated region
    $region18: #{tpu_custom_call.1} parent=1 // pred_check
      _
    $region19: #{tpu_custom_call.1} parent=1 // pred_check_branch
      %31 = sbr.rel (0) target = $region21
    $region20: #{tpu_custom_call.1} parent=1 // pred_region
      _
    $region21: #{tpu_custom_call.1} parent=1 // pred_fallthru
      _
    // Predicated region
    $region22: #{tpu_custom_call.1} parent=1 // pred_check
      _
    $region23: #{tpu_custom_call.1} parent=1 // pred_check_branch
      %33 = sbr.rel (0) target = $region25
    $region24: #{tpu_custom_call.1} parent=1 // pred_region
      %34 = dma.done [#allocation3], 4864
    $region25: #{tpu_custom_call.1} parent=1 // pred_fallthru
      _
    %v36 = vld [vmem:[%s4] sm:$0xff]
    %v37 = vld [vmem:[%s4 + $0x8] sm:$0xff]
    %v38 = vld [vmem:[%s4 + $0x10] sm:$0xff]
    %v39 = vld [vmem:[%s4 + $0x18] sm:$0xff]
    %v40 = vld [vmem:[%s4 + $0x20] sm:$0xff]
    %v41 = vld [vmem:[%s4 + $0x28] sm:$0xff]
    %v42 = vld [vmem:[%s4 + $0x30] sm:$0xff]
    %v43 = vld [vmem:[%s4 + $0x38] sm:$0xff]
    %v44 = vld [vmem:[%s3] sm:$0xff]
    %v45 = vld [vmem:[%s3 + $0x8] sm:$0xff]
    %v46 = vld [vmem:[%s3 + $0x10] sm:$0xff]
    %v47 = vld [vmem:[%s3 + $0x18] sm:$0xff]
    %v48 = vld [vmem:[%s1] sm:$0x3]
    %v49 = vld [vmem:[%s0] sm:$0xf]
    %v50 = vpack.c.bf16 %v49, %v49
    %v51 = vld [vmem:[#allocation2] sm:$0xf]
    %v52 = vld [vmem:[#allocation2 + $0x4] sm:$0xf]
    %s53 = scalar_lea.vmem [#allocation2], 16
    %v54 = vld [vmem:[%s53] sm:$0xf]
    %v55 = vld [vmem:[%s53 + $0x4] sm:$0xf]
    %v58 = vunpack.c.l.b16 %v54
    %v59 = vunpack.c.l.b16 %v55
    %v60 = vpack.c.b16 %v59, %v58
    %62 = vrot.lane.b32.xlu0 %v50, 127
    %v63 = vpop.permute.xlu0 %62
    %vm64 = vcmask 31744
    %v66 = vsel %vm64, %v60, 0
    %vm68 = vcmask 1041408
    %v70 = vsel %vm68, %v63, 0
    %72 = vmatprep.subr.bf16.mxu0 0
    %73 = vmatpush1.bf16.msra.mxu0 %v70
    %74 = vmatprep.subr.bf16.mxu0 0
    %75 = vmatpush1.bf16.msra.mxu0 0
    %76 = vmatprep.subr.bf16.mxu0 0
    %77 = vmatpush1.bf16.msra.mxu0 0
    %78 = vmatprep.subr.bf16.mxu0 0
    %79 = vmatpush1.bf16.msra.mxu0 0
    %80 = vmatprep.subr.bf16.mxu0 0
    %81 = vmatpush1.bf16.msra.mxu0 0
    %82 = vmatprep.subr.bf16.mxu0 0
    %83 = vmatpush1.bf16.msra.mxu0 0
    %84 = vmatprep.subr.bf16.mxu0 0
    %85 = vmatpush1.bf16.msra.mxu0 0
    %86 = vmatprep.subr.bf16.mxu0 0
    %87 = vmatpush1.bf16.msra.mxu0 0
    %88 = vmatprep.subr.bf16.mxu0 0
    %89 = vmatpush1.bf16.msra.mxu0 0
    %90 = vmatprep.subr.bf16.mxu0 0
    %91 = vmatpush1.bf16.msra.mxu0 0
    %92 = vmatprep.subr.bf16.mxu0 0
    %93 = vmatpush1.bf16.msra.mxu0 0
    %94 = vmatprep.subr.bf16.mxu0 0
    %95 = vmatpush1.bf16.msra.mxu0 0
    %96 = vmatprep.subr.bf16.mxu0 0
    %97 = vmatpush1.bf16.msra.mxu0 0
    %98 = vmatprep.subr.bf16.mxu0 0
    %99 = vmatpush1.bf16.msra.mxu0 0
    %100 = vmatprep.subr.bf16.mxu0 0
    %101 = vmatpush1.bf16.msra.mxu0 0
    %102 = vmatprep.subr.bf16.mxu0 0
    %103 = vmatpush1.bf16.msra.mxu0 0
    %104 = vmatprep.mubr.bf16.mxu0 0
    %105 = vmatmul.mubr.bf16.gmra.mrb[0].mxu0 %v66
    %v106 = vpop.f32.mrb[0].mxu0
    %v107 = vadd.f32 0.0, %v106
    %v108 = vpop.f32.mrb[0].mxu0
    %v109 = vpop.f32.mrb[0].mxu0
    %v110 = vadd.f32 0.0, %v109
    %v111 = vpop.f32.mrb[0].mxu0
    %112 = vdwg.mxu0
    %v115 = vunpack.c.l.b16 %v51
    %v116 = vunpack.c.l.b16 %v52
    %v117 = vpack.c.b16 %v116, %v115
    %v119 = vsel %vm64, %v117, 0
    %v122 = vsel %vm68, %v50, 0
    %124 = vmatprep.subr.bf16.mxu0 0
    %125 = vmatpush1.bf16.msra.mxu0 %v122
    %126 = vmatprep.subr.bf16.mxu0 0
    %127 = vmatpush1.bf16.msra.mxu0 0
    %128 = vmatprep.subr.bf16.mxu0 0
    %129 = vmatpush1.bf16.msra.mxu0 0
    %130 = vmatprep.subr.bf16.mxu0 0
    %131 = vmatpush1.bf16.msra.mxu0 0
    %132 = vmatprep.subr.bf16.mxu0 0
    %133 = vmatpush1.bf16.msra.mxu0 0
    %134 = vmatprep.subr.bf16.mxu0 0
    %135 = vmatpush1.bf16.msra.mxu0 0
    %136 = vmatprep.subr.bf16.mxu0 0
    %137 = vmatpush1.bf16.msra.mxu0 0
    %138 = vmatprep.subr.bf16.mxu0 0
    %139 = vmatpush1.bf16.msra.mxu0 0
    %140 = vmatprep.subr.bf16.mxu0 0
    %141 = vmatpush1.bf16.msra.mxu0 0
    %142 = vmatprep.subr.bf16.mxu0 0
    %143 = vmatpush1.bf16.msra.mxu0 0
    %144 = vmatprep.subr.bf16.mxu0 0
    %145 = vmatpush1.bf16.msra.mxu0 0
    %146 = vmatprep.subr.bf16.mxu0 0
    %147 = vmatpush1.bf16.msra.mxu0 0
    %148 = vmatprep.subr.bf16.mxu0 0
    %149 = vmatpush1.bf16.msra.mxu0 0
    %150 = vmatprep.subr.bf16.mxu0 0
    %151 = vmatpush1.bf16.msra.mxu0 0
    %152 = vmatprep.subr.bf16.mxu0 0
    %153 = vmatpush1.bf16.msra.mxu0 0
    %154 = vmatprep.subr.bf16.mxu0 0
    %155 = vmatpush1.bf16.msra.mxu0 0
    %156 = vmatprep.mubr.bf16.mxu0 0
    %157 = vmatmul.mubr.bf16.gmra.mrb[0].mxu0 %v119
    %v158 = vpop.f32.mrb[0].mxu0
    %v159 = vadd.f32 %v107, %v158
    %v160 = vpop.f32.mrb[0].mxu0
    %v161 = vpop.f32.mrb[0].mxu0
    %v162 = vadd.f32 %v110, %v161
    %v163 = vpop.f32.mrb[0].mxu0
    %164 = vdwg.mxu0
    %s165 = scalar_lea.vmem [#allocation2], 32
    %v166 = vld [vmem:[%s165] sm:$0xf]
    %v167 = vld [vmem:[%s165 + $0x4] sm:$0xf]
    %v170 = vunpack.c.l.b16 %v166
    %v171 = vunpack.c.l.b16 %v167
    %v172 = vpack.c.b16 %v171, %v170
    %173 = vrot.lane.b32.xlu0 %v50, 126
    %v174 = vpop.permute.xlu0 %173
    %v176 = vsel %vm64, %v172, 0
    %v179 = vsel %vm68, %v174, 0
    %181 = vmatprep.subr.bf16.mxu0 0
    %182 = vmatpush1.bf16.msra.mxu0 %v179
    %183 = vmatprep.subr.bf16.mxu0 0
    %184 = vmatpush1.bf16.msra.mxu0 0
    %185 = vmatprep.subr.bf16.mxu0 0
    %186 = vmatpush1.bf16.msra.mxu0 0
    %187 = vmatprep.subr.bf16.mxu0 0
    %188 = vmatpush1.bf16.msra.mxu0 0
    %189 = vmatprep.subr.bf16.mxu0 0
    %190 = vmatpush1.bf16.msra.mxu0 0
    %191 = vmatprep.subr.bf16.mxu0 0
    %192 = vmatpush1.bf16.msra.mxu0 0
    %193 = vmatprep.subr.bf16.mxu0 0
    %194 = vmatpush1.bf16.msra.mxu0 0
    %195 = vmatprep.subr.bf16.mxu0 0
    %196 = vmatpush1.bf16.msra.mxu0 0
    %197 = vmatprep.subr.bf16.mxu0 0
    %198 = vmatpush1.bf16.msra.mxu0 0
    %199 = vmatprep.subr.bf16.mxu0 0
    %200 = vmatpush1.bf16.msra.mxu0 0
    %201 = vmatprep.subr.bf16.mxu0 0
    %202 = vmatpush1.bf16.msra.mxu0 0
    %203 = vmatprep.subr.bf16.mxu0 0
    %204 = vmatpush1.bf16.msra.mxu0 0
    %205 = vmatprep.subr.bf16.mxu0 0
    %206 = vmatpush1.bf16.msra.mxu0 0
    %207 = vmatprep.subr.bf16.mxu0 0
    %208 = vmatpush1.bf16.msra.mxu0 0
    %209 = vmatprep.subr.bf16.mxu0 0
    %210 = vmatpush1.bf16.msra.mxu0 0
    %211 = vmatprep.subr.bf16.mxu0 0
    %212 = vmatpush1.bf16.msra.mxu0 0
    %213 = vmatprep.mubr.bf16.mxu0 0
    %214 = vmatmul.mubr.bf16.gmra.mrb[0].mxu0 %v176
    %v215 = vpop.f32.mrb[0].mxu0
    %v216 = vadd.f32 0.0, %v215
    %v217 = vpop.f32.mrb[0].mxu0
    %v218 = vpop.f32.mrb[0].mxu0
    %v219 = vadd.f32 0.0, %v218
    %v220 = vpop.f32.mrb[0].mxu0
    %221 = vdwg.mxu0
    %v222 = vadd.f32 %v159, %v216
    %v223 = vadd.f32 %v162, %v219
    %s224 = scalar_lea.vmem [#allocation2], 48
    %v225 = vld [vmem:[%s224] sm:$0xf]
    %v226 = vld [vmem:[%s224 + $0x4] sm:$0xf]
    %v229 = vunpack.c.l.b16 %v225
    %v230 = vunpack.c.l.b16 %v226
    %v231 = vpack.c.b16 %v230, %v229
    %232 = vrot.lane.b32.xlu0 %v50, 125
    %v233 = vpop.permute.xlu0 %232
    %v235 = vsel %vm64, %v231, 0
    %v238 = vsel %vm68, %v233, 0
    %240 = vmatprep.subr.bf16.mxu0 0
    %241 = vmatpush1.bf16.msra.mxu0 %v238
    %242 = vmatprep.subr.bf16.mxu0 0
    %243 = vmatpush1.bf16.msra.mxu0 0
    %244 = vmatprep.subr.bf16.mxu0 0
    %245 = vmatpush1.bf16.msra.mxu0 0
    %246 = vmatprep.subr.bf16.mxu0 0
    %247 = vmatpush1.bf16.msra.mxu0 0
    %248 = vmatprep.subr.bf16.mxu0 0
    %249 = vmatpush1.bf16.msra.mxu0 0
    %250 = vmatprep.subr.bf16.mxu0 0
    %251 = vmatpush1.bf16.msra.mxu0 0
    %252 = vmatprep.subr.bf16.mxu0 0
    %253 = vmatpush1.bf16.msra.mxu0 0
    %254 = vmatprep.subr.bf16.mxu0 0
    %255 = vmatpush1.bf16.msra.mxu0 0
    %256 = vmatprep.subr.bf16.mxu0 0
    %257 = vmatpush1.bf16.msra.mxu0 0
    %258 = vmatprep.subr.bf16.mxu0 0
    %259 = vmatpush1.bf16.msra.mxu0 0
    %260 = vmatprep.subr.bf16.mxu0 0
    %261 = vmatpush1.bf16.msra.mxu0 0
    %262 = vmatprep.subr.bf16.mxu0 0
    %263 = vmatpush1.bf16.msra.mxu0 0
    %264 = vmatprep.subr.bf16.mxu0 0
    %265 = vmatpush1.bf16.msra.mxu0 0
    %266 = vmatprep.subr.bf16.mxu0 0
    %267 = vmatpush1.bf16.msra.mxu0 0
    %268 = vmatprep.subr.bf16.mxu0 0
    %269 = vmatpush1.bf16.msra.mxu0 0
    %270 = vmatprep.subr.bf16.mxu0 0
    %271 = vmatpush1.bf16.msra.mxu0 0
    %272 = vmatprep.mubr.bf16.mxu0 0
    %273 = vmatmul.mubr.bf16.gmra.mrb[0].mxu0 %v235
    %v274 = vpop.f32.mrb[0].mxu0
    %v275 = vadd.f32 0.0, %v274
    %v276 = vpop.f32.mrb[0].mxu0
    %v277 = vpop.f32.mrb[0].mxu0
    %v278 = vadd.f32 0.0, %v277
    %v279 = vpop.f32.mrb[0].mxu0
    %280 = vdwg.mxu0
    %v281 = vadd.f32 %v222, %v275
    %v282 = vadd.f32 %v223, %v278
    %284 = vset.pattern.permute.xlu0 0
    %285 = vperm.xlu0 %284, %v44
    %v286 = vpop.permute.xlu0 %285
    %289 = vset.pattern.permute.xlu0 0
    %290 = vperm.xlu0 %289, %v45
    %v291 = vpop.permute.xlu0 %290
    %v293 = vadd.f32 %v281, %v286
    %v294 = vadd.f32 %v282, %v291
    %vm295 = vcmp.gt.f32.partialorder %v293, 0.0
    %vm296 = vcmp.gt.f32.partialorder %v294, 0.0
    %v297 = vmul.f32 %v293, 0.2
    %v298 = vmul.f32 %v294, 0.2
    %v299 = vsel %vm295, %v293, %v297
    %v300 = vsel %vm296, %v294, %v298
    %303 = vrot.lane.b32.xlu0 %v299, 127
    %v304 = vpop.permute.xlu0 %303
    %305 = vrot.lane.b32.xlu0 %v300, 127
    %v306 = vpop.permute.xlu0 %305
    %v309 = vmax.f32 %v299, %v304
    %v310 = vmax.f32 %v300, %v306
    %v311 = vpack.c.bf16 %v310, %v309
    %s312 = scalar_lea.vmem [#allocation2], 64
    %v313 = vld [vmem:[%s312] sm:$0xf]
    %v314 = vld [vmem:[%s312 + $0x4] sm:$0xf]
    %s315 = scalar_lea.vmem [#allocation2], 80
    %v316 = vld [vmem:[%s315] sm:$0xf]
    %v317 = vld [vmem:[%s315 + $0x4] sm:$0xf]
    %v320 = vunpack.c.l.b16 %v316
    %v321 = vunpack.c.l.b16 %v317
    %v322 = vpack.c.b16 %v321, %v320
    %324 = vrot.lane.b32.xlu0 %v311, 126
    %v325 = vpop.permute.xlu0 %324
    %vm327 = vcmask 130048
    %v329 = vsel %vm327, %v322, 0
    %331 = vmatprep.subr.bf16.mxu0 0
    %332 = vmatpush1.bf16.msra.mxu0 %v325
    %333 = vmatprep.subr.bf16.mxu0 0
    %334 = vmatpush1.bf16.msra.mxu0 0
    %335 = vmatprep.subr.bf16.mxu0 0
    %336 = vmatpush1.bf16.msra.mxu0 0
    %337 = vmatprep.subr.bf16.mxu0 0
    %338 = vmatpush1.bf16.msra.mxu0 0
    %339 = vmatprep.subr.bf16.mxu0 0
    %340 = vmatpush1.bf16.msra.mxu0 0
    %341 = vmatprep.subr.bf16.mxu0 0
    %342 = vmatpush1.bf16.msra.mxu0 0
    %343 = vmatprep.subr.bf16.mxu0 0
    %344 = vmatpush1.bf16.msra.mxu0 0
    %345 = vmatprep.subr.bf16.mxu0 0
    %346 = vmatpush1.bf16.msra.mxu0 0
    %347 = vmatprep.subr.bf16.mxu0 0
    %348 = vmatpush1.bf16.msra.mxu0 0
    %349 = vmatprep.subr.bf16.mxu0 0
    %350 = vmatpush1.bf16.msra.mxu0 0
    %351 = vmatprep.subr.bf16.mxu0 0
    %352 = vmatpush1.bf16.msra.mxu0 0
    %353 = vmatprep.subr.bf16.mxu0 0
    %354 = vmatpush1.bf16.msra.mxu0 0
    %355 = vmatprep.subr.bf16.mxu0 0
    %356 = vmatpush1.bf16.msra.mxu0 0
    %357 = vmatprep.subr.bf16.mxu0 0
    %358 = vmatpush1.bf16.msra.mxu0 0
    %359 = vmatprep.subr.bf16.mxu0 0
    %360 = vmatpush1.bf16.msra.mxu0 0
    %361 = vmatprep.subr.bf16.mxu0 0
    %362 = vmatpush1.bf16.msra.mxu0 0
    %363 = vmatprep.mubr.bf16.mxu0 0
    %364 = vmatmul.mubr.bf16.gmra.mrb[0].mxu0 %v329
    %v365 = vpop.f32.mrb[0].mxu0
    %v366 = vadd.f32 0.0, %v365
    %v367 = vpop.f32.mrb[0].mxu0
    %v368 = vpop.f32.mrb[0].mxu0
    %v369 = vadd.f32 0.0, %v368
    %v370 = vpop.f32.mrb[0].mxu0
    %371 = vdwg.mxu0
    %v374 = vunpack.c.l.b16 %v313
    %v375 = vunpack.c.l.b16 %v314
    %v376 = vpack.c.b16 %v375, %v374
    %v378 = vsel %vm327, %v376, 0
    %380 = vmatprep.subr.bf16.mxu0 0
    %381 = vmatpush1.bf16.msra.mxu0 %v311
    %382 = vmatprep.subr.bf16.mxu0 0
    %383 = vmatpush1.bf16.msra.mxu0 0
    %384 = vmatprep.subr.bf16.mxu0 0
    %385 = vmatpush1.bf16.msra.mxu0 0
    %386 = vmatprep.subr.bf16.mxu0 0
    %387 = vmatpush1.bf16.msra.mxu0 0
    %388 = vmatprep.subr.bf16.mxu0 0
    %389 = vmatpush1.bf16.msra.mxu0 0
    %390 = vmatprep.subr.bf16.mxu0 0
    %391 = vmatpush1.bf16.msra.mxu0 0
    %392 = vmatprep.subr.bf16.mxu0 0
    %393 = vmatpush1.bf16.msra.mxu0 0
    %394 = vmatprep.subr.bf16.mxu0 0
    %395 = vmatpush1.bf16.msra.mxu0 0
    %396 = vmatprep.subr.bf16.mxu0 0
    %397 = vmatpush1.bf16.msra.mxu0 0
    %398 = vmatprep.subr.bf16.mxu0 0
    %399 = vmatpush1.bf16.msra.mxu0 0
    %400 = vmatprep.subr.bf16.mxu0 0
    %401 = vmatpush1.bf16.msra.mxu0 0
    %402 = vmatprep.subr.bf16.mxu0 0
    %403 = vmatpush1.bf16.msra.mxu0 0
    %404 = vmatprep.subr.bf16.mxu0 0
    %405 = vmatpush1.bf16.msra.mxu0 0
    %406 = vmatprep.subr.bf16.mxu0 0
    %407 = vmatpush1.bf16.msra.mxu0 0
    %408 = vmatprep.subr.bf16.mxu0 0
    %409 = vmatpush1.bf16.msra.mxu0 0
    %410 = vmatprep.subr.bf16.mxu0 0
    %411 = vmatpush1.bf16.msra.mxu0 0
    %412 = vmatprep.mubr.bf16.mxu0 0
    %413 = vmatmul.mubr.bf16.gmra.mrb[0].mxu0 %v378
    %v414 = vpop.f32.mrb[0].mxu0
    %v415 = vadd.f32 %v366, %v414
    %v416 = vpop.f32.mrb[0].mxu0
    %v417 = vpop.f32.mrb[0].mxu0
    %v418 = vadd.f32 %v369, %v417
    %v419 = vpop.f32.mrb[0].mxu0
    %420 = vdwg.mxu0
    %s421 = scalar_lea.vmem [#allocation2], 96
    %v422 = vld [vmem:[%s421] sm:$0xf]
    %v423 = vld [vmem:[%s421 + $0x4] sm:$0xf]
    %v426 = vunpack.c.l.b16 %v422
    %v427 = vunpack.c.l.b16 %v423
    %v428 = vpack.c.b16 %v427, %v426
    %429 = vrot.lane.b32.xlu0 %v311, 124
    %v430 = vpop.permute.xlu0 %429
    %v433 = vsel %vm327, %v428, 0
    %435 = vmatprep.subr.bf16.mxu0 0
    %436 = vmatpush1.bf16.msra.mxu0 %v430
    %437 = vmatprep.subr.bf16.mxu0 0
    %438 = vmatpush1.bf16.msra.mxu0 0
    %439 = vmatprep.subr.bf16.mxu0 0
    %440 = vmatpush1.bf16.msra.mxu0 0
    %441 = vmatprep.subr.bf16.mxu0 0
    %442 = vmatpush1.bf16.msra.mxu0 0
    %443 = vmatprep.subr.bf16.mxu0 0
    %444 = vmatpush1.bf16.msra.mxu0 0
    %445 = vmatprep.subr.bf16.mxu0 0
    %446 = vmatpush1.bf16.msra.mxu0 0
    %447 = vmatprep.subr.bf16.mxu0 0
    %448 = vmatpush1.bf16.msra.mxu0 0
    %449 = vmatprep.subr.bf16.mxu0 0
    %450 = vmatpush1.bf16.msra.mxu0 0
    %451 = vmatprep.subr.bf16.mxu0 0
    %452 = vmatpush1.bf16.msra.mxu0 0
    %453 = vmatprep.subr.bf16.mxu0 0
    %454 = vmatpush1.bf16.msra.mxu0 0
    %455 = vmatprep.subr.bf16.mxu0 0
    %456 = vmatpush1.bf16.msra.mxu0 0
    %457 = vmatprep.subr.bf16.mxu0 0
    %458 = vmatpush1.bf16.msra.mxu0 0
    %459 = vmatprep.subr.bf16.mxu0 0
    %460 = vmatpush1.bf16.msra.mxu0 0
    %461 = vmatprep.subr.bf16.mxu0 0
    %462 = vmatpush1.bf16.msra.mxu0 0
    %463 = vmatprep.subr.bf16.mxu0 0
    %464 = vmatpush1.bf16.msra.mxu0 0
    %465 = vmatprep.subr.bf16.mxu0 0
    %466 = vmatpush1.bf16.msra.mxu0 0
    %467 = vmatprep.mubr.bf16.mxu0 0
    %468 = vmatmul.mubr.bf16.gmra.mrb[0].mxu0 %v433
    %v469 = vpop.f32.mrb[0].mxu0
    %v470 = vadd.f32 0.0, %v469
    %v471 = vpop.f32.mrb[0].mxu0
    %v472 = vpop.f32.mrb[0].mxu0
    %v473 = vadd.f32 0.0, %v472
    %v474 = vpop.f32.mrb[0].mxu0
    %475 = vdwg.mxu0
    %v476 = vadd.f32 %v415, %v470
    %v477 = vadd.f32 %v418, %v473
    %s478 = scalar_lea.vmem [#allocation2], 112
    %v479 = vld [vmem:[%s478] sm:$0xf]
    %v480 = vld [vmem:[%s478 + $0x4] sm:$0xf]
    %v483 = vunpack.c.l.b16 %v479
    %v484 = vunpack.c.l.b16 %v480
    %v485 = vpack.c.b16 %v484, %v483
    %486 = vrot.lane.b32.xlu0 %v311, 122
    %v487 = vpop.permute.xlu0 %486
    %v490 = vsel %vm327, %v485, 0
    %492 = vmatprep.subr.bf16.mxu0 0
    %493 = vmatpush1.bf16.msra.mxu0 %v487
    %494 = vmatprep.subr.bf16.mxu0 0
    %495 = vmatpush1.bf16.msra.mxu0 0
    %496 = vmatprep.subr.bf16.mxu0 0
    %497 = vmatpush1.bf16.msra.mxu0 0
    %498 = vmatprep.subr.bf16.mxu0 0
    %499 = vmatpush1.bf16.msra.mxu0 0
    %500 = vmatprep.subr.bf16.mxu0 0
    %501 = vmatpush1.bf16.msra.mxu0 0
    %502 = vmatprep.subr.bf16.mxu0 0
    %503 = vmatpush1.bf16.msra.mxu0 0
    %504 = vmatprep.subr.bf16.mxu0 0
    %505 = vmatpush1.bf16.msra.mxu0 0
    %506 = vmatprep.subr.bf16.mxu0 0
    %507 = vmatpush1.bf16.msra.mxu0 0
    %508 = vmatprep.subr.bf16.mxu0 0
    %509 = vmatpush1.bf16.msra.mxu0 0
    %510 = vmatprep.subr.bf16.mxu0 0
    %511 = vmatpush1.bf16.msra.mxu0 0
    %512 = vmatprep.subr.bf16.mxu0 0
    %513 = vmatpush1.bf16.msra.mxu0 0
    %514 = vmatprep.subr.bf16.mxu0 0
    %515 = vmatpush1.bf16.msra.mxu0 0
    %516 = vmatprep.subr.bf16.mxu0 0
    %517 = vmatpush1.bf16.msra.mxu0 0
    %518 = vmatprep.subr.bf16.mxu0 0
    %519 = vmatpush1.bf16.msra.mxu0 0
    %520 = vmatprep.subr.bf16.mxu0 0
    %521 = vmatpush1.bf16.msra.mxu0 0
    %522 = vmatprep.subr.bf16.mxu0 0
    %523 = vmatpush1.bf16.msra.mxu0 0
    %524 = vmatprep.mubr.bf16.mxu0 0
    %525 = vmatmul.mubr.bf16.gmra.mrb[0].mxu0 %v490
    %v526 = vpop.f32.mrb[0].mxu0
    %v527 = vadd.f32 0.0, %v526
    %v528 = vpop.f32.mrb[0].mxu0
    %v529 = vpop.f32.mrb[0].mxu0
    %v530 = vadd.f32 0.0, %v529
    %v531 = vpop.f32.mrb[0].mxu0
    %532 = vdwg.mxu0
    %v533 = vadd.f32 %v476, %v527
    %v534 = vadd.f32 %v477, %v530
    %535 = vset.pattern.permute.xlu0 1
    %536 = vperm.xlu0 %535, %v44
    %v537 = vpop.permute.xlu0 %536
    %539 = vset.pattern.permute.xlu0 1
    %540 = vperm.xlu0 %539, %v45
    %v541 = vpop.permute.xlu0 %540
    %v543 = vadd.f32 %v533, %v537
    %v544 = vadd.f32 %v534, %v541
    %vm545 = vcmp.gt.f32.partialorder %v543, 0.0
    %vm546 = vcmp.gt.f32.partialorder %v544, 0.0
    %v547 = vmul.f32 %v543, 0.2
    %v548 = vmul.f32 %v544, 0.2
    %v549 = vsel %vm545, %v543, %v547
    %v550 = vsel %vm546, %v544, %v548
    %553 = vrot.lane.b32.xlu0 %v549, 126
    %v554 = vpop.permute.xlu0 %553
    %555 = vrot.lane.b32.xlu0 %v550, 126
    %v556 = vpop.permute.xlu0 %555
    %v559 = vmax.f32 %v549, %v554
    %v560 = vmax.f32 %v550, %v556
    %v561 = vpack.c.bf16 %v560, %v559
    %s562 = scalar_lea.vmem [#allocation2], 128
    %v563 = vld [vmem:[%s562] sm:$0xf]
    %v564 = vld [vmem:[%s562 + $0x4] sm:$0xf]
    %v565 = vld [vmem:[%s562 + $0x8] sm:$0xf]
    %v566 = vld [vmem:[%s562 + $0xc] sm:$0xf]
    %s567 = scalar_lea.vmem [#allocation2], 144
    %v568 = vld [vmem:[%s567] sm:$0xf]
    %v569 = vld [vmem:[%s567 + $0x4] sm:$0xf]
    %v570 = vld [vmem:[%s567 + $0x8] sm:$0xf]
    %v571 = vld [vmem:[%s567 + $0xc] sm:$0xf]
    %v576 = vunpack.c.l.b16 %v568
    %v577 = vunpack.c.l.b16 %v569
    %v578 = vunpack.c.l.b16 %v570
    %v579 = vunpack.c.l.b16 %v571
    %v580 = vpack.c.b16 %v577, %v576
    %v581 = vpack.c.b16 %v579, %v578
    %583 = vrot.lane.b32.xlu0 %v561, 124
    %v584 = vpop.permute.xlu0 %583
    %v587 = vsel %vm327, %v580, 0
    %v590 = vsel %vm327, %v581, 0
    %592 = vmatprep.subr.bf16.mxu0 0
    %593 = vmatpush1.bf16.msra.mxu0 %v584
    %594 = vmatprep.subr.bf16.mxu0 0
    %595 = vmatpush1.bf16.msra.mxu0 0
    %596 = vmatprep.subr.bf16.mxu0 0
    %597 = vmatpush1.bf16.msra.mxu0 0
    %598 = vmatprep.subr.bf16.mxu0 0
    %599 = vmatpush1.bf16.msra.mxu0 0
    %600 = vmatprep.subr.bf16.mxu0 0
    %601 = vmatpush1.bf16.msra.mxu0 0
    %602 = vmatprep.subr.bf16.mxu0 0
    %603 = vmatpush1.bf16.msra.mxu0 0
    %604 = vmatprep.subr.bf16.mxu0 0
    %605 = vmatpush1.bf16.msra.mxu0 0
    %606 = vmatprep.subr.bf16.mxu0 0
    %607 = vmatpush1.bf16.msra.mxu0 0
    %608 = vmatprep.subr.bf16.mxu0 0
    %609 = vmatpush1.bf16.msra.mxu0 0
    %610 = vmatprep.subr.bf16.mxu0 0
    %611 = vmatpush1.bf16.msra.mxu0 0
    %612 = vmatprep.subr.bf16.mxu0 0
    %613 = vmatpush1.bf16.msra.mxu0 0
    %614 = vmatprep.subr.bf16.mxu0 0
    %615 = vmatpush1.bf16.msra.mxu0 0
    %616 = vmatprep.subr.bf16.mxu0 0
    %617 = vmatpush1.bf16.msra.mxu0 0
    %618 = vmatprep.subr.bf16.mxu0 0
    %619 = vmatpush1.bf16.msra.mxu0 0
    %620 = vmatprep.subr.bf16.mxu0 0
    %621 = vmatpush1.bf16.msra.mxu0 0
    %622 = vmatprep.subr.bf16.mxu0 0
    %623 = vmatpush1.bf16.msra.mxu0 0
    %624 = vmatprep.mubr.bf16.mxu0 0
    %625 = vmatmul.mubr.bf16.gmra.mrb[0].mxu0 %v587
    %v626 = vpop.f32.mrb[0].mxu0
    %v627 = vadd.f32 0.0, %v626
    %v628 = vpop.f32.mrb[0].mxu0
    %v629 = vpop.f32.mrb[0].mxu0
    %v630 = vadd.f32 0.0, %v629
    %v631 = vpop.f32.mrb[0].mxu0
    %632 = vmatprep.mubr.bf16.mxu0 0
    %633 = vmatmul.mubr.bf16.gmra.mrb[0].mxu0 %v590
    %v634 = vpop.f32.mrb[0].mxu0
    %v635 = vadd.f32 0.0, %v634
    %v636 = vpop.f32.mrb[0].mxu0
    %v637 = vpop.f32.mrb[0].mxu0
    %v638 = vadd.f32 0.0, %v637
    %v639 = vpop.f32.mrb[0].mxu0
    %640 = vdwg.mxu0
    %v645 = vunpack.c.l.b16 %v563
    %v646 = vunpack.c.l.b16 %v564
    %v647 = vunpack.c.l.b16 %v565
    %v648 = vunpack.c.l.b16 %v566
    %v649 = vpack.c.b16 %v646, %v645
    %v650 = vpack.c.b16 %v648, %v647
    %v652 = vsel %vm327, %v649, 0
    %v655 = vsel %vm327, %v650, 0
    %657 = vmatprep.subr.bf16.mxu0 0
    %658 = vmatpush1.bf16.msra.mxu0 %v561
    %659 = vmatprep.subr.bf16.mxu0 0
    %660 = vmatpush1.bf16.msra.mxu0 0
    %661 = vmatprep.subr.bf16.mxu0 0
    %662 = vmatpush1.bf16.msra.mxu0 0
    %663 = vmatprep.subr.bf16.mxu0 0
    %664 = vmatpush1.bf16.msra.mxu0 0
    %665 = vmatprep.subr.bf16.mxu0 0
    %666 = vmatpush1.bf16.msra.mxu0 0
    %667 = vmatprep.subr.bf16.mxu0 0
    %668 = vmatpush1.bf16.msra.mxu0 0
    %669 = vmatprep.subr.bf16.mxu0 0
    %670 = vmatpush1.bf16.msra.mxu0 0
    %671 = vmatprep.subr.bf16.mxu0 0
    %672 = vmatpush1.bf16.msra.mxu0 0
    %673 = vmatprep.subr.bf16.mxu0 0
    %674 = vmatpush1.bf16.msra.mxu0 0
    %675 = vmatprep.subr.bf16.mxu0 0
    %676 = vmatpush1.bf16.msra.mxu0 0
    %677 = vmatprep.subr.bf16.mxu0 0
    %678 = vmatpush1.bf16.msra.mxu0 0
    %679 = vmatprep.subr.bf16.mxu0 0
    %680 = vmatpush1.bf16.msra.mxu0 0
    %681 = vmatprep.subr.bf16.mxu0 0
    %682 = vmatpush1.bf16.msra.mxu0 0
    %683 = vmatprep.subr.bf16.mxu0 0
    %684 = vmatpush1.bf16.msra.mxu0 0
    %685 = vmatprep.subr.bf16.mxu0 0
    %686 = vmatpush1.bf16.msra.mxu0 0
    %687 = vmatprep.subr.bf16.mxu0 0
    %688 = vmatpush1.bf16.msra.mxu0 0
    %689 = vmatprep.mubr.bf16.mxu0 0
    %690 = vmatmul.mubr.bf16.gmra.mrb[0].mxu0 %v652
    %v691 = vpop.f32.mrb[0].mxu0
    %v692 = vadd.f32 %v627, %v691
    %v693 = vpop.f32.mrb[0].mxu0
    %v694 = vpop.f32.mrb[0].mxu0
    %v695 = vadd.f32 %v630, %v694
    %v696 = vpop.f32.mrb[0].mxu0
    %697 = vmatprep.mubr.bf16.mxu0 0
    %698 = vmatmul.mubr.bf16.gmra.mrb[0].mxu0 %v655
    %v699 = vpop.f32.mrb[0].mxu0
    %v700 = vadd.f32 %v635, %v699
    %v701 = vpop.f32.mrb[0].mxu0
    %v702 = vpop.f32.mrb[0].mxu0
    %v703 = vadd.f32 %v638, %v702
    %v704 = vpop.f32.mrb[0].mxu0
    %705 = vdwg.mxu0
    %s706 = scalar_lea.vmem [#allocation2], 160
    %v707 = vld [vmem:[%s706] sm:$0xf]
    %v708 = vld [vmem:[%s706 + $0x4] sm:$0xf]
    %v709 = vld [vmem:[%s706 + $0x8] sm:$0xf]
    %v710 = vld [vmem:[%s706 + $0xc] sm:$0xf]
    %v715 = vunpack.c.l.b16 %v707
    %v716 = vunpack.c.l.b16 %v708
    %v717 = vunpack.c.l.b16 %v709
    %v718 = vunpack.c.l.b16 %v710
    %v719 = vpack.c.b16 %v716, %v715
    %v720 = vpack.c.b16 %v718, %v717
    %721 = vrot.lane.b32.xlu0 %v561, 120
    %v722 = vpop.permute.xlu0 %721
    %v725 = vsel %vm327, %v719, 0
    %v728 = vsel %vm327, %v720, 0
    %730 = vmatprep.subr.bf16.mxu0 0
    %731 = vmatpush1.bf16.msra.mxu0 %v722
    %732 = vmatprep.subr.bf16.mxu0 0
    %733 = vmatpush1.bf16.msra.mxu0 0
    %734 = vmatprep.subr.bf16.mxu0 0
    %735 = vmatpush1.bf16.msra.mxu0 0
    %736 = vmatprep.subr.bf16.mxu0 0
    %737 = vmatpush1.bf16.msra.mxu0 0
    %738 = vmatprep.subr.bf16.mxu0 0
    %739 = vmatpush1.bf16.msra.mxu0 0
    %740 = vmatprep.subr.bf16.mxu0 0
    %741 = vmatpush1.bf16.msra.mxu0 0
    %742 = vmatprep.subr.bf16.mxu0 0
    %743 = vmatpush1.bf16.msra.mxu0 0
    %744 = vmatprep.subr.bf16.mxu0 0
    %745 = vmatpush1.bf16.msra.mxu0 0
    %746 = vmatprep.subr.bf16.mxu0 0
    %747 = vmatpush1.bf16.msra.mxu0 0
    %748 = vmatprep.subr.bf16.mxu0 0
    %749 = vmatpush1.bf16.msra.mxu0 0
    %750 = vmatprep.subr.bf16.mxu0 0
    %751 = vmatpush1.bf16.msra.mxu0 0
    %752 = vmatprep.subr.bf16.mxu0 0
    %753 = vmatpush1.bf16.msra.mxu0 0
    %754 = vmatprep.subr.bf16.mxu0 0
    %755 = vmatpush1.bf16.msra.mxu0 0
    %756 = vmatprep.subr.bf16.mxu0 0
    %757 = vmatpush1.bf16.msra.mxu0 0
    %758 = vmatprep.subr.bf16.mxu0 0
    %759 = vmatpush1.bf16.msra.mxu0 0
    %760 = vmatprep.subr.bf16.mxu0 0
    %761 = vmatpush1.bf16.msra.mxu0 0
    %762 = vmatprep.mubr.bf16.mxu0 0
    %763 = vmatmul.mubr.bf16.gmra.mrb[0].mxu0 %v725
    %v764 = vpop.f32.mrb[0].mxu0
    %v765 = vadd.f32 0.0, %v764
    %v766 = vpop.f32.mrb[0].mxu0
    %v767 = vpop.f32.mrb[0].mxu0
    %v768 = vadd.f32 0.0, %v767
    %v769 = vpop.f32.mrb[0].mxu0
    %770 = vmatprep.mubr.bf16.mxu0 0
    %771 = vmatmul.mubr.bf16.gmra.mrb[0].mxu0 %v728
    %v772 = vpop.f32.mrb[0].mxu0
    %v773 = vadd.f32 0.0, %v772
    %v774 = vpop.f32.mrb[0].mxu0
    %v775 = vpop.f32.mrb[0].mxu0
    %v776 = vadd.f32 0.0, %v775
    %v777 = vpop.f32.mrb[0].mxu0
    %778 = vdwg.mxu0
    %v779 = vadd.f32 %v692, %v765
    %v780 = vadd.f32 %v695, %v768
    %v781 = vadd.f32 %v700, %v773
    %v782 = vadd.f32 %v703, %v776
    %s783 = scalar_lea.vmem [#allocation2], 176
    %v784 = vld [vmem:[%s783] sm:$0xf]
    %v785 = vld [vmem:[%s783 + $0x4] sm:$0xf]
    %v786 = vld [vmem:[%s783 + $0x8] sm:$0xf]
    %v787 = vld [vmem:[%s783 + $0xc] sm:$0xf]
    %v792 = vunpack.c.l.b16 %v784
    %v793 = vunpack.c.l.b16 %v785
    %v794 = vunpack.c.l.b16 %v786
    %v795 = vunpack.c.l.b16 %v787
    %v796 = vpack.c.b16 %v793, %v792
    %v797 = vpack.c.b16 %v795, %v794
    %798 = vrot.lane.b32.xlu0 %v561, 116
    %v799 = vpop.permute.xlu0 %798
    %v802 = vsel %vm327, %v796, 0
    %v805 = vsel %vm327, %v797, 0
    %807 = vmatprep.subr.bf16.mxu0 0
    %808 = vmatpush1.bf16.msra.mxu0 %v799
    %809 = vmatprep.subr.bf16.mxu0 0
    %810 = vmatpush1.bf16.msra.mxu0 0
    %811 = vmatprep.subr.bf16.mxu0 0
    %812 = vmatpush1.bf16.msra.mxu0 0
    %813 = vmatprep.subr.bf16.mxu0 0
    %814 = vmatpush1.bf16.msra.mxu0 0
    %815 = vmatprep.subr.bf16.mxu0 0
    %816 = vmatpush1.bf16.msra.mxu0 0
    %817 = vmatprep.subr.bf16.mxu0 0
    %818 = vmatpush1.bf16.msra.mxu0 0
    %819 = vmatprep.subr.bf16.mxu0 0
    %820 = vmatpush1.bf16.msra.mxu0 0
    %821 = vmatprep.subr.bf16.mxu0 0
    %822 = vmatpush1.bf16.msra.mxu0 0
    %823 = vmatprep.subr.bf16.mxu0 0
    %824 = vmatpush1.bf16.msra.mxu0 0
    %825 = vmatprep.subr.bf16.mxu0 0
    %826 = vmatpush1.bf16.msra.mxu0 0
    %827 = vmatprep.subr.bf16.mxu0 0
    %828 = vmatpush1.bf16.msra.mxu0 0
    %829 = vmatprep.subr.bf16.mxu0 0
    %830 = vmatpush1.bf16.msra.mxu0 0
    %831 = vmatprep.subr.bf16.mxu0 0
    %832 = vmatpush1.bf16.msra.mxu0 0
    %833 = vmatprep.subr.bf16.mxu0 0
    %834 = vmatpush1.bf16.msra.mxu0 0
    %835 = vmatprep.subr.bf16.mxu0 0
    %836 = vmatpush1.bf16.msra.mxu0 0
    %837 = vmatprep.subr.bf16.mxu0 0
    %838 = vmatpush1.bf16.msra.mxu0 0
    %839 = vmatprep.mubr.bf16.mxu0 0
    %840 = vmatmul.mubr.bf16.gmra.mrb[0].mxu0 %v802
    %v841 = vpop.f32.mrb[0].mxu0
    %v842 = vadd.f32 0.0, %v841
    %v843 = vpop.f32.mrb[0].mxu0
    %v844 = vpop.f32.mrb[0].mxu0
    %v845 = vadd.f32 0.0, %v844
    %v846 = vpop.f32.mrb[0].mxu0
    %847 = vmatprep.mubr.bf16.mxu0 0
    %848 = vmatmul.mubr.bf16.gmra.mrb[0].mxu0 %v805
    %v849 = vpop.f32.mrb[0].mxu0
    %v850 = vadd.f32 0.0, %v849
    %v851 = vpop.f32.mrb[0].mxu0
    %v852 = vpop.f32.mrb[0].mxu0
    %v853 = vadd.f32 0.0, %v852
    %v854 = vpop.f32.mrb[0].mxu0
    %855 = vdwg.mxu0
    %v856 = vadd.f32 %v779, %v842
    %v857 = vadd.f32 %v780, %v845
    %v858 = vadd.f32 %v781, %v850
    %v859 = vadd.f32 %v782, %v853
    %860 = vset.pattern.permute.xlu0 2
    %861 = vperm.xlu0 %860, %v44
    %v862 = vpop.permute.xlu0 %861
    %864 = vset.pattern.permute.xlu0 2
    %865 = vperm.xlu0 %864, %v45
    %v866 = vpop.permute.xlu0 %865
    %869 = vset.pattern.permute.xlu0 2
    %870 = vperm.xlu0 %869, %v46
    %v871 = vpop.permute.xlu0 %870
    %874 = vset.pattern.permute.xlu0 2
    %875 = vperm.xlu0 %874, %v47
    %v876 = vpop.permute.xlu0 %875
    %v878 = vadd.f32 %v856, %v862
    %v879 = vadd.f32 %v857, %v866
    %v880 = vadd.f32 %v858, %v871
    %v881 = vadd.f32 %v859, %v876
    %vm882 = vcmp.gt.f32.partialorder %v878, 0.0
    %vm883 = vcmp.gt.f32.partialorder %v879, 0.0
    %vm884 = vcmp.gt.f32.partialorder %v880, 0.0
    %vm885 = vcmp.gt.f32.partialorder %v881, 0.0
    %v886 = vmul.f32 %v878, 0.2
    %v887 = vmul.f32 %v879, 0.2
    %v888 = vmul.f32 %v880, 0.2
    %v889 = vmul.f32 %v881, 0.2
    %v890 = vsel %vm882, %v878, %v886
    %v891 = vsel %vm883, %v879, %v887
    %v892 = vsel %vm884, %v880, %v888
    %v893 = vsel %vm885, %v881, %v889
    %898 = vrot.lane.b32.xlu0 %v890, 124
    %v899 = vpop.permute.xlu0 %898
    %900 = vrot.lane.b32.xlu0 %v891, 124
    %v901 = vpop.permute.xlu0 %900
    %902 = vrot.lane.b32.xlu0 %v892, 124
    %v903 = vpop.permute.xlu0 %902
    %904 = vrot.lane.b32.xlu0 %v893, 124
    %v905 = vpop.permute.xlu0 %904
    %v910 = vmax.f32 %v890, %v899
    %v911 = vmax.f32 %v891, %v901
    %v912 = vmax.f32 %v892, %v903
    %v913 = vmax.f32 %v893, %v905
    %v914 = vpack.c.bf16 %v911, %v910
    %v915 = vpack.c.bf16 %v913, %v912
    %s916 = scalar_lea.vmem [#allocation2], 192
    %v917 = vld [vmem:[%s916] sm:$0xf]
    %v918 = vld [vmem:[%s916 + $0x4] sm:$0xf]
    %v919 = vld [vmem:[%s916 + $0x8] sm:$0xf]
    %v920 = vld [vmem:[%s916 + $0xc] sm:$0xf]
    %s921 = scalar_lea.vmem [#allocation2], 208
    %v922 = vld [vmem:[%s921] sm:$0xf]
    %v923 = vld [vmem:[%s921 + $0x4] sm:$0xf]
    %v924 = vld [vmem:[%s921 + $0x8] sm:$0xf]
    %v925 = vld [vmem:[%s921 + $0xc] sm:$0xf]
    %v930 = vunpack.c.l.b16 %v922
    %v931 = vunpack.c.l.b16 %v923
    %v932 = vunpack.c.l.b16 %v924
    %v933 = vunpack.c.l.b16 %v925
    %v934 = vpack.c.b16 %v931, %v930
    %v935 = vpack.c.b16 %v933, %v932
    %938 = vrot.lane.b32.xlu0 %v914, 120
    %v939 = vpop.permute.xlu0 %938
    %940 = vrot.lane.b32.xlu0 %v915, 120
    %v941 = vpop.permute.xlu0 %940
    %vm944 = vcmask 261120
    %v946 = vsel %vm944, %v934, 0
    %v949 = vsel %vm944, %v935, 0
    %951 = vmatprep.subr.bf16.mxu0 0
    %952 = vmatpush1.bf16.msra.mxu0 %v939
    %953 = vmatprep.subr.bf16.mxu0 0
    %954 = vmatpush1.bf16.msra.mxu0 %v941
    %955 = vmatprep.subr.bf16.mxu0 0
    %956 = vmatpush1.bf16.msra.mxu0 0
    %957 = vmatprep.subr.bf16.mxu0 0
    %958 = vmatpush1.bf16.msra.mxu0 0
    %959 = vmatprep.subr.bf16.mxu0 0
    %960 = vmatpush1.bf16.msra.mxu0 0
    %961 = vmatprep.subr.bf16.mxu0 0
    %962 = vmatpush1.bf16.msra.mxu0 0
    %963 = vmatprep.subr.bf16.mxu0 0
    %964 = vmatpush1.bf16.msra.mxu0 0
    %965 = vmatprep.subr.bf16.mxu0 0
    %966 = vmatpush1.bf16.msra.mxu0 0
    %967 = vmatprep.subr.bf16.mxu0 0
    %968 = vmatpush1.bf16.msra.mxu0 0
    %969 = vmatprep.subr.bf16.mxu0 0
    %970 = vmatpush1.bf16.msra.mxu0 0
    %971 = vmatprep.subr.bf16.mxu0 0
    %972 = vmatpush1.bf16.msra.mxu0 0
    %973 = vmatprep.subr.bf16.mxu0 0
    %974 = vmatpush1.bf16.msra.mxu0 0
    %975 = vmatprep.subr.bf16.mxu0 0
    %976 = vmatpush1.bf16.msra.mxu0 0
    %977 = vmatprep.subr.bf16.mxu0 0
    %978 = vmatpush1.bf16.msra.mxu0 0
    %979 = vmatprep.subr.bf16.mxu0 0
    %980 = vmatpush1.bf16.msra.mxu0 0
    %981 = vmatprep.subr.bf16.mxu0 0
    %982 = vmatpush1.bf16.msra.mxu0 0
    %983 = vmatprep.mubr.bf16.mxu0 0
    %984 = vmatmul.mubr.bf16.gmra.mrb[0].mxu0 %v946
    %v985 = vpop.f32.mrb[0].mxu0
    %v986 = vadd.f32 0.0, %v985
    %v987 = vpop.f32.mrb[0].mxu0
    %v988 = vpop.f32.mrb[0].mxu0
    %v989 = vadd.f32 0.0, %v988
    %v990 = vpop.f32.mrb[0].mxu0
    %991 = vmatprep.mubr.bf16.mxu0 0
    %992 = vmatmul.mubr.bf16.gmra.mrb[0].mxu0 %v949
    %v993 = vpop.f32.mrb[0].mxu0
    %v994 = vadd.f32 0.0, %v993
    %v995 = vpop.f32.mrb[0].mxu0
    %v996 = vpop.f32.mrb[0].mxu0
    %v997 = vadd.f32 0.0, %v996
    %v998 = vpop.f32.mrb[0].mxu0
    %999 = vdwg.mxu0
    %v1004 = vunpack.c.l.b16 %v917
    %v1005 = vunpack.c.l.b16 %v918
    %v1006 = vunpack.c.l.b16 %v919
    %v1007 = vunpack.c.l.b16 %v920
    %v1008 = vpack.c.b16 %v1005, %v1004
    %v1009 = vpack.c.b16 %v1007, %v1006
    %v1011 = vsel %vm944, %v1008, 0
    %v1014 = vsel %vm944, %v1009, 0
    %1016 = vmatprep.subr.bf16.mxu0 0
    %1017 = vmatpush1.bf16.msra.mxu0 %v914
    %1018 = vmatprep.subr.bf16.mxu0 0
    %1019 = vmatpush1.bf16.msra.mxu0 %v915
    %1020 = vmatprep.subr.bf16.mxu0 0
    %1021 = vmatpush1.bf16.msra.mxu0 0
    %1022 = vmatprep.subr.bf16.mxu0 0
    %1023 = vmatpush1.bf16.msra.mxu0 0
    %1024 = vmatprep.subr.bf16.mxu0 0
    %1025 = vmatpush1.bf16.msra.mxu0 0
    %1026 = vmatprep.subr.bf16.mxu0 0
    %1027 = vmatpush1.bf16.msra.mxu0 0
    %1028 = vmatprep.subr.bf16.mxu0 0
    %1029 = vmatpush1.bf16.msra.mxu0 0
    %1030 = vmatprep.subr.bf16.mxu0 0
    %1031 = vmatpush1.bf16.msra.mxu0 0
    %1032 = vmatprep.subr.bf16.mxu0 0
    %1033 = vmatpush1.bf16.msra.mxu0 0
    %1034 = vmatprep.subr.bf16.mxu0 0
    %1035 = vmatpush1.bf16.msra.mxu0 0
    %1036 = vmatprep.subr.bf16.mxu0 0
    %1037 = vmatpush1.bf16.msra.mxu0 0
    %1038 = vmatprep.subr.bf16.mxu0 0
    %1039 = vmatpush1.bf16.msra.mxu0 0
    %1040 = vmatprep.subr.bf16.mxu0 0
    %1041 = vmatpush1.bf16.msra.mxu0 0
    %1042 = vmatprep.subr.bf16.mxu0 0
    %1043 = vmatpush1.bf16.msra.mxu0 0
    %1044 = vmatprep.subr.bf16.mxu0 0
    %1045 = vmatpush1.bf16.msra.mxu0 0
    %1046 = vmatprep.subr.bf16.mxu0 0
    %1047 = vmatpush1.bf16.msra.mxu0 0
    %1048 = vmatprep.mubr.bf16.mxu0 0
    %1049 = vmatmul.mubr.bf16.gmra.mrb[0].mxu0 %v1011
    %v1050 = vpop.f32.mrb[0].mxu0
    %v1051 = vadd.f32 %v986, %v1050
    %v1052 = vpop.f32.mrb[0].mxu0
    %v1053 = vpop.f32.mrb[0].mxu0
    %v1054 = vadd.f32 %v989, %v1053
    %v1055 = vpop.f32.mrb[0].mxu0
    %1056 = vmatprep.mubr.bf16.mxu0 0
    %1057 = vmatmul.mubr.bf16.gmra.mrb[0].mxu0 %v1014
    %v1058 = vpop.f32.mrb[0].mxu0
    %v1059 = vadd.f32 %v994, %v1058
    %v1060 = vpop.f32.mrb[0].mxu0
    %v1061 = vpop.f32.mrb[0].mxu0
    %v1062 = vadd.f32 %v997, %v1061
    %v1063 = vpop.f32.mrb[0].mxu0
    %1064 = vdwg.mxu0
    %s1065 = scalar_lea.vmem [#allocation2], 224
    %v1066 = vld [vmem:[%s1065] sm:$0xf]
    %v1067 = vld [vmem:[%s1065 + $0x4] sm:$0xf]
    %v1068 = vld [vmem:[%s1065 + $0x8] sm:$0xf]
    %v1069 = vld [vmem:[%s1065 + $0xc] sm:$0xf]
    %v1074 = vunpack.c.l.b16 %v1066
    %v1075 = vunpack.c.l.b16 %v1067
    %v1076 = vunpack.c.l.b16 %v1068
    %v1077 = vunpack.c.l.b16 %v1069
    %v1078 = vpack.c.b16 %v1075, %v1074
    %v1079 = vpack.c.b16 %v1077, %v1076
    %1080 = vrot.lane.b32.xlu0 %v914, 112
    %v1081 = vpop.permute.xlu0 %1080
    %1082 = vrot.lane.b32.xlu0 %v915, 112
    %v1083 = vpop.permute.xlu0 %1082
    %v1087 = vsel %vm944, %v1078, 0
    %v1090 = vsel %vm944, %v1079, 0
    %1092 = vmatprep.subr.bf16.mxu0 0
    %1093 = vmatpush1.bf16.msra.mxu0 %v1081
    %1094 = vmatprep.subr.bf16.mxu0 0
    %1095 = vmatpush1.bf16.msra.mxu0 %v1083
    %1096 = vmatprep.subr.bf16.mxu0 0
    %1097 = vmatpush1.bf16.msra.mxu0 0
    %1098 = vmatprep.subr.bf16.mxu0 0
    %1099 = vmatpush1.bf16.msra.mxu0 0
    %1100 = vmatprep.subr.bf16.mxu0 0
    %1101 = vmatpush1.bf16.msra.mxu0 0
    %1102 = vmatprep.subr.bf16.mxu0 0
    %1103 = vmatpush1.bf16.msra.mxu0 0
    %1104 = vmatprep.subr.bf16.mxu0 0
    %1105 = vmatpush1.bf16.msra.mxu0 0
    %1106 = vmatprep.subr.bf16.mxu0 0
    %1107 = vmatpush1.bf16.msra.mxu0 0
    %1108 = vmatprep.subr.bf16.mxu0 0
    %1109 = vmatpush1.bf16.msra.mxu0 0
    %1110 = vmatprep.subr.bf16.mxu0 0
    %1111 = vmatpush1.bf16.msra.mxu0 0
    %1112 = vmatprep.subr.bf16.mxu0 0
    %1113 = vmatpush1.bf16.msra.mxu0 0
    %1114 = vmatprep.subr.bf16.mxu0 0
    %1115 = vmatpush1.bf16.msra.mxu0 0
    %1116 = vmatprep.subr.bf16.mxu0 0
    %1117 = vmatpush1.bf16.msra.mxu0 0
    %1118 = vmatprep.subr.bf16.mxu0 0
    %1119 = vmatpush1.bf16.msra.mxu0 0
    %1120 = vmatprep.subr.bf16.mxu0 0
    %1121 = vmatpush1.bf16.msra.mxu0 0
    %1122 = vmatprep.subr.bf16.mxu0 0
    %1123 = vmatpush1.bf16.msra.mxu0 0
    %1124 = vmatprep.mubr.bf16.mxu0 0
    %1125 = vmatmul.mubr.bf16.gmra.mrb[0].mxu0 %v1087
    %v1126 = vpop.f32.mrb[0].mxu0
    %v1127 = vadd.f32 0.0, %v1126
    %v1128 = vpop.f32.mrb[0].mxu0
    %v1129 = vpop.f32.mrb[0].mxu0
    %v1130 = vadd.f32 0.0, %v1129
    %v1131 = vpop.f32.mrb[0].mxu0
    %1132 = vmatprep.mubr.bf16.mxu0 0
    %1133 = vmatmul.mubr.bf16.gmra.mrb[0].mxu0 %v1090
    %v1134 = vpop.f32.mrb[0].mxu0
    %v1135 = vadd.f32 0.0, %v1134
    %v1136 = vpop.f32.mrb[0].mxu0
    %v1137 = vpop.f32.mrb[0].mxu0
    %v1138 = vadd.f32 0.0, %v1137
    %v1139 = vpop.f32.mrb[0].mxu0
    %1140 = vdwg.mxu0
    %v1141 = vadd.f32 %v1051, %v1127
    %v1142 = vadd.f32 %v1054, %v1130
    %v1143 = vadd.f32 %v1059, %v1135
    %v1144 = vadd.f32 %v1062, %v1138
    %s1145 = scalar_lea.vmem [#allocation2], 240
    %v1146 = vld [vmem:[%s1145] sm:$0xf]
    %v1147 = vld [vmem:[%s1145 + $0x4] sm:$0xf]
    %v1148 = vld [vmem:[%s1145 + $0x8] sm:$0xf]
    %v1149 = vld [vmem:[%s1145 + $0xc] sm:$0xf]
    %v1154 = vunpack.c.l.b16 %v1146
    %v1155 = vunpack.c.l.b16 %v1147
    %v1156 = vunpack.c.l.b16 %v1148
    %v1157 = vunpack.c.l.b16 %v1149
    %v1158 = vpack.c.b16 %v1155, %v1154
    %v1159 = vpack.c.b16 %v1157, %v1156
    %1160 = vrot.lane.b32.xlu0 %v914, 104
    %v1161 = vpop.permute.xlu0 %1160
    %1162 = vrot.lane.b32.xlu0 %v915, 104
    %v1163 = vpop.permute.xlu0 %1162
    %v1167 = vsel %vm944, %v1158, 0
    %v1170 = vsel %vm944, %v1159, 0
    %1172 = vmatprep.subr.bf16.mxu0 0
    %1173 = vmatpush1.bf16.msra.mxu0 %v1161
    %1174 = vmatprep.subr.bf16.mxu0 0
    %1175 = vmatpush1.bf16.msra.mxu0 %v1163
    %1176 = vmatprep.subr.bf16.mxu0 0
    %1177 = vmatpush1.bf16.msra.mxu0 0
    %1178 = vmatprep.subr.bf16.mxu0 0
    %1179 = vmatpush1.bf16.msra.mxu0 0
    %1180 = vmatprep.subr.bf16.mxu0 0
    %1181 = vmatpush1.bf16.msra.mxu0 0
    %1182 = vmatprep.subr.bf16.mxu0 0
    %1183 = vmatpush1.bf16.msra.mxu0 0
    %1184 = vmatprep.subr.bf16.mxu0 0
    %1185 = vmatpush1.bf16.msra.mxu0 0
    %1186 = vmatprep.subr.bf16.mxu0 0
    %1187 = vmatpush1.bf16.msra.mxu0 0
    %1188 = vmatprep.subr.bf16.mxu0 0
    %1189 = vmatpush1.bf16.msra.mxu0 0
    %1190 = vmatprep.subr.bf16.mxu0 0
    %1191 = vmatpush1.bf16.msra.mxu0 0
    %1192 = vmatprep.subr.bf16.mxu0 0
    %1193 = vmatpush1.bf16.msra.mxu0 0
    %1194 = vmatprep.subr.bf16.mxu0 0
    %1195 = vmatpush1.bf16.msra.mxu0 0
    %1196 = vmatprep.subr.bf16.mxu0 0
    %1197 = vmatpush1.bf16.msra.mxu0 0
    %1198 = vmatprep.subr.bf16.mxu0 0
    %1199 = vmatpush1.bf16.msra.mxu0 0
    %1200 = vmatprep.subr.bf16.mxu0 0
    %1201 = vmatpush1.bf16.msra.mxu0 0
    %1202 = vmatprep.subr.bf16.mxu0 0
    %1203 = vmatpush1.bf16.msra.mxu0 0
    %1204 = vmatprep.mubr.bf16.mxu0 0
    %1205 = vmatmul.mubr.bf16.gmra.mrb[0].mxu0 %v1167
    %v1206 = vpop.f32.mrb[0].mxu0
    %v1207 = vadd.f32 0.0, %v1206
    %v1208 = vpop.f32.mrb[0].mxu0
    %v1209 = vpop.f32.mrb[0].mxu0
    %v1210 = vadd.f32 0.0, %v1209
    %v1211 = vpop.f32.mrb[0].mxu0
    %1212 = vmatprep.mubr.bf16.mxu0 0
    %1213 = vmatmul.mubr.bf16.gmra.mrb[0].mxu0 %v1170
    %v1214 = vpop.f32.mrb[0].mxu0
    %v1215 = vadd.f32 0.0, %v1214
    %v1216 = vpop.f32.mrb[0].mxu0
    %v1217 = vpop.f32.mrb[0].mxu0
    %v1218 = vadd.f32 0.0, %v1217
    %v1219 = vpop.f32.mrb[0].mxu0
    %1220 = vdwg.mxu0
    %v1221 = vadd.f32 %v1141, %v1207
    %v1222 = vadd.f32 %v1142, %v1210
    %v1223 = vadd.f32 %v1143, %v1215
    %v1224 = vadd.f32 %v1144, %v1218
    %1225 = vset.pattern.permute.xlu0 3
    %1226 = vperm.xlu0 %1225, %v44
    %v1227 = vpop.permute.xlu0 %1226
    %1229 = vset.pattern.permute.xlu0 3
    %1230 = vperm.xlu0 %1229, %v45
    %v1231 = vpop.permute.xlu0 %1230
    %1233 = vset.pattern.permute.xlu0 3
    %1234 = vperm.xlu0 %1233, %v46
    %v1235 = vpop.permute.xlu0 %1234
    %1237 = vset.pattern.permute.xlu0 3
    %1238 = vperm.xlu0 %1237, %v47
    %v1239 = vpop.permute.xlu0 %1238
    %v1241 = vadd.f32 %v1221, %v1227
    %v1242 = vadd.f32 %v1222, %v1231
    %v1243 = vadd.f32 %v1223, %v1235
    %v1244 = vadd.f32 %v1224, %v1239
    %vm1245 = vcmp.gt.f32.partialorder %v1241, 0.0
    %vm1246 = vcmp.gt.f32.partialorder %v1242, 0.0
    %vm1247 = vcmp.gt.f32.partialorder %v1243, 0.0
    %vm1248 = vcmp.gt.f32.partialorder %v1244, 0.0
    %v1249 = vmul.f32 %v1241, 0.2
    %v1250 = vmul.f32 %v1242, 0.2
    %v1251 = vmul.f32 %v1243, 0.2
    %v1252 = vmul.f32 %v1244, 0.2
    %v1253 = vsel %vm1245, %v1241, %v1249
    %v1254 = vsel %vm1246, %v1242, %v1250
    %v1255 = vsel %vm1247, %v1243, %v1251
    %v1256 = vsel %vm1248, %v1244, %v1252
    %1261 = vrot.lane.b32.xlu0 %v1253, 120
    %v1262 = vpop.permute.xlu0 %1261
    %1263 = vrot.lane.b32.xlu0 %v1254, 120
    %v1264 = vpop.permute.xlu0 %1263
    %1265 = vrot.lane.b32.xlu0 %v1255, 120
    %v1266 = vpop.permute.xlu0 %1265
    %1267 = vrot.lane.b32.xlu0 %v1256, 120
    %v1268 = vpop.permute.xlu0 %1267
    %v1273 = vmax.f32 %v1253, %v1262
    %v1274 = vmax.f32 %v1254, %v1264
    %v1275 = vmax.f32 %v1255, %v1266
    %v1276 = vmax.f32 %v1256, %v1268
    %v1277 = vpack.c.bf16 %v1274, %v1273
    %v1278 = vpack.c.bf16 %v1276, %v1275
    %s1279 = scalar_lea.vmem [#allocation2], 256
    %v1280 = vld [vmem:[%s1279] sm:$0xf]
    %s1281 = scalar_lea.vmem [#allocation2], 272
    %v1282 = vld [vmem:[%s1281] sm:$0xf]
    %1285 = vrot.lane.b32.xlu0 %v1277, 112
    %v1286 = vpop.permute.xlu0 %1285
    %1287 = vrot.lane.b32.xlu0 %v1278, 112
    %v1288 = vpop.permute.xlu0 %1287
    %v1292 = vsel %vm944, %v1282, 0
    %1294 = vmatprep.subr.bf16.mxu0 0
    %1295 = vmatpush1.bf16.msra.mxu0 %v1286
    %1296 = vmatprep.subr.bf16.mxu0 0
    %1297 = vmatpush1.bf16.msra.mxu0 %v1288
    %1298 = vmatprep.subr.bf16.mxu0 0
    %1299 = vmatpush1.bf16.msra.mxu0 0
    %1300 = vmatprep.subr.bf16.mxu0 0
    %1301 = vmatpush1.bf16.msra.mxu0 0
    %1302 = vmatprep.subr.bf16.mxu0 0
    %1303 = vmatpush1.bf16.msra.mxu0 0
    %1304 = vmatprep.subr.bf16.mxu0 0
    %1305 = vmatpush1.bf16.msra.mxu0 0
    %1306 = vmatprep.subr.bf16.mxu0 0
    %1307 = vmatpush1.bf16.msra.mxu0 0
    %1308 = vmatprep.subr.bf16.mxu0 0
    %1309 = vmatpush1.bf16.msra.mxu0 0
    %1310 = vmatprep.subr.bf16.mxu0 0
    %1311 = vmatpush1.bf16.msra.mxu0 0
    %1312 = vmatprep.subr.bf16.mxu0 0
    %1313 = vmatpush1.bf16.msra.mxu0 0
    %1314 = vmatprep.subr.bf16.mxu0 0
    %1315 = vmatpush1.bf16.msra.mxu0 0
    %1316 = vmatprep.subr.bf16.mxu0 0
    %1317 = vmatpush1.bf16.msra.mxu0 0
    %1318 = vmatprep.subr.bf16.mxu0 0
    %1319 = vmatpush1.bf16.msra.mxu0 0
    %1320 = vmatprep.subr.bf16.mxu0 0
    %1321 = vmatpush1.bf16.msra.mxu0 0
    %1322 = vmatprep.subr.bf16.mxu0 0
    %1323 = vmatpush1.bf16.msra.mxu0 0
    %1324 = vmatprep.subr.bf16.mxu0 0
    %1325 = vmatpush1.bf16.msra.mxu0 0
    %1326 = vmatprep.mubr.bf16.mxu0 0
    %1327 = vmatmul.mubr.bf16.gmra.mrb[0].mxu0 %v1292
    %v1328 = vpop.f32.mrb[0].mxu0
    %v1329 = vadd.f32 0.0, %v1328
    %v1330 = vpop.f32.mrb[0].mxu0
    %v1331 = vpop.f32.mrb[0].mxu0
    %v1332 = vpop.f32.mrb[0].mxu0
    %1333 = vdwg.mxu0
    %v1335 = vsel %vm944, %v1280, 0
    %1337 = vmatprep.subr.bf16.mxu0 0
    %1338 = vmatpush1.bf16.msra.mxu0 %v1277
    %1339 = vmatprep.subr.bf16.mxu0 0
    %1340 = vmatpush1.bf16.msra.mxu0 %v1278
    %1341 = vmatprep.subr.bf16.mxu0 0
    %1342 = vmatpush1.bf16.msra.mxu0 0
    %1343 = vmatprep.subr.bf16.mxu0 0
    %1344 = vmatpush1.bf16.msra.mxu0 0
    %1345 = vmatprep.subr.bf16.mxu0 0
    %1346 = vmatpush1.bf16.msra.mxu0 0
    %1347 = vmatprep.subr.bf16.mxu0 0
    %1348 = vmatpush1.bf16.msra.mxu0 0
    %1349 = vmatprep.subr.bf16.mxu0 0
    %1350 = vmatpush1.bf16.msra.mxu0 0
    %1351 = vmatprep.subr.bf16.mxu0 0
    %1352 = vmatpush1.bf16.msra.mxu0 0
    %1353 = vmatprep.subr.bf16.mxu0 0
    %1354 = vmatpush1.bf16.msra.mxu0 0
    %1355 = vmatprep.subr.bf16.mxu0 0
    %1356 = vmatpush1.bf16.msra.mxu0 0
    %1357 = vmatprep.subr.bf16.mxu0 0
    %1358 = vmatpush1.bf16.msra.mxu0 0
    %1359 = vmatprep.subr.bf16.mxu0 0
    %1360 = vmatpush1.bf16.msra.mxu0 0
    %1361 = vmatprep.subr.bf16.mxu0 0
    %1362 = vmatpush1.bf16.msra.mxu0 0
    %1363 = vmatprep.subr.bf16.mxu0 0
    %1364 = vmatpush1.bf16.msra.mxu0 0
    %1365 = vmatprep.subr.bf16.mxu0 0
    %1366 = vmatpush1.bf16.msra.mxu0 0
    %1367 = vmatprep.subr.bf16.mxu0 0
    %1368 = vmatpush1.bf16.msra.mxu0 0
    %1369 = vmatprep.mubr.bf16.mxu0 0
    %1370 = vmatmul.mubr.bf16.gmra.mrb[0].mxu0 %v1335
    %v1371 = vpop.f32.mrb[0].mxu0
    %v1372 = vadd.f32 %v1329, %v1371
    %v1373 = vpop.f32.mrb[0].mxu0
    %v1374 = vpop.f32.mrb[0].mxu0
    %v1375 = vpop.f32.mrb[0].mxu0
    %1376 = vdwg.mxu0
    %s1377 = scalar_lea.vmem [#allocation2], 288
    %v1378 = vld [vmem:[%s1377] sm:$0xf]
    %1379 = vrot.lane.b32.xlu0 %v1277, 96
    %v1380 = vpop.permute.xlu0 %1379
    %1381 = vrot.lane.b32.xlu0 %v1278, 96
    %v1382 = vpop.permute.xlu0 %1381
    %v1386 = vsel %vm944, %v1378, 0
    %1388 = vmatprep.subr.bf16.mxu0 0
    %1389 = vmatpush1.bf16.msra.mxu0 %v1380
    %1390 = vmatprep.subr.bf16.mxu0 0
    %1391 = vmatpush1.bf16.msra.mxu0 %v1382
    %1392 = vmatprep.subr.bf16.mxu0 0
    %1393 = vmatpush1.bf16.msra.mxu0 0
    %1394 = vmatprep.subr.bf16.mxu0 0
    %1395 = vmatpush1.bf16.msra.mxu0 0
    %1396 = vmatprep.subr.bf16.mxu0 0
    %1397 = vmatpush1.bf16.msra.mxu0 0
    %1398 = vmatprep.subr.bf16.mxu0 0
    %1399 = vmatpush1.bf16.msra.mxu0 0
    %1400 = vmatprep.subr.bf16.mxu0 0
    %1401 = vmatpush1.bf16.msra.mxu0 0
    %1402 = vmatprep.subr.bf16.mxu0 0
    %1403 = vmatpush1.bf16.msra.mxu0 0
    %1404 = vmatprep.subr.bf16.mxu0 0
    %1405 = vmatpush1.bf16.msra.mxu0 0
    %1406 = vmatprep.subr.bf16.mxu0 0
    %1407 = vmatpush1.bf16.msra.mxu0 0
    %1408 = vmatprep.subr.bf16.mxu0 0
    %1409 = vmatpush1.bf16.msra.mxu0 0
    %1410 = vmatprep.subr.bf16.mxu0 0
    %1411 = vmatpush1.bf16.msra.mxu0 0
    %1412 = vmatprep.subr.bf16.mxu0 0
    %1413 = vmatpush1.bf16.msra.mxu0 0
    %1414 = vmatprep.subr.bf16.mxu0 0
    %1415 = vmatpush1.bf16.msra.mxu0 0
    %1416 = vmatprep.subr.bf16.mxu0 0
    %1417 = vmatpush1.bf16.msra.mxu0 0
    %1418 = vmatprep.subr.bf16.mxu0 0
    %1419 = vmatpush1.bf16.msra.mxu0 0
    %1420 = vmatprep.mubr.bf16.mxu0 0
    %1421 = vmatmul.mubr.bf16.gmra.mrb[0].mxu0 %v1386
    %v1422 = vpop.f32.mrb[0].mxu0
    %v1423 = vadd.f32 0.0, %v1422
    %v1424 = vpop.f32.mrb[0].mxu0
    %v1425 = vpop.f32.mrb[0].mxu0
    %v1426 = vpop.f32.mrb[0].mxu0
    %1427 = vdwg.mxu0
    %v1428 = vadd.f32 %v1372, %v1423
    %1429 = vset.pattern.permute.xlu0 4
    %1430 = vperm.xlu0 %1429, %v44
    %v1431 = vpop.permute.xlu0 %1430
    %v1433 = vadd.f32 %v1428, %v1431
    %vm1434 = vcmp.gt.f32.partialorder %v1433, 0.0
    %v1435 = vmul.f32 %v1433, 1.442695
    %v1436 = vpow.pop %v1435
    %v1437 = vsub.f32 %v1436, 1.0
    %v1438 = vsel %vm1434, %v1433, %v1437
    %vm1439 = vcmask 64512
    %v1441 = vsel %vm1439, %v48, 0
    %1443 = vmatprep.subr.mxu0 0.0
    %1444 = vmatpush1.msra.mxu0 %v37
    %1445 = vmatprep.subr.mxu0 0.0
    %1446 = vmatpush1.msra.mxu0 0.0
    %1447 = vmatprep.subr.mxu0 0.0
    %1448 = vmatpush1.msra.mxu0 0.0
    %1449 = vmatprep.subr.mxu0 0.0
    %1450 = vmatpush1.msra.mxu0 0.0
    %1451 = vmatprep.subr.mxu0 0.0
    %1452 = vmatpush1.msra.mxu0 0.0
    %1453 = vmatprep.subr.mxu0 0.0
    %1454 = vmatpush1.msra.mxu0 0.0
    %1455 = vmatprep.subr.mxu0 0.0
    %1456 = vmatpush1.msra.mxu0 0.0
    %1457 = vmatprep.subr.mxu0 0.0
    %1458 = vmatpush1.msra.mxu0 0.0
    %1459 = vmatprep.subr.mxu0 0.0
    %1460 = vmatpush1.msra.mxu0 0.0
    %1461 = vmatprep.subr.mxu0 0.0
    %1462 = vmatpush1.msra.mxu0 0.0
    %1463 = vmatprep.subr.mxu0 0.0
    %1464 = vmatpush1.msra.mxu0 0.0
    %1465 = vmatprep.subr.mxu0 0.0
    %1466 = vmatpush1.msra.mxu0 0.0
    %1467 = vmatprep.subr.mxu0 0.0
    %1468 = vmatpush1.msra.mxu0 0.0
    %1469 = vmatprep.subr.mxu0 0.0
    %1470 = vmatpush1.msra.mxu0 0.0
    %1471 = vmatprep.subr.mxu0 0.0
    %1472 = vmatpush1.msra.mxu0 0.0
    %1473 = vmatprep.subr.mxu0 0.0
    %1474 = vmatpush1.msra.mxu0 0.0
    %1475 = vmatprep.subr.mxu0 0.0
    %1476 = vmatpush1.msra.mxu0 0.0
    %1477 = vmatprep.subr.mxu0 0.0
    %1478 = vmatpush1.msra.mxu0 0.0
    %1479 = vmatprep.subr.mxu0 0.0
    %1480 = vmatpush1.msra.mxu0 0.0
    %1481 = vmatprep.subr.mxu0 0.0
    %1482 = vmatpush1.msra.mxu0 0.0
    %1483 = vmatprep.subr.mxu0 0.0
    %1484 = vmatpush1.msra.mxu0 0.0
    %1485 = vmatprep.subr.mxu0 0.0
    %1486 = vmatpush1.msra.mxu0 0.0
    %1487 = vmatprep.subr.mxu0 0.0
    %1488 = vmatpush1.msra.mxu0 0.0
    %1489 = vmatprep.subr.mxu0 0.0
    %1490 = vmatpush1.msra.mxu0 0.0
    %1491 = vmatprep.subr.mxu0 0.0
    %1492 = vmatpush1.msra.mxu0 0.0
    %1493 = vmatprep.subr.mxu0 0.0
    %1494 = vmatpush1.msra.mxu0 0.0
    %1495 = vmatprep.subr.mxu0 0.0
    %1496 = vmatpush1.msra.mxu0 0.0
    %1497 = vmatprep.subr.mxu0 0.0
    %1498 = vmatpush1.msra.mxu0 0.0
    %1499 = vmatprep.subr.mxu0 0.0
    %1500 = vmatpush1.msra.mxu0 0.0
    %1501 = vmatprep.subr.mxu0 0.0
    %1502 = vmatpush1.msra.mxu0 0.0
    %1503 = vmatprep.subr.mxu0 0.0
    %1504 = vmatpush1.msra.mxu0 0.0
    %1505 = vmatprep.subr.mxu0 0.0
    %1506 = vmatpush1.msra.mxu0 0.0
    %1507 = vmatprep.mubr.f32.mxu0 0.0
    %1508 = vmatmul.mubr.f32.gmra.mrb[0].mxu0 %v1441
    %v1509 = vpop.f32.mrb[0].mxu0
    %v1510 = vadd.f32 0.0, %v1509
    %v1511 = vpop.f32.mrb[0].mxu0
    %1512 = vdwg.mxu0
    %v1513 = vadd.f32 %v38, %v1510
    %1515 = vset.pattern.permute.xlu0 0
    %1516 = vperm.xlu0 %1515, %v1438
    %v1517 = vpop.permute.xlu0 %1516
    %v1519 = vmul.f32 %v1517, %v36
    %vm1520 = vcmask 257024
    %v1521 = vsel %vm1520, %v1519, 0.0
    %v1522 = vrot.slane %v1521, 4
    %v1523 = vadd.f32 %v1521, %v1522
    %v1524 = vrot.slane %v1523, 2
    %v1525 = vadd.f32 %v1523, %v1524
    %v1526 = vrot.slane %v1525, 1
    %v1527 = vadd.f32 %v1525, %v1526
    %v1528 = vadd.f32 %v1513, %v1527
    %v1530 = vsel %vm944, %v1528, 0
    %1532 = vmatprep.subr.mxu0 0.0
    %1533 = vmatpush1.msra.mxu0 %v39
    %1534 = vmatprep.subr.mxu0 0.0
    %1535 = vmatpush1.msra.mxu0 %v40
    %1536 = vmatprep.subr.mxu0 0.0
    %1537 = vmatpush1.msra.mxu0 %v41
    %1538 = vmatprep.subr.mxu0 0.0
    %1539 = vmatpush1.msra.mxu0 %v42
    %1540 = vmatprep.subr.mxu0 0.0
    %1541 = vmatpush1.msra.mxu0 0.0
    %1542 = vmatprep.subr.mxu0 0.0
    %1543 = vmatpush1.msra.mxu0 0.0
    %1544 = vmatprep.subr.mxu0 0.0
    %1545 = vmatpush1.msra.mxu0 0.0
    %1546 = vmatprep.subr.mxu0 0.0
    %1547 = vmatpush1.msra.mxu0 0.0
    %1548 = vmatprep.subr.mxu0 0.0
    %1549 = vmatpush1.msra.mxu0 0.0
    %1550 = vmatprep.subr.mxu0 0.0
    %1551 = vmatpush1.msra.mxu0 0.0
    %1552 = vmatprep.subr.mxu0 0.0
    %1553 = vmatpush1.msra.mxu0 0.0
    %1554 = vmatprep.subr.mxu0 0.0
    %1555 = vmatpush1.msra.mxu0 0.0
    %1556 = vmatprep.subr.mxu0 0.0
    %1557 = vmatpush1.msra.mxu0 0.0
    %1558 = vmatprep.subr.mxu0 0.0
    %1559 = vmatpush1.msra.mxu0 0.0
    %1560 = vmatprep.subr.mxu0 0.0
    %1561 = vmatpush1.msra.mxu0 0.0
    %1562 = vmatprep.subr.mxu0 0.0
    %1563 = vmatpush1.msra.mxu0 0.0
    %1564 = vmatprep.subr.mxu0 0.0
    %1565 = vmatpush1.msra.mxu0 0.0
    %1566 = vmatprep.subr.mxu0 0.0
    %1567 = vmatpush1.msra.mxu0 0.0
    %1568 = vmatprep.subr.mxu0 0.0
    %1569 = vmatpush1.msra.mxu0 0.0
    %1570 = vmatprep.subr.mxu0 0.0
    %1571 = vmatpush1.msra.mxu0 0.0
    %1572 = vmatprep.subr.mxu0 0.0
    %1573 = vmatpush1.msra.mxu0 0.0
    %1574 = vmatprep.subr.mxu0 0.0
    %1575 = vmatpush1.msra.mxu0 0.0
    %1576 = vmatprep.subr.mxu0 0.0
    %1577 = vmatpush1.msra.mxu0 0.0
    %1578 = vmatprep.subr.mxu0 0.0
    %1579 = vmatpush1.msra.mxu0 0.0
    %1580 = vmatprep.subr.mxu0 0.0
    %1581 = vmatpush1.msra.mxu0 0.0
    %1582 = vmatprep.subr.mxu0 0.0
    %1583 = vmatpush1.msra.mxu0 0.0
    %1584 = vmatprep.subr.mxu0 0.0
    %1585 = vmatpush1.msra.mxu0 0.0
    %1586 = vmatprep.subr.mxu0 0.0
    %1587 = vmatpush1.msra.mxu0 0.0
    %1588 = vmatprep.subr.mxu0 0.0
    %1589 = vmatpush1.msra.mxu0 0.0
    %1590 = vmatprep.subr.mxu0 0.0
    %1591 = vmatpush1.msra.mxu0 0.0
    %1592 = vmatprep.subr.mxu0 0.0
    %1593 = vmatpush1.msra.mxu0 0.0
    %1594 = vmatprep.subr.mxu0 0.0
    %1595 = vmatpush1.msra.mxu0 0.0
    %1596 = vmatprep.mubr.f32.mxu0 0.0
    %1597 = vmatmul.mubr.f32.gmra.mrb[0].mxu0 %v1530
    %v1598 = vpop.f32.mrb[0].mxu0
    %v1599 = vadd.f32 %v43, %v1598
    %v1600 = vpop.f32.mrb[0].mxu0
    %1601 = vdwg.mxu0
    %vm1602 = vcmask 8192
    %v1603 = vsel %vm1602, %v1599, -inf
    %1604 = vmax.xlane.f32.xlu0 %v1603
    %v1605 = vpop.xlane.xlu0 %1604
    %v1606 = vsub.f32 %v1599, %v1605
    %v1607 = vmul.f32 %v1606, 1.442695
    %v1608 = vpow.pop %v1607
    %v1609 = vsel %vm1602, %v1608, 0.0
    %1610 = vadd.xlane.f32.xlu0 %v1609
    %v1611 = vpop.xlane.xlu0 %1610
    %v1612 = vlog2.pop %v1611
    %v1613 = vmul.f32 %v1612, 0.6931472
    %v1614 = vsub.f32 %v1606, %v1613
    %1615 = vst.msk [vmem:[#allocation5] sm:$0x1] %vm1602, %v1614
    %s1616 = scalar_lea.vmem %s0, 4
    %v1617 = vld [vmem:[%s1616] sm:$0xf]
    %v1618 = vpack.c.bf16 %v1617, %v1617
    %v1619 = vld [vmem:[#allocation2] sm:$0xf]
    %v1620 = vld [vmem:[#allocation2 + $0x4] sm:$0xf]
    %v1621 = vld [vmem:[%s53] sm:$0xf]
    %v1622 = vld [vmem:[%s53 + $0x4] sm:$0xf]
    %v1625 = vunpack.c.l.b16 %v1621
    %v1626 = vunpack.c.l.b16 %v1622
    %v1627 = vpack.c.b16 %v1626, %v1625
    %1629 = vrot.lane.b32.xlu0 %v1618, 127
    %v1630 = vpop.permute.xlu0 %1629
    %v1632 = vsel %vm64, %v1627, 0
    %v1635 = vsel %vm68, %v1630, 0
    %1637 = vmatprep.subr.bf16.mxu0 0
    %1638 = vmatpush1.bf16.msra.mxu0 %v1635
    %1639 = vmatprep.subr.bf16.mxu0 0
    %1640 = vmatpush1.bf16.msra.mxu0 0
    %1641 = vmatprep.subr.bf16.mxu0 0
    %1642 = vmatpush1.bf16.msra.mxu0 0
    %1643 = vmatprep.subr.bf16.mxu0 0
    %1644 = vmatpush1.bf16.msra.mxu0 0
    %1645 = vmatprep.subr.bf16.mxu0 0
    %1646 = vmatpush1.bf16.msra.mxu0 0
    %1647 = vmatprep.subr.bf16.mxu0 0
    %1648 = vmatpush1.bf16.msra.mxu0 0
    %1649 = vmatprep.subr.bf16.mxu0 0
    %1650 = vmatpush1.bf16.msra.mxu0 0
    %1651 = vmatprep.subr.bf16.mxu0 0
    %1652 = vmatpush1.bf16.msra.mxu0 0
    %1653 = vmatprep.subr.bf16.mxu0 0
    %1654 = vmatpush1.bf16.msra.mxu0 0
    %1655 = vmatprep.subr.bf16.mxu0 0
    %1656 = vmatpush1.bf16.msra.mxu0 0
    %1657 = vmatprep.subr.bf16.mxu0 0
    %1658 = vmatpush1.bf16.msra.mxu0 0
    %1659 = vmatprep.subr.bf16.mxu0 0
    %1660 = vmatpush1.bf16.msra.mxu0 0
    %1661 = vmatprep.subr.bf16.mxu0 0
    %1662 = vmatpush1.bf16.msra.mxu0 0
    %1663 = vmatprep.subr.bf16.mxu0 0
    %1664 = vmatpush1.bf16.msra.mxu0 0
    %1665 = vmatprep.subr.bf16.mxu0 0
    %1666 = vmatpush1.bf16.msra.mxu0 0
    %1667 = vmatprep.subr.bf16.mxu0 0
    %1668 = vmatpush1.bf16.msra.mxu0 0
    %1669 = vmatprep.mubr.bf16.mxu0 0
    %1670 = vmatmul.mubr.bf16.gmra.mrb[0].mxu0 %v1632
    %v1671 = vpop.f32.mrb[0].mxu0
    %v1672 = vadd.f32 0.0, %v1671
    %v1673 = vpop.f32.mrb[0].mxu0
    %v1674 = vpop.f32.mrb[0].mxu0
    %v1675 = vadd.f32 0.0, %v1674
    %v1676 = vpop.f32.mrb[0].mxu0
    %1677 = vdwg.mxu0
    %v1680 = vunpack.c.l.b16 %v1619
    %v1681 = vunpack.c.l.b16 %v1620
    %v1682 = vpack.c.b16 %v1681, %v1680
    %v1684 = vsel %vm64, %v1682, 0
    %v1687 = vsel %vm68, %v1618, 0
    %1689 = vmatprep.subr.bf16.mxu0 0
    %1690 = vmatpush1.bf16.msra.mxu0 %v1687
    %1691 = vmatprep.subr.bf16.mxu0 0
    %1692 = vmatpush1.bf16.msra.mxu0 0
    %1693 = vmatprep.subr.bf16.mxu0 0
    %1694 = vmatpush1.bf16.msra.mxu0 0
    %1695 = vmatprep.subr.bf16.mxu0 0
    %1696 = vmatpush1.bf16.msra.mxu0 0
    %1697 = vmatprep.subr.bf16.mxu0 0
    %1698 = vmatpush1.bf16.msra.mxu0 0
    %1699 = vmatprep.subr.bf16.mxu0 0
    %1700 = vmatpush1.bf16.msra.mxu0 0
    %1701 = vmatprep.subr.bf16.mxu0 0
    %1702 = vmatpush1.bf16.msra.mxu0 0
    %1703 = vmatprep.subr.bf16.mxu0 0
    %1704 = vmatpush1.bf16.msra.mxu0 0
    %1705 = vmatprep.subr.bf16.mxu0 0
    %1706 = vmatpush1.bf16.msra.mxu0 0
    %1707 = vmatprep.subr.bf16.mxu0 0
    %1708 = vmatpush1.bf16.msra.mxu0 0
    %1709 = vmatprep.subr.bf16.mxu0 0
    %1710 = vmatpush1.bf16.msra.mxu0 0
    %1711 = vmatprep.subr.bf16.mxu0 0
    %1712 = vmatpush1.bf16.msra.mxu0 0
    %1713 = vmatprep.subr.bf16.mxu0 0
    %1714 = vmatpush1.bf16.msra.mxu0 0
    %1715 = vmatprep.subr.bf16.mxu0 0
    %1716 = vmatpush1.bf16.msra.mxu0 0
    %1717 = vmatprep.subr.bf16.mxu0 0
    %1718 = vmatpush1.bf16.msra.mxu0 0
    %1719 = vmatprep.subr.bf16.mxu0 0
    %1720 = vmatpush1.bf16.msra.mxu0 0
    %1721 = vmatprep.mubr.bf16.mxu0 0
    %1722 = vmatmul.mubr.bf16.gmra.mrb[0].mxu0 %v1684
    %v1723 = vpop.f32.mrb[0].mxu0
    %v1724 = vadd.f32 %v1672, %v1723
    %v1725 = vpop.f32.mrb[0].mxu0
    %v1726 = vpop.f32.mrb[0].mxu0
    %v1727 = vadd.f32 %v1675, %v1726
    %v1728 = vpop.f32.mrb[0].mxu0
    %1729 = vdwg.mxu0
    %v1730 = vld [vmem:[%s165] sm:$0xf]
    %v1731 = vld [vmem:[%s165 + $0x4] sm:$0xf]
    %v1734 = vunpack.c.l.b16 %v1730
    %v1735 = vunpack.c.l.b16 %v1731
    %v1736 = vpack.c.b16 %v1735, %v1734
    %1737 = vrot.lane.b32.xlu0 %v1618, 126
    %v1738 = vpop.permute.xlu0 %1737
    %v1740 = vsel %vm64, %v1736, 0
    %v1743 = vsel %vm68, %v1738, 0
    %1745 = vmatprep.subr.bf16.mxu0 0
    %1746 = vmatpush1.bf16.msra.mxu0 %v1743
    %1747 = vmatprep.subr.bf16.mxu0 0
    %1748 = vmatpush1.bf16.msra.mxu0 0
    %1749 = vmatprep.subr.bf16.mxu0 0
    %1750 = vmatpush1.bf16.msra.mxu0 0
    %1751 = vmatprep.subr.bf16.mxu0 0
    %1752 = vmatpush1.bf16.msra.mxu0 0
    %1753 = vmatprep.subr.bf16.mxu0 0
    %1754 = vmatpush1.bf16.msra.mxu0 0
    %1755 = vmatprep.subr.bf16.mxu0 0
    %1756 = vmatpush1.bf16.msra.mxu0 0
    %1757 = vmatprep.subr.bf16.mxu0 0
    %1758 = vmatpush1.bf16.msra.mxu0 0
    %1759 = vmatprep.subr.bf16.mxu0 0
    %1760 = vmatpush1.bf16.msra.mxu0 0
    %1761 = vmatprep.subr.bf16.mxu0 0
    %1762 = vmatpush1.bf16.msra.mxu0 0
    %1763 = vmatprep.subr.bf16.mxu0 0
    %1764 = vmatpush1.bf16.msra.mxu0 0
    %1765 = vmatprep.subr.bf16.mxu0 0
    %1766 = vmatpush1.bf16.msra.mxu0 0
    %1767 = vmatprep.subr.bf16.mxu0 0
    %1768 = vmatpush1.bf16.msra.mxu0 0
    %1769 = vmatprep.subr.bf16.mxu0 0
    %1770 = vmatpush1.bf16.msra.mxu0 0
    %1771 = vmatprep.subr.bf16.mxu0 0
    %1772 = vmatpush1.bf16.msra.mxu0 0
    %1773 = vmatprep.subr.bf16.mxu0 0
    %1774 = vmatpush1.bf16.msra.mxu0 0
    %1775 = vmatprep.subr.bf16.mxu0 0
    %1776 = vmatpush1.bf16.msra.mxu0 0
    %1777 = vmatprep.mubr.bf16.mxu0 0
    %1778 = vmatmul.mubr.bf16.gmra.mrb[0].mxu0 %v1740
    %v1779 = vpop.f32.mrb[0].mxu0
    %v1780 = vadd.f32 0.0, %v1779
    %v1781 = vpop.f32.mrb[0].mxu0
    %v1782 = vpop.f32.mrb[0].mxu0
    %v1783 = vadd.f32 0.0, %v1782
    %v1784 = vpop.f32.mrb[0].mxu0
    %1785 = vdwg.mxu0
    %v1786 = vadd.f32 %v1724, %v1780
    %v1787 = vadd.f32 %v1727, %v1783
    %v1788 = vld [vmem:[%s224] sm:$0xf]
    %v1789 = vld [vmem:[%s224 + $0x4] sm:$0xf]
    %v1792 = vunpack.c.l.b16 %v1788
    %v1793 = vunpack.c.l.b16 %v1789
    %v1794 = vpack.c.b16 %v1793, %v1792
    %1795 = vrot.lane.b32.xlu0 %v1618, 125
    %v1796 = vpop.permute.xlu0 %1795
    %v1798 = vsel %vm64, %v1794, 0
    %v1801 = vsel %vm68, %v1796, 0
    %1803 = vmatprep.subr.bf16.mxu0 0
    %1804 = vmatpush1.bf16.msra.mxu0 %v1801
    %1805 = vmatprep.subr.bf16.mxu0 0
    %1806 = vmatpush1.bf16.msra.mxu0 0
    %1807 = vmatprep.subr.bf16.mxu0 0
    %1808 = vmatpush1.bf16.msra.mxu0 0
    %1809 = vmatprep.subr.bf16.mxu0 0
    %1810 = vmatpush1.bf16.msra.mxu0 0
    %1811 = vmatprep.subr.bf16.mxu0 0
    %1812 = vmatpush1.bf16.msra.mxu0 0
    %1813 = vmatprep.subr.bf16.mxu0 0
    %1814 = vmatpush1.bf16.msra.mxu0 0
    %1815 = vmatprep.subr.bf16.mxu0 0
    %1816 = vmatpush1.bf16.msra.mxu0 0
    %1817 = vmatprep.subr.bf16.mxu0 0
    %1818 = vmatpush1.bf16.msra.mxu0 0
    %1819 = vmatprep.subr.bf16.mxu0 0
    %1820 = vmatpush1.bf16.msra.mxu0 0
    %1821 = vmatprep.subr.bf16.mxu0 0
    %1822 = vmatpush1.bf16.msra.mxu0 0
    %1823 = vmatprep.subr.bf16.mxu0 0
    %1824 = vmatpush1.bf16.msra.mxu0 0
    %1825 = vmatprep.subr.bf16.mxu0 0
    %1826 = vmatpush1.bf16.msra.mxu0 0
    %1827 = vmatprep.subr.bf16.mxu0 0
    %1828 = vmatpush1.bf16.msra.mxu0 0
    %1829 = vmatprep.subr.bf16.mxu0 0
    %1830 = vmatpush1.bf16.msra.mxu0 0
    %1831 = vmatprep.subr.bf16.mxu0 0
    %1832 = vmatpush1.bf16.msra.mxu0 0
    %1833 = vmatprep.subr.bf16.mxu0 0
    %1834 = vmatpush1.bf16.msra.mxu0 0
    %1835 = vmatprep.mubr.bf16.mxu0 0
    %1836 = vmatmul.mubr.bf16.gmra.mrb[0].mxu0 %v1798
    %v1837 = vpop.f32.mrb[0].mxu0
    %v1838 = vadd.f32 0.0, %v1837
    %v1839 = vpop.f32.mrb[0].mxu0
    %v1840 = vpop.f32.mrb[0].mxu0
    %v1841 = vadd.f32 0.0, %v1840
    %v1842 = vpop.f32.mrb[0].mxu0
    %1843 = vdwg.mxu0
    %v1844 = vadd.f32 %v1786, %v1838
    %v1845 = vadd.f32 %v1787, %v1841
    %v1846 = vadd.f32 %v1844, %v286
    %v1847 = vadd.f32 %v1845, %v291
    %vm1848 = vcmp.gt.f32.partialorder %v1846, 0.0
    %vm1849 = vcmp.gt.f32.partialorder %v1847, 0.0
    %v1850 = vmul.f32 %v1846, 0.2
    %v1851 = vmul.f32 %v1847, 0.2
    %v1852 = vsel %vm1848, %v1846, %v1850
    %v1853 = vsel %vm1849, %v1847, %v1851
    %1856 = vrot.lane.b32.xlu0 %v1852, 127
    %v1857 = vpop.permute.xlu0 %1856
    %1858 = vrot.lane.b32.xlu0 %v1853, 127
    %v1859 = vpop.permute.xlu0 %1858
    %v1862 = vmax.f32 %v1852, %v1857
    %v1863 = vmax.f32 %v1853, %v1859
    %v1864 = vpack.c.bf16 %v1863, %v1862
    %v1865 = vld [vmem:[%s312] sm:$0xf]
    %v1866 = vld [vmem:[%s312 + $0x4] sm:$0xf]
    %v1867 = vld [vmem:[%s315] sm:$0xf]
    %v1868 = vld [vmem:[%s315 + $0x4] sm:$0xf]
    %v1871 = vunpack.c.l.b16 %v1867
    %v1872 = vunpack.c.l.b16 %v1868
    %v1873 = vpack.c.b16 %v1872, %v1871
    %1875 = vrot.lane.b32.xlu0 %v1864, 126
    %v1876 = vpop.permute.xlu0 %1875
    %v1879 = vsel %vm327, %v1873, 0
    %1881 = vmatprep.subr.bf16.mxu0 0
    %1882 = vmatpush1.bf16.msra.mxu0 %v1876
    %1883 = vmatprep.subr.bf16.mxu0 0
    %1884 = vmatpush1.bf16.msra.mxu0 0
    %1885 = vmatprep.subr.bf16.mxu0 0
    %1886 = vmatpush1.bf16.msra.mxu0 0
    %1887 = vmatprep.subr.bf16.mxu0 0
    %1888 = vmatpush1.bf16.msra.mxu0 0
    %1889 = vmatprep.subr.bf16.mxu0 0
    %1890 = vmatpush1.bf16.msra.mxu0 0
    %1891 = vmatprep.subr.bf16.mxu0 0
    %1892 = vmatpush1.bf16.msra.mxu0 0
    %1893 = vmatprep.subr.bf16.mxu0 0
    %1894 = vmatpush1.bf16.msra.mxu0 0
    %1895 = vmatprep.subr.bf16.mxu0 0
    %1896 = vmatpush1.bf16.msra.mxu0 0
    %1897 = vmatprep.subr.bf16.mxu0 0
    %1898 = vmatpush1.bf16.msra.mxu0 0
    %1899 = vmatprep.subr.bf16.mxu0 0
    %1900 = vmatpush1.bf16.msra.mxu0 0
    %1901 = vmatprep.subr.bf16.mxu0 0
    %1902 = vmatpush1.bf16.msra.mxu0 0
    %1903 = vmatprep.subr.bf16.mxu0 0
    %1904 = vmatpush1.bf16.msra.mxu0 0
    %1905 = vmatprep.subr.bf16.mxu0 0
    %1906 = vmatpush1.bf16.msra.mxu0 0
    %1907 = vmatprep.subr.bf16.mxu0 0
    %1908 = vmatpush1.bf16.msra.mxu0 0
    %1909 = vmatprep.subr.bf16.mxu0 0
    %1910 = vmatpush1.bf16.msra.mxu0 0
    %1911 = vmatprep.subr.bf16.mxu0 0
    %1912 = vmatpush1.bf16.msra.mxu0 0
    %1913 = vmatprep.mubr.bf16.mxu0 0
    %1914 = vmatmul.mubr.bf16.gmra.mrb[0].mxu0 %v1879
    %v1915 = vpop.f32.mrb[0].mxu0
    %v1916 = vadd.f32 0.0, %v1915
    %v1917 = vpop.f32.mrb[0].mxu0
    %v1918 = vpop.f32.mrb[0].mxu0
    %v1919 = vadd.f32 0.0, %v1918
    %v1920 = vpop.f32.mrb[0].mxu0
    %1921 = vdwg.mxu0
    %v1924 = vunpack.c.l.b16 %v1865
    %v1925 = vunpack.c.l.b16 %v1866
    %v1926 = vpack.c.b16 %v1925, %v1924
    %v1928 = vsel %vm327, %v1926, 0
    %1930 = vmatprep.subr.bf16.mxu0 0
    %1931 = vmatpush1.bf16.msra.mxu0 %v1864
    %1932 = vmatprep.subr.bf16.mxu0 0
    %1933 = vmatpush1.bf16.msra.mxu0 0
    %1934 = vmatprep.subr.bf16.mxu0 0
    %1935 = vmatpush1.bf16.msra.mxu0 0
    %1936 = vmatprep.subr.bf16.mxu0 0
    %1937 = vmatpush1.bf16.msra.mxu0 0
    %1938 = vmatprep.subr.bf16.mxu0 0
    %1939 = vmatpush1.bf16.msra.mxu0 0
    %1940 = vmatprep.subr.bf16.mxu0 0
    %1941 = vmatpush1.bf16.msra.mxu0 0
    %1942 = vmatprep.subr.bf16.mxu0 0
    %1943 = vmatpush1.bf16.msra.mxu0 0
    %1944 = vmatprep.subr.bf16.mxu0 0
    %1945 = vmatpush1.bf16.msra.mxu0 0
    %1946 = vmatprep.subr.bf16.mxu0 0
    %1947 = vmatpush1.bf16.msra.mxu0 0
    %1948 = vmatprep.subr.bf16.mxu0 0
    %1949 = vmatpush1.bf16.msra.mxu0 0
    %1950 = vmatprep.subr.bf16.mxu0 0
    %1951 = vmatpush1.bf16.msra.mxu0 0
    %1952 = vmatprep.subr.bf16.mxu0 0
    %1953 = vmatpush1.bf16.msra.mxu0 0
    %1954 = vmatprep.subr.bf16.mxu0 0
    %1955 = vmatpush1.bf16.msra.mxu0 0
    %1956 = vmatprep.subr.bf16.mxu0 0
    %1957 = vmatpush1.bf16.msra.mxu0 0
    %1958 = vmatprep.subr.bf16.mxu0 0
    %1959 = vmatpush1.bf16.msra.mxu0 0
    %1960 = vmatprep.subr.bf16.mxu0 0
    %1961 = vmatpush1.bf16.msra.mxu0 0
    %1962 = vmatprep.mubr.bf16.mxu0 0
    %1963 = vmatmul.mubr.bf16.gmra.mrb[0].mxu0 %v1928
    %v1964 = vpop.f32.mrb[0].mxu0
    %v1965 = vadd.f32 %v1916, %v1964
    %v1966 = vpop.f32.mrb[0].mxu0
    %v1967 = vpop.f32.mrb[0].mxu0
    %v1968 = vadd.f32 %v1919, %v1967
    %v1969 = vpop.f32.mrb[0].mxu0
    %1970 = vdwg.mxu0
    %v1971 = vld [vmem:[%s421] sm:$0xf]
    %v1972 = vld [vmem:[%s421 + $0x4] sm:$0xf]
    %v1975 = vunpack.c.l.b16 %v1971
    %v1976 = vunpack.c.l.b16 %v1972
    %v1977 = vpack.c.b16 %v1976, %v1975
    %1978 = vrot.lane.b32.xlu0 %v1864, 124
    %v1979 = vpop.permute.xlu0 %1978
    %v1982 = vsel %vm327, %v1977, 0
    %1984 = vmatprep.subr.bf16.mxu0 0
    %1985 = vmatpush1.bf16.msra.mxu0 %v1979
    %1986 = vmatprep.subr.bf16.mxu0 0
    %1987 = vmatpush1.bf16.msra.mxu0 0
    %1988 = vmatprep.subr.bf16.mxu0 0
    %1989 = vmatpush1.bf16.msra.mxu0 0
    %1990 = vmatprep.subr.bf16.mxu0 0
    %1991 = vmatpush1.bf16.msra.mxu0 0
    %1992 = vmatprep.subr.bf16.mxu0 0
    %1993 = vmatpush1.bf16.msra.mxu0 0
    %1994 = vmatprep.subr.bf16.mxu0 0
    %1995 = vmatpush1.bf16.msra.mxu0 0
    %1996 = vmatprep.subr.bf16.mxu0 0
    %1997 = vmatpush1.bf16.msra.mxu0 0
    %1998 = vmatprep.subr.bf16.mxu0 0
    %1999 = vmatpush1.bf16.msra.mxu0 0
    %2000 = vmatprep.subr.bf16.mxu0 0
    %2001 = vmatpush1.bf16.msra.mxu0 0
    %2002 = vmatprep.subr.bf16.mxu0 0
    %2003 = vmatpush1.bf16.msra.mxu0 0
    %2004 = vmatprep.subr.bf16.mxu0 0
    %2005 = vmatpush1.bf16.msra.mxu0 0
    %2006 = vmatprep.subr.bf16.mxu0 0
    %2007 = vmatpush1.bf16.msra.mxu0 0
    %2008 = vmatprep.subr.bf16.mxu0 0
    %2009 = vmatpush1.bf16.msra.mxu0 0
    %2010 = vmatprep.subr.bf16.mxu0 0
    %2011 = vmatpush1.bf16.msra.mxu0 0
    %2012 = vmatprep.subr.bf16.mxu0 0
    %2013 = vmatpush1.bf16.msra.mxu0 0
    %2014 = vmatprep.subr.bf16.mxu0 0
    %2015 = vmatpush1.bf16.msra.mxu0 0
    %2016 = vmatprep.mubr.bf16.mxu0 0
    %2017 = vmatmul.mubr.bf16.gmra.mrb[0].mxu0 %v1982
    %v2018 = vpop.f32.mrb[0].mxu0
    %v2019 = vadd.f32 0.0, %v2018
    %v2020 = vpop.f32.mrb[0].mxu0
    %v2021 = vpop.f32.mrb[0].mxu0
    %v2022 = vadd.f32 0.0, %v2021
    %v2023 = vpop.f32.mrb[0].mxu0
    %2024 = vdwg.mxu0
    %v2025 = vadd.f32 %v1965, %v2019
    %v2026 = vadd.f32 %v1968, %v2022
    %v2027 = vld [vmem:[%s478] sm:$0xf]
    %v2028 = vld [vmem:[%s478 + $0x4] sm:$0xf]
    %v2031 = vunpack.c.l.b16 %v2027
    %v2032 = vunpack.c.l.b16 %v2028
    %v2033 = vpack.c.b16 %v2032, %v2031
    %2034 = vrot.lane.b32.xlu0 %v1864, 122
    %v2035 = vpop.permute.xlu0 %2034
    %v2038 = vsel %vm327, %v2033, 0
    %2040 = vmatprep.subr.bf16.mxu0 0
    %2041 = vmatpush1.bf16.msra.mxu0 %v2035
    %2042 = vmatprep.subr.bf16.mxu0 0
    %2043 = vmatpush1.bf16.msra.mxu0 0
    %2044 = vmatprep.subr.bf16.mxu0 0
    %2045 = vmatpush1.bf16.msra.mxu0 0
    %2046 = vmatprep.subr.bf16.mxu0 0
    %2047 = vmatpush1.bf16.msra.mxu0 0
    %2048 = vmatprep.subr.bf16.mxu0 0
    %2049 = vmatpush1.bf16.msra.mxu0 0
    %2050 = vmatprep.subr.bf16.mxu0 0
    %2051 = vmatpush1.bf16.msra.mxu0 0
    %2052 = vmatprep.subr.bf16.mxu0 0
    %2053 = vmatpush1.bf16.msra.mxu0 0
    %2054 = vmatprep.subr.bf16.mxu0 0
    %2055 = vmatpush1.bf16.msra.mxu0 0
    %2056 = vmatprep.subr.bf16.mxu0 0
    %2057 = vmatpush1.bf16.msra.mxu0 0
    %2058 = vmatprep.subr.bf16.mxu0 0
    %2059 = vmatpush1.bf16.msra.mxu0 0
    %2060 = vmatprep.subr.bf16.mxu0 0
    %2061 = vmatpush1.bf16.msra.mxu0 0
    %2062 = vmatprep.subr.bf16.mxu0 0
    %2063 = vmatpush1.bf16.msra.mxu0 0
    %2064 = vmatprep.subr.bf16.mxu0 0
    %2065 = vmatpush1.bf16.msra.mxu0 0
    %2066 = vmatprep.subr.bf16.mxu0 0
    %2067 = vmatpush1.bf16.msra.mxu0 0
    %2068 = vmatprep.subr.bf16.mxu0 0
    %2069 = vmatpush1.bf16.msra.mxu0 0
    %2070 = vmatprep.subr.bf16.mxu0 0
    %2071 = vmatpush1.bf16.msra.mxu0 0
    %2072 = vmatprep.mubr.bf16.mxu0 0
    %2073 = vmatmul.mubr.bf16.gmra.mrb[0].mxu0 %v2038
    %v2074 = vpop.f32.mrb[0].mxu0
    %v2075 = vadd.f32 0.0, %v2074
    %v2076 = vpop.f32.mrb[0].mxu0
    %v2077 = vpop.f32.mrb[0].mxu0
    %v2078 = vadd.f32 0.0, %v2077
    %v2079 = vpop.f32.mrb[0].mxu0
    %2080 = vdwg.mxu0
    %v2081 = vadd.f32 %v2025, %v2075
    %v2082 = vadd.f32 %v2026, %v2078
    %v2083 = vadd.f32 %v2081, %v537
    %v2084 = vadd.f32 %v2082, %v541
    %vm2085 = vcmp.gt.f32.partialorder %v2083, 0.0
    %vm2086 = vcmp.gt.f32.partialorder %v2084, 0.0
    %v2087 = vmul.f32 %v2083, 0.2
    %v2088 = vmul.f32 %v2084, 0.2
    %v2089 = vsel %vm2085, %v2083, %v2087
    %v2090 = vsel %vm2086, %v2084, %v2088
    %2093 = vrot.lane.b32.xlu0 %v2089, 126
    %v2094 = vpop.permute.xlu0 %2093
    %2095 = vrot.lane.b32.xlu0 %v2090, 126
    %v2096 = vpop.permute.xlu0 %2095
    %v2099 = vmax.f32 %v2089, %v2094
    %v2100 = vmax.f32 %v2090, %v2096
    %v2101 = vpack.c.bf16 %v2100, %v2099
    %v2102 = vld [vmem:[%s562] sm:$0xf]
    %v2103 = vld [vmem:[%s562 + $0x4] sm:$0xf]
    %v2104 = vld [vmem:[%s562 + $0x8] sm:$0xf]
    %v2105 = vld [vmem:[%s562 + $0xc] sm:$0xf]
    %v2106 = vld [vmem:[%s567] sm:$0xf]
    %v2107 = vld [vmem:[%s567 + $0x4] sm:$0xf]
    %v2108 = vld [vmem:[%s567 + $0x8] sm:$0xf]
    %v2109 = vld [vmem:[%s567 + $0xc] sm:$0xf]
    %v2114 = vunpack.c.l.b16 %v2106
    %v2115 = vunpack.c.l.b16 %v2107
    %v2116 = vunpack.c.l.b16 %v2108
    %v2117 = vunpack.c.l.b16 %v2109
    %v2118 = vpack.c.b16 %v2115, %v2114
    %v2119 = vpack.c.b16 %v2117, %v2116
    %2121 = vrot.lane.b32.xlu0 %v2101, 124
    %v2122 = vpop.permute.xlu0 %2121
    %v2125 = vsel %vm327, %v2118, 0
    %v2128 = vsel %vm327, %v2119, 0
    %2130 = vmatprep.subr.bf16.mxu0 0
    %2131 = vmatpush1.bf16.msra.mxu0 %v2122
    %2132 = vmatprep.subr.bf16.mxu0 0
    %2133 = vmatpush1.bf16.msra.mxu0 0
    %2134 = vmatprep.subr.bf16.mxu0 0
    %2135 = vmatpush1.bf16.msra.mxu0 0
    %2136 = vmatprep.subr.bf16.mxu0 0
    %2137 = vmatpush1.bf16.msra.mxu0 0
    %2138 = vmatprep.subr.bf16.mxu0 0
    %2139 = vmatpush1.bf16.msra.mxu0 0
    %2140 = vmatprep.subr.bf16.mxu0 0
    %2141 = vmatpush1.bf16.msra.mxu0 0
    %2142 = vmatprep.subr.bf16.mxu0 0
    %2143 = vmatpush1.bf16.msra.mxu0 0
    %2144 = vmatprep.subr.bf16.mxu0 0
    %2145 = vmatpush1.bf16.msra.mxu0 0
    %2146 = vmatprep.subr.bf16.mxu0 0
    %2147 = vmatpush1.bf16.msra.mxu0 0
    %2148 = vmatprep.subr.bf16.mxu0 0
    %2149 = vmatpush1.bf16.msra.mxu0 0
    %2150 = vmatprep.subr.bf16.mxu0 0
    %2151 = vmatpush1.bf16.msra.mxu0 0
    %2152 = vmatprep.subr.bf16.mxu0 0
    %2153 = vmatpush1.bf16.msra.mxu0 0
    %2154 = vmatprep.subr.bf16.mxu0 0
    %2155 = vmatpush1.bf16.msra.mxu0 0
    %2156 = vmatprep.subr.bf16.mxu0 0
    %2157 = vmatpush1.bf16.msra.mxu0 0
    %2158 = vmatprep.subr.bf16.mxu0 0
    %2159 = vmatpush1.bf16.msra.mxu0 0
    %2160 = vmatprep.subr.bf16.mxu0 0
    %2161 = vmatpush1.bf16.msra.mxu0 0
    %2162 = vmatprep.mubr.bf16.mxu0 0
    %2163 = vmatmul.mubr.bf16.gmra.mrb[0].mxu0 %v2125
    %v2164 = vpop.f32.mrb[0].mxu0
    %v2165 = vadd.f32 0.0, %v2164
    %v2166 = vpop.f32.mrb[0].mxu0
    %v2167 = vpop.f32.mrb[0].mxu0
    %v2168 = vadd.f32 0.0, %v2167
    %v2169 = vpop.f32.mrb[0].mxu0
    %2170 = vmatprep.mubr.bf16.mxu0 0
    %2171 = vmatmul.mubr.bf16.gmra.mrb[0].mxu0 %v2128
    %v2172 = vpop.f32.mrb[0].mxu0
    %v2173 = vadd.f32 0.0, %v2172
    %v2174 = vpop.f32.mrb[0].mxu0
    %v2175 = vpop.f32.mrb[0].mxu0
    %v2176 = vadd.f32 0.0, %v2175
    %v2177 = vpop.f32.mrb[0].mxu0
    %2178 = vdwg.mxu0
    %v2183 = vunpack.c.l.b16 %v2102
    %v2184 = vunpack.c.l.b16 %v2103
    %v2185 = vunpack.c.l.b16 %v2104
    %v2186 = vunpack.c.l.b16 %v2105
    %v2187 = vpack.c.b16 %v2184, %v2183
    %v2188 = vpack.c.b16 %v2186, %v2185
    %v2190 = vsel %vm327, %v2187, 0
    %v2193 = vsel %vm327, %v2188, 0
    %2195 = vmatprep.subr.bf16.mxu0 0
    %2196 = vmatpush1.bf16.msra.mxu0 %v2101
    %2197 = vmatprep.subr.bf16.mxu0 0
    %2198 = vmatpush1.bf16.msra.mxu0 0
    %2199 = vmatprep.subr.bf16.mxu0 0
    %2200 = vmatpush1.bf16.msra.mxu0 0
    %2201 = vmatprep.subr.bf16.mxu0 0
    %2202 = vmatpush1.bf16.msra.mxu0 0
    %2203 = vmatprep.subr.bf16.mxu0 0
    %2204 = vmatpush1.bf16.msra.mxu0 0
    %2205 = vmatprep.subr.bf16.mxu0 0
    %2206 = vmatpush1.bf16.msra.mxu0 0
    %2207 = vmatprep.subr.bf16.mxu0 0
    %2208 = vmatpush1.bf16.msra.mxu0 0
    %2209 = vmatprep.subr.bf16.mxu0 0
    %2210 = vmatpush1.bf16.msra.mxu0 0
    %2211 = vmatprep.subr.bf16.mxu0 0
    %2212 = vmatpush1.bf16.msra.mxu0 0
    %2213 = vmatprep.subr.bf16.mxu0 0
    %2214 = vmatpush1.bf16.msra.mxu0 0
    %2215 = vmatprep.subr.bf16.mxu0 0
    %2216 = vmatpush1.bf16.msra.mxu0 0
    %2217 = vmatprep.subr.bf16.mxu0 0
    %2218 = vmatpush1.bf16.msra.mxu0 0
    %2219 = vmatprep.subr.bf16.mxu0 0
    %2220 = vmatpush1.bf16.msra.mxu0 0
    %2221 = vmatprep.subr.bf16.mxu0 0
    %2222 = vmatpush1.bf16.msra.mxu0 0
    %2223 = vmatprep.subr.bf16.mxu0 0
    %2224 = vmatpush1.bf16.msra.mxu0 0
    %2225 = vmatprep.subr.bf16.mxu0 0
    %2226 = vmatpush1.bf16.msra.mxu0 0
    %2227 = vmatprep.mubr.bf16.mxu0 0
    %2228 = vmatmul.mubr.bf16.gmra.mrb[0].mxu0 %v2190
    %v2229 = vpop.f32.mrb[0].mxu0
    %v2230 = vadd.f32 %v2165, %v2229
    %v2231 = vpop.f32.mrb[0].mxu0
    %v2232 = vpop.f32.mrb[0].mxu0
    %v2233 = vadd.f32 %v2168, %v2232
    %v2234 = vpop.f32.mrb[0].mxu0
    %2235 = vmatprep.mubr.bf16.mxu0 0
    %2236 = vmatmul.mubr.bf16.gmra.mrb[0].mxu0 %v2193
    %v2237 = vpop.f32.mrb[0].mxu0
    %v2238 = vadd.f32 %v2173, %v2237
    %v2239 = vpop.f32.mrb[0].mxu0
    %v2240 = vpop.f32.mrb[0].mxu0
    %v2241 = vadd.f32 %v2176, %v2240
    %v2242 = vpop.f32.mrb[0].mxu0
    %2243 = vdwg.mxu0
    %v2244 = vld [vmem:[%s706] sm:$0xf]
    %v2245 = vld [vmem:[%s706 + $0x4] sm:$0xf]
    %v2246 = vld [vmem:[%s706 + $0x8] sm:$0xf]
    %v2247 = vld [vmem:[%s706 + $0xc] sm:$0xf]
    %v2252 = vunpack.c.l.b16 %v2244
    %v2253 = vunpack.c.l.b16 %v2245
    %v2254 = vunpack.c.l.b16 %v2246
    %v2255 = vunpack.c.l.b16 %v2247
    %v2256 = vpack.c.b16 %v2253, %v2252
    %v2257 = vpack.c.b16 %v2255, %v2254
    %2258 = vrot.lane.b32.xlu0 %v2101, 120
    %v2259 = vpop.permute.xlu0 %2258
    %v2262 = vsel %vm327, %v2256, 0
    %v2265 = vsel %vm327, %v2257, 0
    %2267 = vmatprep.subr.bf16.mxu0 0
    %2268 = vmatpush1.bf16.msra.mxu0 %v2259
    %2269 = vmatprep.subr.bf16.mxu0 0
    %2270 = vmatpush1.bf16.msra.mxu0 0
    %2271 = vmatprep.subr.bf16.mxu0 0
    %2272 = vmatpush1.bf16.msra.mxu0 0
    %2273 = vmatprep.subr.bf16.mxu0 0
    %2274 = vmatpush1.bf16.msra.mxu0 0
    %2275 = vmatprep.subr.bf16.mxu0 0
    %2276 = vmatpush1.bf16.msra.mxu0 0
    %2277 = vmatprep.subr.bf16.mxu0 0
    %2278 = vmatpush1.bf16.msra.mxu0 0
    %2279 = vmatprep.subr.bf16.mxu0 0
    %2280 = vmatpush1.bf16.msra.mxu0 0
    %2281 = vmatprep.subr.bf16.mxu0 0
    %2282 = vmatpush1.bf16.msra.mxu0 0
    %2283 = vmatprep.subr.bf16.mxu0 0
    %2284 = vmatpush1.bf16.msra.mxu0 0
    %2285 = vmatprep.subr.bf16.mxu0 0
    %2286 = vmatpush1.bf16.msra.mxu0 0
    %2287 = vmatprep.subr.bf16.mxu0 0
    %2288 = vmatpush1.bf16.msra.mxu0 0
    %2289 = vmatprep.subr.bf16.mxu0 0
    %2290 = vmatpush1.bf16.msra.mxu0 0
    %2291 = vmatprep.subr.bf16.mxu0 0
    %2292 = vmatpush1.bf16.msra.mxu0 0
    %2293 = vmatprep.subr.bf16.mxu0 0
    %2294 = vmatpush1.bf16.msra.mxu0 0
    %2295 = vmatprep.subr.bf16.mxu0 0
    %2296 = vmatpush1.bf16.msra.mxu0 0
    %2297 = vmatprep.subr.bf16.mxu0 0
    %2298 = vmatpush1.bf16.msra.mxu0 0
    %2299 = vmatprep.mubr.bf16.mxu0 0
    %2300 = vmatmul.mubr.bf16.gmra.mrb[0].mxu0 %v2262
    %v2301 = vpop.f32.mrb[0].mxu0
    %v2302 = vadd.f32 0.0, %v2301
    %v2303 = vpop.f32.mrb[0].mxu0
    %v2304 = vpop.f32.mrb[0].mxu0
    %v2305 = vadd.f32 0.0, %v2304
    %v2306 = vpop.f32.mrb[0].mxu0
    %2307 = vmatprep.mubr.bf16.mxu0 0
    %2308 = vmatmul.mubr.bf16.gmra.mrb[0].mxu0 %v2265
    %v2309 = vpop.f32.mrb[0].mxu0
    %v2310 = vadd.f32 0.0, %v2309
    %v2311 = vpop.f32.mrb[0].mxu0
    %v2312 = vpop.f32.mrb[0].mxu0
    %v2313 = vadd.f32 0.0, %v2312
    %v2314 = vpop.f32.mrb[0].mxu0
    %2315 = vdwg.mxu0
    %v2316 = vadd.f32 %v2230, %v2302
    %v2317 = vadd.f32 %v2233, %v2305
    %v2318 = vadd.f32 %v2238, %v2310
    %v2319 = vadd.f32 %v2241, %v2313
    %v2320 = vld [vmem:[%s783] sm:$0xf]
    %v2321 = vld [vmem:[%s783 + $0x4] sm:$0xf]
    %v2322 = vld [vmem:[%s783 + $0x8] sm:$0xf]
    %v2323 = vld [vmem:[%s783 + $0xc] sm:$0xf]
    %v2328 = vunpack.c.l.b16 %v2320
    %v2329 = vunpack.c.l.b16 %v2321
    %v2330 = vunpack.c.l.b16 %v2322
    %v2331 = vunpack.c.l.b16 %v2323
    %v2332 = vpack.c.b16 %v2329, %v2328
    %v2333 = vpack.c.b16 %v2331, %v2330
    %2334 = vrot.lane.b32.xlu0 %v2101, 116
    %v2335 = vpop.permute.xlu0 %2334
    %v2338 = vsel %vm327, %v2332, 0
    %v2341 = vsel %vm327, %v2333, 0
    %2343 = vmatprep.subr.bf16.mxu0 0
    %2344 = vmatpush1.bf16.msra.mxu0 %v2335
    %2345 = vmatprep.subr.bf16.mxu0 0
    %2346 = vmatpush1.bf16.msra.mxu0 0
    %2347 = vmatprep.subr.bf16.mxu0 0
    %2348 = vmatpush1.bf16.msra.mxu0 0
    %2349 = vmatprep.subr.bf16.mxu0 0
    %2350 = vmatpush1.bf16.msra.mxu0 0
    %2351 = vmatprep.subr.bf16.mxu0 0
    %2352 = vmatpush1.bf16.msra.mxu0 0
    %2353 = vmatprep.subr.bf16.mxu0 0
    %2354 = vmatpush1.bf16.msra.mxu0 0
    %2355 = vmatprep.subr.bf16.mxu0 0
    %2356 = vmatpush1.bf16.msra.mxu0 0
    %2357 = vmatprep.subr.bf16.mxu0 0
    %2358 = vmatpush1.bf16.msra.mxu0 0
    %2359 = vmatprep.subr.bf16.mxu0 0
    %2360 = vmatpush1.bf16.msra.mxu0 0
    %2361 = vmatprep.subr.bf16.mxu0 0
    %2362 = vmatpush1.bf16.msra.mxu0 0
    %2363 = vmatprep.subr.bf16.mxu0 0
    %2364 = vmatpush1.bf16.msra.mxu0 0
    %2365 = vmatprep.subr.bf16.mxu0 0
    %2366 = vmatpush1.bf16.msra.mxu0 0
    %2367 = vmatprep.subr.bf16.mxu0 0
    %2368 = vmatpush1.bf16.msra.mxu0 0
    %2369 = vmatprep.subr.bf16.mxu0 0
    %2370 = vmatpush1.bf16.msra.mxu0 0
    %2371 = vmatprep.subr.bf16.mxu0 0
    %2372 = vmatpush1.bf16.msra.mxu0 0
    %2373 = vmatprep.subr.bf16.mxu0 0
    %2374 = vmatpush1.bf16.msra.mxu0 0
    %2375 = vmatprep.mubr.bf16.mxu0 0
    %2376 = vmatmul.mubr.bf16.gmra.mrb[0].mxu0 %v2338
    %v2377 = vpop.f32.mrb[0].mxu0
    %v2378 = vadd.f32 0.0, %v2377
    %v2379 = vpop.f32.mrb[0].mxu0
    %v2380 = vpop.f32.mrb[0].mxu0
    %v2381 = vadd.f32 0.0, %v2380
    %v2382 = vpop.f32.mrb[0].mxu0
    %2383 = vmatprep.mubr.bf16.mxu0 0
    %2384 = vmatmul.mubr.bf16.gmra.mrb[0].mxu0 %v2341
    %v2385 = vpop.f32.mrb[0].mxu0
    %v2386 = vadd.f32 0.0, %v2385
    %v2387 = vpop.f32.mrb[0].mxu0
    %v2388 = vpop.f32.mrb[0].mxu0
    %v2389 = vadd.f32 0.0, %v2388
    %v2390 = vpop.f32.mrb[0].mxu0
    %2391 = vdwg.mxu0
    %v2392 = vadd.f32 %v2316, %v2378
    %v2393 = vadd.f32 %v2317, %v2381
    %v2394 = vadd.f32 %v2318, %v2386
    %v2395 = vadd.f32 %v2319, %v2389
    %v2396 = vadd.f32 %v2392, %v862
    %v2397 = vadd.f32 %v2393, %v866
    %v2398 = vadd.f32 %v2394, %v871
    %v2399 = vadd.f32 %v2395, %v876
    %vm2400 = vcmp.gt.f32.partialorder %v2396, 0.0
    %vm2401 = vcmp.gt.f32.partialorder %v2397, 0.0
    %vm2402 = vcmp.gt.f32.partialorder %v2398, 0.0
    %vm2403 = vcmp.gt.f32.partialorder %v2399, 0.0
    %v2404 = vmul.f32 %v2396, 0.2
    %v2405 = vmul.f32 %v2397, 0.2
    %v2406 = vmul.f32 %v2398, 0.2
    %v2407 = vmul.f32 %v2399, 0.2
    %v2408 = vsel %vm2400, %v2396, %v2404
    %v2409 = vsel %vm2401, %v2397, %v2405
    %v2410 = vsel %vm2402, %v2398, %v2406
    %v2411 = vsel %vm2403, %v2399, %v2407
    %2416 = vrot.lane.b32.xlu0 %v2408, 124
    %v2417 = vpop.permute.xlu0 %2416
    %2418 = vrot.lane.b32.xlu0 %v2409, 124
    %v2419 = vpop.permute.xlu0 %2418
    %2420 = vrot.lane.b32.xlu0 %v2410, 124
    %v2421 = vpop.permute.xlu0 %2420
    %2422 = vrot.lane.b32.xlu0 %v2411, 124
    %v2423 = vpop.permute.xlu0 %2422
    %v2428 = vmax.f32 %v2408, %v2417
    %v2429 = vmax.f32 %v2409, %v2419
    %v2430 = vmax.f32 %v2410, %v2421
    %v2431 = vmax.f32 %v2411, %v2423
    %v2432 = vpack.c.bf16 %v2429, %v2428
    %v2433 = vpack.c.bf16 %v2431, %v2430
    %v2434 = vld [vmem:[%s916] sm:$0xf]
    %v2435 = vld [vmem:[%s916 + $0x4] sm:$0xf]
    %v2436 = vld [vmem:[%s916 + $0x8] sm:$0xf]
    %v2437 = vld [vmem:[%s916 + $0xc] sm:$0xf]
    %v2438 = vld [vmem:[%s921] sm:$0xf]
    %v2439 = vld [vmem:[%s921 + $0x4] sm:$0xf]
    %v2440 = vld [vmem:[%s921 + $0x8] sm:$0xf]
    %v2441 = vld [vmem:[%s921 + $0xc] sm:$0xf]
    %v2446 = vunpack.c.l.b16 %v2438
    %v2447 = vunpack.c.l.b16 %v2439
    %v2448 = vunpack.c.l.b16 %v2440
    %v2449 = vunpack.c.l.b16 %v2441
    %v2450 = vpack.c.b16 %v2447, %v2446
    %v2451 = vpack.c.b16 %v2449, %v2448
    %2454 = vrot.lane.b32.xlu0 %v2432, 120
    %v2455 = vpop.permute.xlu0 %2454
    %2456 = vrot.lane.b32.xlu0 %v2433, 120
    %v2457 = vpop.permute.xlu0 %2456
    %v2461 = vsel %vm944, %v2450, 0
    %v2464 = vsel %vm944, %v2451, 0
    %2466 = vmatprep.subr.bf16.mxu0 0
    %2467 = vmatpush1.bf16.msra.mxu0 %v2455
    %2468 = vmatprep.subr.bf16.mxu0 0
    %2469 = vmatpush1.bf16.msra.mxu0 %v2457
    %2470 = vmatprep.subr.bf16.mxu0 0
    %2471 = vmatpush1.bf16.msra.mxu0 0
    %2472 = vmatprep.subr.bf16.mxu0 0
    %2473 = vmatpush1.bf16.msra.mxu0 0
    %2474 = vmatprep.subr.bf16.mxu0 0
    %2475 = vmatpush1.bf16.msra.mxu0 0
    %2476 = vmatprep.subr.bf16.mxu0 0
    %2477 = vmatpush1.bf16.msra.mxu0 0
    %2478 = vmatprep.subr.bf16.mxu0 0
    %2479 = vmatpush1.bf16.msra.mxu0 0
    %2480 = vmatprep.subr.bf16.mxu0 0
    %2481 = vmatpush1.bf16.msra.mxu0 0
    %2482 = vmatprep.subr.bf16.mxu0 0
    %2483 = vmatpush1.bf16.msra.mxu0 0
    %2484 = vmatprep.subr.bf16.mxu0 0
    %2485 = vmatpush1.bf16.msra.mxu0 0
    %2486 = vmatprep.subr.bf16.mxu0 0
    %2487 = vmatpush1.bf16.msra.mxu0 0
    %2488 = vmatprep.subr.bf16.mxu0 0
    %2489 = vmatpush1.bf16.msra.mxu0 0
    %2490 = vmatprep.subr.bf16.mxu0 0
    %2491 = vmatpush1.bf16.msra.mxu0 0
    %2492 = vmatprep.subr.bf16.mxu0 0
    %2493 = vmatpush1.bf16.msra.mxu0 0
    %2494 = vmatprep.subr.bf16.mxu0 0
    %2495 = vmatpush1.bf16.msra.mxu0 0
    %2496 = vmatprep.subr.bf16.mxu0 0
    %2497 = vmatpush1.bf16.msra.mxu0 0
    %2498 = vmatprep.mubr.bf16.mxu0 0
    %2499 = vmatmul.mubr.bf16.gmra.mrb[0].mxu0 %v2461
    %v2500 = vpop.f32.mrb[0].mxu0
    %v2501 = vadd.f32 0.0, %v2500
    %v2502 = vpop.f32.mrb[0].mxu0
    %v2503 = vpop.f32.mrb[0].mxu0
    %v2504 = vadd.f32 0.0, %v2503
    %v2505 = vpop.f32.mrb[0].mxu0
    %2506 = vmatprep.mubr.bf16.mxu0 0
    %2507 = vmatmul.mubr.bf16.gmra.mrb[0].mxu0 %v2464
    %v2508 = vpop.f32.mrb[0].mxu0
    %v2509 = vadd.f32 0.0, %v2508
    %v2510 = vpop.f32.mrb[0].mxu0
    %v2511 = vpop.f32.mrb[0].mxu0
    %v2512 = vadd.f32 0.0, %v2511
    %v2513 = vpop.f32.mrb[0].mxu0
    %2514 = vdwg.mxu0
    %v2519 = vunpack.c.l.b16 %v2434
    %v2520 = vunpack.c.l.b16 %v2435
    %v2521 = vunpack.c.l.b16 %v2436
    %v2522 = vunpack.c.l.b16 %v2437
    %v2523 = vpack.c.b16 %v2520, %v2519
    %v2524 = vpack.c.b16 %v2522, %v2521
    %v2526 = vsel %vm944, %v2523, 0
    %v2529 = vsel %vm944, %v2524, 0
    %2531 = vmatprep.subr.bf16.mxu0 0
    %2532 = vmatpush1.bf16.msra.mxu0 %v2432
    %2533 = vmatprep.subr.bf16.mxu0 0
    %2534 = vmatpush1.bf16.msra.mxu0 %v2433
    %2535 = vmatprep.subr.bf16.mxu0 0
    %2536 = vmatpush1.bf16.msra.mxu0 0
    %2537 = vmatprep.subr.bf16.mxu0 0
    %2538 = vmatpush1.bf16.msra.mxu0 0
    %2539 = vmatprep.subr.bf16.mxu0 0
    %2540 = vmatpush1.bf16.msra.mxu0 0
    %2541 = vmatprep.subr.bf16.mxu0 0
    %2542 = vmatpush1.bf16.msra.mxu0 0
    %2543 = vmatprep.subr.bf16.mxu0 0
    %2544 = vmatpush1.bf16.msra.mxu0 0
    %2545 = vmatprep.subr.bf16.mxu0 0
    %2546 = vmatpush1.bf16.msra.mxu0 0
    %2547 = vmatprep.subr.bf16.mxu0 0
    %2548 = vmatpush1.bf16.msra.mxu0 0
    %2549 = vmatprep.subr.bf16.mxu0 0
    %2550 = vmatpush1.bf16.msra.mxu0 0
    %2551 = vmatprep.subr.bf16.mxu0 0
    %2552 = vmatpush1.bf16.msra.mxu0 0
    %2553 = vmatprep.subr.bf16.mxu0 0
    %2554 = vmatpush1.bf16.msra.mxu0 0
    %2555 = vmatprep.subr.bf16.mxu0 0
    %2556 = vmatpush1.bf16.msra.mxu0 0
    %2557 = vmatprep.subr.bf16.mxu0 0
    %2558 = vmatpush1.bf16.msra.mxu0 0
    %2559 = vmatprep.subr.bf16.mxu0 0
    %2560 = vmatpush1.bf16.msra.mxu0 0
    %2561 = vmatprep.subr.bf16.mxu0 0
    %2562 = vmatpush1.bf16.msra.mxu0 0
    %2563 = vmatprep.mubr.bf16.mxu0 0
    %2564 = vmatmul.mubr.bf16.gmra.mrb[0].mxu0 %v2526
    %v2565 = vpop.f32.mrb[0].mxu0
    %v2566 = vadd.f32 %v2501, %v2565
    %v2567 = vpop.f32.mrb[0].mxu0
    %v2568 = vpop.f32.mrb[0].mxu0
    %v2569 = vadd.f32 %v2504, %v2568
    %v2570 = vpop.f32.mrb[0].mxu0
    %2571 = vmatprep.mubr.bf16.mxu0 0
    %2572 = vmatmul.mubr.bf16.gmra.mrb[0].mxu0 %v2529
    %v2573 = vpop.f32.mrb[0].mxu0
    %v2574 = vadd.f32 %v2509, %v2573
    %v2575 = vpop.f32.mrb[0].mxu0
    %v2576 = vpop.f32.mrb[0].mxu0
    %v2577 = vadd.f32 %v2512, %v2576
    %v2578 = vpop.f32.mrb[0].mxu0
    %2579 = vdwg.mxu0
    %v2580 = vld [vmem:[%s1065] sm:$0xf]
    %v2581 = vld [vmem:[%s1065 + $0x4] sm:$0xf]
    %v2582 = vld [vmem:[%s1065 + $0x8] sm:$0xf]
    %v2583 = vld [vmem:[%s1065 + $0xc] sm:$0xf]
    %v2588 = vunpack.c.l.b16 %v2580
    %v2589 = vunpack.c.l.b16 %v2581
    %v2590 = vunpack.c.l.b16 %v2582
    %v2591 = vunpack.c.l.b16 %v2583
    %v2592 = vpack.c.b16 %v2589, %v2588
    %v2593 = vpack.c.b16 %v2591, %v2590
    %2594 = vrot.lane.b32.xlu0 %v2432, 112
    %v2595 = vpop.permute.xlu0 %2594
    %2596 = vrot.lane.b32.xlu0 %v2433, 112
    %v2597 = vpop.permute.xlu0 %2596
    %v2601 = vsel %vm944, %v2592, 0
    %v2604 = vsel %vm944, %v2593, 0
    %2606 = vmatprep.subr.bf16.mxu0 0
    %2607 = vmatpush1.bf16.msra.mxu0 %v2595
    %2608 = vmatprep.subr.bf16.mxu0 0
    %2609 = vmatpush1.bf16.msra.mxu0 %v2597
    %2610 = vmatprep.subr.bf16.mxu0 0
    %2611 = vmatpush1.bf16.msra.mxu0 0
    %2612 = vmatprep.subr.bf16.mxu0 0
    %2613 = vmatpush1.bf16.msra.mxu0 0
    %2614 = vmatprep.subr.bf16.mxu0 0
    %2615 = vmatpush1.bf16.msra.mxu0 0
    %2616 = vmatprep.subr.bf16.mxu0 0
    %2617 = vmatpush1.bf16.msra.mxu0 0
    %2618 = vmatprep.subr.bf16.mxu0 0
    %2619 = vmatpush1.bf16.msra.mxu0 0
    %2620 = vmatprep.subr.bf16.mxu0 0
    %2621 = vmatpush1.bf16.msra.mxu0 0
    %2622 = vmatprep.subr.bf16.mxu0 0
    %2623 = vmatpush1.bf16.msra.mxu0 0
    %2624 = vmatprep.subr.bf16.mxu0 0
    %2625 = vmatpush1.bf16.msra.mxu0 0
    %2626 = vmatprep.subr.bf16.mxu0 0
    %2627 = vmatpush1.bf16.msra.mxu0 0
    %2628 = vmatprep.subr.bf16.mxu0 0
    %2629 = vmatpush1.bf16.msra.mxu0 0
    %2630 = vmatprep.subr.bf16.mxu0 0
    %2631 = vmatpush1.bf16.msra.mxu0 0
    %2632 = vmatprep.subr.bf16.mxu0 0
    %2633 = vmatpush1.bf16.msra.mxu0 0
    %2634 = vmatprep.subr.bf16.mxu0 0
    %2635 = vmatpush1.bf16.msra.mxu0 0
    %2636 = vmatprep.subr.bf16.mxu0 0
    %2637 = vmatpush1.bf16.msra.mxu0 0
    %2638 = vmatprep.mubr.bf16.mxu0 0
    %2639 = vmatmul.mubr.bf16.gmra.mrb[0].mxu0 %v2601
    %v2640 = vpop.f32.mrb[0].mxu0
    %v2641 = vadd.f32 0.0, %v2640
    %v2642 = vpop.f32.mrb[0].mxu0
    %v2643 = vpop.f32.mrb[0].mxu0
    %v2644 = vadd.f32 0.0, %v2643
    %v2645 = vpop.f32.mrb[0].mxu0
    %2646 = vmatprep.mubr.bf16.mxu0 0
    %2647 = vmatmul.mubr.bf16.gmra.mrb[0].mxu0 %v2604
    %v2648 = vpop.f32.mrb[0].mxu0
    %v2649 = vadd.f32 0.0, %v2648
    %v2650 = vpop.f32.mrb[0].mxu0
    %v2651 = vpop.f32.mrb[0].mxu0
    %v2652 = vadd.f32 0.0, %v2651
    %v2653 = vpop.f32.mrb[0].mxu0
    %2654 = vdwg.mxu0
    %v2655 = vadd.f32 %v2566, %v2641
    %v2656 = vadd.f32 %v2569, %v2644
    %v2657 = vadd.f32 %v2574, %v2649
    %v2658 = vadd.f32 %v2577, %v2652
    %v2659 = vld [vmem:[%s1145] sm:$0xf]
    %v2660 = vld [vmem:[%s1145 + $0x4] sm:$0xf]
    %v2661 = vld [vmem:[%s1145 + $0x8] sm:$0xf]
    %v2662 = vld [vmem:[%s1145 + $0xc] sm:$0xf]
    %v2667 = vunpack.c.l.b16 %v2659
    %v2668 = vunpack.c.l.b16 %v2660
    %v2669 = vunpack.c.l.b16 %v2661
    %v2670 = vunpack.c.l.b16 %v2662
    %v2671 = vpack.c.b16 %v2668, %v2667
    %v2672 = vpack.c.b16 %v2670, %v2669
    %2673 = vrot.lane.b32.xlu0 %v2432, 104
    %v2674 = vpop.permute.xlu0 %2673
    %2675 = vrot.lane.b32.xlu0 %v2433, 104
    %v2676 = vpop.permute.xlu0 %2675
    %v2680 = vsel %vm944, %v2671, 0
    %v2683 = vsel %vm944, %v2672, 0
    %2685 = vmatprep.subr.bf16.mxu0 0
    %2686 = vmatpush1.bf16.msra.mxu0 %v2674
    %2687 = vmatprep.subr.bf16.mxu0 0
    %2688 = vmatpush1.bf16.msra.mxu0 %v2676
    %2689 = vmatprep.subr.bf16.mxu0 0
    %2690 = vmatpush1.bf16.msra.mxu0 0
    %2691 = vmatprep.subr.bf16.mxu0 0
    %2692 = vmatpush1.bf16.msra.mxu0 0
    %2693 = vmatprep.subr.bf16.mxu0 0
    %2694 = vmatpush1.bf16.msra.mxu0 0
    %2695 = vmatprep.subr.bf16.mxu0 0
    %2696 = vmatpush1.bf16.msra.mxu0 0
    %2697 = vmatprep.subr.bf16.mxu0 0
    %2698 = vmatpush1.bf16.msra.mxu0 0
    %2699 = vmatprep.subr.bf16.mxu0 0
    %2700 = vmatpush1.bf16.msra.mxu0 0
    %2701 = vmatprep.subr.bf16.mxu0 0
    %2702 = vmatpush1.bf16.msra.mxu0 0
    %2703 = vmatprep.subr.bf16.mxu0 0
    %2704 = vmatpush1.bf16.msra.mxu0 0
    %2705 = vmatprep.subr.bf16.mxu0 0
    %2706 = vmatpush1.bf16.msra.mxu0 0
    %2707 = vmatprep.subr.bf16.mxu0 0
    %2708 = vmatpush1.bf16.msra.mxu0 0
    %2709 = vmatprep.subr.bf16.mxu0 0
    %2710 = vmatpush1.bf16.msra.mxu0 0
    %2711 = vmatprep.subr.bf16.mxu0 0
    %2712 = vmatpush1.bf16.msra.mxu0 0
    %2713 = vmatprep.subr.bf16.mxu0 0
    %2714 = vmatpush1.bf16.msra.mxu0 0
    %2715 = vmatprep.subr.bf16.mxu0 0
    %2716 = vmatpush1.bf16.msra.mxu0 0
    %2717 = vmatprep.mubr.bf16.mxu0 0
    %2718 = vmatmul.mubr.bf16.gmra.mrb[0].mxu0 %v2680
    %v2719 = vpop.f32.mrb[0].mxu0
    %v2720 = vadd.f32 0.0, %v2719
    %v2721 = vpop.f32.mrb[0].mxu0
    %v2722 = vpop.f32.mrb[0].mxu0
    %v2723 = vadd.f32 0.0, %v2722
    %v2724 = vpop.f32.mrb[0].mxu0
    %2725 = vmatprep.mubr.bf16.mxu0 0
    %2726 = vmatmul.mubr.bf16.gmra.mrb[0].mxu0 %v2683
    %v2727 = vpop.f32.mrb[0].mxu0
    %v2728 = vadd.f32 0.0, %v2727
    %v2729 = vpop.f32.mrb[0].mxu0
    %v2730 = vpop.f32.mrb[0].mxu0
    %v2731 = vadd.f32 0.0, %v2730
    %v2732 = vpop.f32.mrb[0].mxu0
    %2733 = vdwg.mxu0
    %v2734 = vadd.f32 %v2655, %v2720
    %v2735 = vadd.f32 %v2656, %v2723
    %v2736 = vadd.f32 %v2657, %v2728
    %v2737 = vadd.f32 %v2658, %v2731
    %v2738 = vadd.f32 %v2734, %v1227
    %v2739 = vadd.f32 %v2735, %v1231
    %v2740 = vadd.f32 %v2736, %v1235
    %v2741 = vadd.f32 %v2737, %v1239
    %vm2742 = vcmp.gt.f32.partialorder %v2738, 0.0
    %vm2743 = vcmp.gt.f32.partialorder %v2739, 0.0
    %vm2744 = vcmp.gt.f32.partialorder %v2740, 0.0
    %vm2745 = vcmp.gt.f32.partialorder %v2741, 0.0
    %v2746 = vmul.f32 %v2738, 0.2
    %v2747 = vmul.f32 %v2739, 0.2
    %v2748 = vmul.f32 %v2740, 0.2
    %v2749 = vmul.f32 %v2741, 0.2
    %v2750 = vsel %vm2742, %v2738, %v2746
    %v2751 = vsel %vm2743, %v2739, %v2747
    %v2752 = vsel %vm2744, %v2740, %v2748
    %v2753 = vsel %vm2745, %v2741, %v2749
    %2758 = vrot.lane.b32.xlu0 %v2750, 120
    %v2759 = vpop.permute.xlu0 %2758
    %2760 = vrot.lane.b32.xlu0 %v2751, 120
    %v2761 = vpop.permute.xlu0 %2760
    %2762 = vrot.lane.b32.xlu0 %v2752, 120
    %v2763 = vpop.permute.xlu0 %2762
    %2764 = vrot.lane.b32.xlu0 %v2753, 120
    %v2765 = vpop.permute.xlu0 %2764
    %v2770 = vmax.f32 %v2750, %v2759
    %v2771 = vmax.f32 %v2751, %v2761
    %v2772 = vmax.f32 %v2752, %v2763
    %v2773 = vmax.f32 %v2753, %v2765
    %v2774 = vpack.c.bf16 %v2771, %v2770
    %v2775 = vpack.c.bf16 %v2773, %v2772
    %v2776 = vld [vmem:[%s1279] sm:$0xf]
    %v2777 = vld [vmem:[%s1281] sm:$0xf]
    %2780 = vrot.lane.b32.xlu0 %v2774, 112
    %v2781 = vpop.permute.xlu0 %2780
    %2782 = vrot.lane.b32.xlu0 %v2775, 112
    %v2783 = vpop.permute.xlu0 %2782
    %v2787 = vsel %vm944, %v2777, 0
    %2789 = vmatprep.subr.bf16.mxu0 0
    %2790 = vmatpush1.bf16.msra.mxu0 %v2781
    %2791 = vmatprep.subr.bf16.mxu0 0
    %2792 = vmatpush1.bf16.msra.mxu0 %v2783
    %2793 = vmatprep.subr.bf16.mxu0 0
    %2794 = vmatpush1.bf16.msra.mxu0 0
    %2795 = vmatprep.subr.bf16.mxu0 0
    %2796 = vmatpush1.bf16.msra.mxu0 0
    %2797 = vmatprep.subr.bf16.mxu0 0
    %2798 = vmatpush1.bf16.msra.mxu0 0
    %2799 = vmatprep.subr.bf16.mxu0 0
    %2800 = vmatpush1.bf16.msra.mxu0 0
    %2801 = vmatprep.subr.bf16.mxu0 0
    %2802 = vmatpush1.bf16.msra.mxu0 0
    %2803 = vmatprep.subr.bf16.mxu0 0
    %2804 = vmatpush1.bf16.msra.mxu0 0
    %2805 = vmatprep.subr.bf16.mxu0 0
    %2806 = vmatpush1.bf16.msra.mxu0 0
    %2807 = vmatprep.subr.bf16.mxu0 0
    %2808 = vmatpush1.bf16.msra.mxu0 0
    %2809 = vmatprep.subr.bf16.mxu0 0
    %2810 = vmatpush1.bf16.msra.mxu0 0
    %2811 = vmatprep.subr.bf16.mxu0 0
    %2812 = vmatpush1.bf16.msra.mxu0 0
    %2813 = vmatprep.subr.bf16.mxu0 0
    %2814 = vmatpush1.bf16.msra.mxu0 0
    %2815 = vmatprep.subr.bf16.mxu0 0
    %2816 = vmatpush1.bf16.msra.mxu0 0
    %2817 = vmatprep.subr.bf16.mxu0 0
    %2818 = vmatpush1.bf16.msra.mxu0 0
    %2819 = vmatprep.subr.bf16.mxu0 0
    %2820 = vmatpush1.bf16.msra.mxu0 0
    %2821 = vmatprep.mubr.bf16.mxu0 0
    %2822 = vmatmul.mubr.bf16.gmra.mrb[0].mxu0 %v2787
    %v2823 = vpop.f32.mrb[0].mxu0
    %v2824 = vadd.f32 0.0, %v2823
    %v2825 = vpop.f32.mrb[0].mxu0
    %v2826 = vpop.f32.mrb[0].mxu0
    %v2827 = vpop.f32.mrb[0].mxu0
    %2828 = vdwg.mxu0
    %v2830 = vsel %vm944, %v2776, 0
    %2832 = vmatprep.subr.bf16.mxu0 0
    %2833 = vmatpush1.bf16.msra.mxu0 %v2774
    %2834 = vmatprep.subr.bf16.mxu0 0
    %2835 = vmatpush1.bf16.msra.mxu0 %v2775
    %2836 = vmatprep.subr.bf16.mxu0 0
    %2837 = vmatpush1.bf16.msra.mxu0 0
    %2838 = vmatprep.subr.bf16.mxu0 0
    %2839 = vmatpush1.bf16.msra.mxu0 0
    %2840 = vmatprep.subr.bf16.mxu0 0
    %2841 = vmatpush1.bf16.msra.mxu0 0
    %2842 = vmatprep.subr.bf16.mxu0 0
    %2843 = vmatpush1.bf16.msra.mxu0 0
    %2844 = vmatprep.subr.bf16.mxu0 0
    %2845 = vmatpush1.bf16.msra.mxu0 0
    %2846 = vmatprep.subr.bf16.mxu0 0
    %2847 = vmatpush1.bf16.msra.mxu0 0
    %2848 = vmatprep.subr.bf16.mxu0 0
    %2849 = vmatpush1.bf16.msra.mxu0 0
    %2850 = vmatprep.subr.bf16.mxu0 0
    %2851 = vmatpush1.bf16.msra.mxu0 0
    %2852 = vmatprep.subr.bf16.mxu0 0
    %2853 = vmatpush1.bf16.msra.mxu0 0
    %2854 = vmatprep.subr.bf16.mxu0 0
    %2855 = vmatpush1.bf16.msra.mxu0 0
    %2856 = vmatprep.subr.bf16.mxu0 0
    %2857 = vmatpush1.bf16.msra.mxu0 0
    %2858 = vmatprep.subr.bf16.mxu0 0
    %2859 = vmatpush1.bf16.msra.mxu0 0
    %2860 = vmatprep.subr.bf16.mxu0 0
    %2861 = vmatpush1.bf16.msra.mxu0 0
    %2862 = vmatprep.subr.bf16.mxu0 0
    %2863 = vmatpush1.bf16.msra.mxu0 0
    %2864 = vmatprep.mubr.bf16.mxu0 0
    %2865 = vmatmul.mubr.bf16.gmra.mrb[0].mxu0 %v2830
    %v2866 = vpop.f32.mrb[0].mxu0
    %v2867 = vadd.f32 %v2824, %v2866
    %v2868 = vpop.f32.mrb[0].mxu0
    %v2869 = vpop.f32.mrb[0].mxu0
    %v2870 = vpop.f32.mrb[0].mxu0
    %2871 = vdwg.mxu0
    %v2872 = vld [vmem:[%s1377] sm:$0xf]
    %2873 = vrot.lane.b32.xlu0 %v2774, 96
    %v2874 = vpop.permute.xlu0 %2873
    %2875 = vrot.lane.b32.xlu0 %v2775, 96
    %v2876 = vpop.permute.xlu0 %2875
    %v2880 = vsel %vm944, %v2872, 0
    %2882 = vmatprep.subr.bf16.mxu0 0
    %2883 = vmatpush1.bf16.msra.mxu0 %v2874
    %2884 = vmatprep.subr.bf16.mxu0 0
    %2885 = vmatpush1.bf16.msra.mxu0 %v2876
    %2886 = vmatprep.subr.bf16.mxu0 0
    %2887 = vmatpush1.bf16.msra.mxu0 0
    %2888 = vmatprep.subr.bf16.mxu0 0
    %2889 = vmatpush1.bf16.msra.mxu0 0
    %2890 = vmatprep.subr.bf16.mxu0 0
    %2891 = vmatpush1.bf16.msra.mxu0 0
    %2892 = vmatprep.subr.bf16.mxu0 0
    %2893 = vmatpush1.bf16.msra.mxu0 0
    %2894 = vmatprep.subr.bf16.mxu0 0
    %2895 = vmatpush1.bf16.msra.mxu0 0
    %2896 = vmatprep.subr.bf16.mxu0 0
    %2897 = vmatpush1.bf16.msra.mxu0 0
    %2898 = vmatprep.subr.bf16.mxu0 0
    %2899 = vmatpush1.bf16.msra.mxu0 0
    %2900 = vmatprep.subr.bf16.mxu0 0
    %2901 = vmatpush1.bf16.msra.mxu0 0
    %2902 = vmatprep.subr.bf16.mxu0 0
    %2903 = vmatpush1.bf16.msra.mxu0 0
    %2904 = vmatprep.subr.bf16.mxu0 0
    %2905 = vmatpush1.bf16.msra.mxu0 0
    %2906 = vmatprep.subr.bf16.mxu0 0
    %2907 = vmatpush1.bf16.msra.mxu0 0
    %2908 = vmatprep.subr.bf16.mxu0 0
    %2909 = vmatpush1.bf16.msra.mxu0 0
    %2910 = vmatprep.subr.bf16.mxu0 0
    %2911 = vmatpush1.bf16.msra.mxu0 0
    %2912 = vmatprep.subr.bf16.mxu0 0
    %2913 = vmatpush1.bf16.msra.mxu0 0
    %2914 = vmatprep.mubr.bf16.mxu0 0
    %2915 = vmatmul.mubr.bf16.gmra.mrb[0].mxu0 %v2880
    %v2916 = vpop.f32.mrb[0].mxu0
    %v2917 = vadd.f32 0.0, %v2916
    %v2918 = vpop.f32.mrb[0].mxu0
    %v2919 = vpop.f32.mrb[0].mxu0
    %v2920 = vpop.f32.mrb[0].mxu0
    %2921 = vdwg.mxu0
    %v2922 = vadd.f32 %v2867, %v2917
    %v2923 = vadd.f32 %v2922, %v1431
    %vm2924 = vcmp.gt.f32.partialorder %v2923, 0.0
    %v2925 = vmul.f32 %v2923, 1.442695
    %v2926 = vpow.pop %v2925
    %v2927 = vsub.f32 %v2926, 1.0
    %v2928 = vsel %vm2924, %v2923, %v2927
    %v2929 = vrot.slane %v48, 1
    %v2930 = vsel %vm1439, %v2929, 0
    %2932 = vmatprep.subr.mxu0 0.0
    %2933 = vmatpush1.msra.mxu0 %v37
    %2934 = vmatprep.subr.mxu0 0.0
    %2935 = vmatpush1.msra.mxu0 0.0
    %2936 = vmatprep.subr.mxu0 0.0
    %2937 = vmatpush1.msra.mxu0 0.0
    %2938 = vmatprep.subr.mxu0 0.0
    %2939 = vmatpush1.msra.mxu0 0.0
    %2940 = vmatprep.subr.mxu0 0.0
    %2941 = vmatpush1.msra.mxu0 0.0
    %2942 = vmatprep.subr.mxu0 0.0
    %2943 = vmatpush1.msra.mxu0 0.0
    %2944 = vmatprep.subr.mxu0 0.0
    %2945 = vmatpush1.msra.mxu0 0.0
    %2946 = vmatprep.subr.mxu0 0.0
    %2947 = vmatpush1.msra.mxu0 0.0
    %2948 = vmatprep.subr.mxu0 0.0
    %2949 = vmatpush1.msra.mxu0 0.0
    %2950 = vmatprep.subr.mxu0 0.0
    %2951 = vmatpush1.msra.mxu0 0.0
    %2952 = vmatprep.subr.mxu0 0.0
    %2953 = vmatpush1.msra.mxu0 0.0
    %2954 = vmatprep.subr.mxu0 0.0
    %2955 = vmatpush1.msra.mxu0 0.0
    %2956 = vmatprep.subr.mxu0 0.0
    %2957 = vmatpush1.msra.mxu0 0.0
    %2958 = vmatprep.subr.mxu0 0.0
    %2959 = vmatpush1.msra.mxu0 0.0
    %2960 = vmatprep.subr.mxu0 0.0
    %2961 = vmatpush1.msra.mxu0 0.0
    %2962 = vmatprep.subr.mxu0 0.0
    %2963 = vmatpush1.msra.mxu0 0.0
    %2964 = vmatprep.subr.mxu0 0.0
    %2965 = vmatpush1.msra.mxu0 0.0
    %2966 = vmatprep.subr.mxu0 0.0
    %2967 = vmatpush1.msra.mxu0 0.0
    %2968 = vmatprep.subr.mxu0 0.0
    %2969 = vmatpush1.msra.mxu0 0.0
    %2970 = vmatprep.subr.mxu0 0.0
    %2971 = vmatpush1.msra.mxu0 0.0
    %2972 = vmatprep.subr.mxu0 0.0
    %2973 = vmatpush1.msra.mxu0 0.0
    %2974 = vmatprep.subr.mxu0 0.0
    %2975 = vmatpush1.msra.mxu0 0.0
    %2976 = vmatprep.subr.mxu0 0.0
    %2977 = vmatpush1.msra.mxu0 0.0
    %2978 = vmatprep.subr.mxu0 0.0
    %2979 = vmatpush1.msra.mxu0 0.0
    %2980 = vmatprep.subr.mxu0 0.0
    %2981 = vmatpush1.msra.mxu0 0.0
    %2982 = vmatprep.subr.mxu0 0.0
    %2983 = vmatpush1.msra.mxu0 0.0
    %2984 = vmatprep.subr.mxu0 0.0
    %2985 = vmatpush1.msra.mxu0 0.0
    %2986 = vmatprep.subr.mxu0 0.0
    %2987 = vmatpush1.msra.mxu0 0.0
    %2988 = vmatprep.subr.mxu0 0.0
    %2989 = vmatpush1.msra.mxu0 0.0
    %2990 = vmatprep.subr.mxu0 0.0
    %2991 = vmatpush1.msra.mxu0 0.0
    %2992 = vmatprep.subr.mxu0 0.0
    %2993 = vmatpush1.msra.mxu0 0.0
    %2994 = vmatprep.subr.mxu0 0.0
    %2995 = vmatpush1.msra.mxu0 0.0
    %2996 = vmatprep.mubr.f32.mxu0 0.0
    %2997 = vmatmul.mubr.f32.gmra.mrb[0].mxu0 %v2930
    %v2998 = vpop.f32.mrb[0].mxu0
    %v2999 = vadd.f32 0.0, %v2998
    %v3000 = vpop.f32.mrb[0].mxu0
    %3001 = vdwg.mxu0
    %v3002 = vadd.f32 %v38, %v2999
    %3004 = vset.pattern.permute.xlu0 0
    %3005 = vperm.xlu0 %3004, %v2928
    %v3006 = vpop.permute.xlu0 %3005
    %v3008 = vmul.f32 %v3006, %v36
    %v3009 = vsel %vm1520, %v3008, 0.0
    %v3010 = vrot.slane %v3009, 4
    %v3011 = vadd.f32 %v3009, %v3010
    %v3012 = vrot.slane %v3011, 2
    %v3013 = vadd.f32 %v3011, %v3012
    %v3014 = vrot.slane %v3013, 1
    %v3015 = vadd.f32 %v3013, %v3014
    %v3016 = vadd.f32 %v3002, %v3015
    %v3018 = vsel %vm944, %v3016, 0
    %3020 = vmatprep.subr.mxu0 0.0
    %3021 = vmatpush1.msra.mxu0 %v39
    %3022 = vmatprep.subr.mxu0 0.0
    %3023 = vmatpush1.msra.mxu0 %v40
    %3024 = vmatprep.subr.mxu0 0.0
    %3025 = vmatpush1.msra.mxu0 %v41
    %3026 = vmatprep.subr.mxu0 0.0
    %3027 = vmatpush1.msra.mxu0 %v42
    %3028 = vmatprep.subr.mxu0 0.0
    %3029 = vmatpush1.msra.mxu0 0.0
    %3030 = vmatprep.subr.mxu0 0.0
    %3031 = vmatpush1.msra.mxu0 0.0
    %3032 = vmatprep.subr.mxu0 0.0
    %3033 = vmatpush1.msra.mxu0 0.0
    %3034 = vmatprep.subr.mxu0 0.0
    %3035 = vmatpush1.msra.mxu0 0.0
    %3036 = vmatprep.subr.mxu0 0.0
    %3037 = vmatpush1.msra.mxu0 0.0
    %3038 = vmatprep.subr.mxu0 0.0
    %3039 = vmatpush1.msra.mxu0 0.0
    %3040 = vmatprep.subr.mxu0 0.0
    %3041 = vmatpush1.msra.mxu0 0.0
    %3042 = vmatprep.subr.mxu0 0.0
    %3043 = vmatpush1.msra.mxu0 0.0
    %3044 = vmatprep.subr.mxu0 0.0
    %3045 = vmatpush1.msra.mxu0 0.0
    %3046 = vmatprep.subr.mxu0 0.0
    %3047 = vmatpush1.msra.mxu0 0.0
    %3048 = vmatprep.subr.mxu0 0.0
    %3049 = vmatpush1.msra.mxu0 0.0
    %3050 = vmatprep.subr.mxu0 0.0
    %3051 = vmatpush1.msra.mxu0 0.0
    %3052 = vmatprep.subr.mxu0 0.0
    %3053 = vmatpush1.msra.mxu0 0.0
    %3054 = vmatprep.subr.mxu0 0.0
    %3055 = vmatpush1.msra.mxu0 0.0
    %3056 = vmatprep.subr.mxu0 0.0
    %3057 = vmatpush1.msra.mxu0 0.0
    %3058 = vmatprep.subr.mxu0 0.0
    %3059 = vmatpush1.msra.mxu0 0.0
    %3060 = vmatprep.subr.mxu0 0.0
    %3061 = vmatpush1.msra.mxu0 0.0
    %3062 = vmatprep.subr.mxu0 0.0
    %3063 = vmatpush1.msra.mxu0 0.0
    %3064 = vmatprep.subr.mxu0 0.0
    %3065 = vmatpush1.msra.mxu0 0.0
    %3066 = vmatprep.subr.mxu0 0.0
    %3067 = vmatpush1.msra.mxu0 0.0
    %3068 = vmatprep.subr.mxu0 0.0
    %3069 = vmatpush1.msra.mxu0 0.0
    %3070 = vmatprep.subr.mxu0 0.0
    %3071 = vmatpush1.msra.mxu0 0.0
    %3072 = vmatprep.subr.mxu0 0.0
    %3073 = vmatpush1.msra.mxu0 0.0
    %3074 = vmatprep.subr.mxu0 0.0
    %3075 = vmatpush1.msra.mxu0 0.0
    %3076 = vmatprep.subr.mxu0 0.0
    %3077 = vmatpush1.msra.mxu0 0.0
    %3078 = vmatprep.subr.mxu0 0.0
    %3079 = vmatpush1.msra.mxu0 0.0
    %3080 = vmatprep.subr.mxu0 0.0
    %3081 = vmatpush1.msra.mxu0 0.0
    %3082 = vmatprep.subr.mxu0 0.0
    %3083 = vmatpush1.msra.mxu0 0.0
    %3084 = vmatprep.mubr.f32.mxu0 0.0
    %3085 = vmatmul.mubr.f32.gmra.mrb[0].mxu0 %v3018
    %v3086 = vpop.f32.mrb[0].mxu0
    %v3087 = vadd.f32 %v43, %v3086
    %v3088 = vpop.f32.mrb[0].mxu0
    %3089 = vdwg.mxu0
    %v3090 = vsel %vm1602, %v3087, -inf
    %3091 = vmax.xlane.f32.xlu0 %v3090
    %v3092 = vpop.xlane.xlu0 %3091
    %v3093 = vsub.f32 %v3087, %v3092
    %v3094 = vmul.f32 %v3093, 1.442695
    %v3095 = vpow.pop %v3094
    %v3096 = vsel %vm1602, %v3095, 0.0
    %3097 = vadd.xlane.f32.xlu0 %v3096
    %v3098 = vpop.xlane.xlu0 %3097
    %v3099 = vlog2.pop %v3098
    %v3100 = vmul.f32 %v3099, 0.6931472
    %v3101 = vsub.f32 %v3093, %v3100
    %s3102 = scalar_lea.vmem [#allocation5], 1
    %3103 = vst.msk [vmem:[%s3102] sm:$0x1] %vm1602, %v3101
    // Predicated region
    $region26: #{tpu_custom_call.1} parent=1 // pred_check
      _
    $region27: #{tpu_custom_call.1} parent=1 // pred_check_branch
      %3105 = sbr.rel (0) target = $region29
    $region28: #{tpu_custom_call.1} parent=1 // pred_region
      %s3107 = ssub.s32 32, 32
      %3108 = vsyncadd [#allocation4], %s3107
      %s3109 = sshll.u32 [#allocation5], 4
      %s3110 = int_to_ptr.vmem [resolvable:$true] %s3109
      %3115 = dma.vmem_to_hbm [thread:$0]  %s3110, 32, %s5, [#allocation4], 16, 16, 1
    $region29: #{tpu_custom_call.1} parent=1 // pred_fallthru
      _
    // Predicated region
    $region30: #{tpu_custom_call.1} parent=1 // pred_check
      _
    $region31: #{tpu_custom_call.1} parent=1 // pred_check_branch
      %3117 = sbr.rel (0) target = $region33
    $region32: #{tpu_custom_call.1} parent=1 // pred_region
      %3118 = dma.done [#allocation4], 32
    $region33: #{tpu_custom_call.1} parent=1 // pred_fallthru
      _
    %3119 = vsyncpa [#allocation3], 1
    %3120 = vsyncpa [#allocation4], 1

</llo_original>
